<compile_context>
chip_gen: v5e
topology: v5e:2x2
jax: 0.10.0
libtpu: 0.0.40
codegen_flags: <defaults>
</compile_context>

<pallas_src>
import math
import functools

import jax
import jax.numpy as jnp
from jax.experimental import pallas as pl
from jax.experimental.pallas import tpu as pltpu

NHEAD = 4           # nn.TransformerEncoderLayer(nhead=4)
LN_EPS = 1e-5       # torch.nn.LayerNorm default eps
L2_EPS = 1e-12      # F.normalize default eps
NEG_INF = -1e30     # key-padding mask value


# ---------------------------------------------------------------------------
# Small helpers
# ---------------------------------------------------------------------------
def _round_up(n, m):
    return ((n + m - 1) // m) * m


def _choose_tile(t):
    """Query-row tile (multiple of 16 for bf16 packing) and padded seq length.

    For moderate T we force >= 2 row tiles so the "parallel" grid axis can be
    split across the two TensorCores of a v7x chip (neutral on v5e/v6e).
    """
    if t >= 1024:
        tq = 256
    elif t >= 256:
        tq = 128
    elif t >= 32:
        tq = _round_up((t + 1) // 2, 16)
    else:
        tq = _round_up(max(t, 1), 16)
    return tq, _round_up(t, tq)


def _choose_kv_tile(tpad, tq):
    """Key-chunk size: a multiple of tq, capped near 1024, dividing tpad."""
    tk = tq
    while tk * 2 <= min(tpad, 1024) and tpad % (tk * 2) == 0:
        tk *= 2
    return tk


@functools.lru_cache(maxsize=1)
def _vmem_capacity_bytes():
    try:
        return int(pltpu.get_tpu_info().vmem_capacity_bytes)
    except Exception:
        return 64 * 1024 * 1024


@functools.lru_cache(maxsize=1)
def _softmax_exp_dtype():
    """bf16 softmax elementwise on v6e/v7x (bf16 VPU/EUP); f32 on v5e/unknown."""
    try:
        info = pltpu.get_tpu_info()
        gen = ""
        for attr in ("chip_version", "version", "generation", "chip"):
            val = getattr(info, attr, None)
            if val is not None:
                gen = str(val).lower()
                break
        if ("v6" in gen) or ("v7" in gen):
            return jnp.bfloat16
    except Exception:
        pass
    return jnp.float32


def _phase_footprint(tq, tk, d, ff):
    """Rough per-layer VMEM footprint (bytes) after Buffered(1) + KV chunking."""
    bf16, f32 = 2, 4
    weights = (3 * d * d + 2 * d * ff) * bf16          # wkv, wq, woT, w1, w2 (x1)
    kv_blocks = 2 * 2 * tk * d * bf16                  # K, V chunk, double-buffered
    io_tiles = 2 * 2 * tq * d * f32                    # x tile + out tile (x2)
    kv_out = 2 * 2 * tq * d * bf16                     # phase-1 K/V output tiles
    scratch = tq * d * (bf16 + f32) + 2 * NHEAD * tq * 128 * f32
    return weights + kv_blocks + io_tiles + kv_out + scratch


def _vmem_limit_bytes(footprint):
    cap = _vmem_capacity_bytes()
    want = int(footprint * 2) + 8 * 1024 * 1024
    # keep headroom for Mosaic internal scratch on the 64 MiB (v7x) part
    return int(min(max(want, 32 * 1024 * 1024), cap - 12 * 1024 * 1024))


def _const_spec(shape):
    """Constant-index_map input: request single buffering (no 2nd pipeline buf)."""
    ndim = len(shape)
    index_map = lambda *args, _n=ndim: (0,) * _n
    try:
        return pl.BlockSpec(shape, index_map, pipeline_mode=pl.Buffered(1))
    except Exception:
        return pl.BlockSpec(shape, index_map)


def _layernorm(x, gamma, beta):
    mean = jnp.mean(x, axis=-1, keepdims=True)
    c = x - mean
    var = jnp.mean(c * c, axis=-1, keepdims=True)
    return c * jax.lax.rsqrt(var + LN_EPS) * gamma + beta


# ---------------------------------------------------------------------------
# Pallas kernels
# ---------------------------------------------------------------------------
def kv_kernel(x_ref, wkv_ref, bkv_ref, k_ref, v_ref):
    """K/V projection for one row tile; lane-dense (tq, D) bf16 outputs."""
    d = x_ref.shape[-1]
    xb = x_ref[...].astype(jnp.bfloat16)
    kv = jnp.dot(xb, wkv_ref[...], preferred_element_type=jnp.float32)
    kv = kv + bkv_ref[...]
    k_ref[...] = kv[:, :d].astype(k_ref.dtype)
    v_ref[...] = kv[:, d:].astype(v_ref.dtype)


def attn_ffn_kernel(x_ref, k_ref, v_ref, wq_ref, bq_ref, woT_ref, bo_ref,
                    g1_ref, b1_ref, w1_ref, fb1_ref, w2_ref, fb2_ref,
                    g2_ref, b2_ref,
                    out_ref,
                    q_sc, m_sc, l_sc, acc_sc,
                    *, t_actual, t_padded, tk, exp_dtype):
    """Online-softmax attention over key chunks + out-proj + LN1 + FFN + LN2."""
    d = x_ref.shape[-1]
    hd = d // NHEAD
    kv = pl.program_id(1)
    nkv = pl.num_programs(1)

    @pl.when(kv == 0)
    def _init():
        # Q projection in-place (x tile already resident for the residual);
        # the 1/sqrt(hd) scale was folded into wq/bq on the host.
        xb = x_ref[...].astype(jnp.bfloat16)
        q = jnp.dot(xb, wq_ref[...], preferred_element_type=jnp.float32)
        q_sc[...] = (q + bq_ref[...]).astype(q_sc.dtype)
        m_sc[...] = jnp.full_like(m_sc, -jnp.inf)
        l_sc[...] = jnp.zeros_like(l_sc)
        acc_sc[...] = jnp.zeros_like(acc_sc)

    k = k_ref[...]                                   # (tk, D) bf16
    v = v_ref[...]                                   # (tk, D) bf16
    tkb = k.shape[0]

    # Key-padding mask for this chunk (padding only exists when t_padded > t).
    if t_padded > t_actual:
        kidx = jax.lax.broadcasted_iota(jnp.int32, (1, tkb), 1) + kv * tk
        kmask = kidx < t_actual
    else:
        kmask = None

    # Per-head online-softmax update (H = 4, statically unrolled).  Head slices
    # of the lane-dense Q/K/V/acc are 128-aligned for the production D=1024.
    for h in range(NHEAD):
        lo, hi = h * hd, (h + 1) * hd
        q_h = q_sc[:, lo:hi]                         # (tq, hd) bf16 (pre-scaled)
        k_h = k[:, lo:hi]
        v_h = v[:, lo:hi]

        s = jnp.einsum('qd,kd->qk', q_h, k_h,
                       preferred_element_type=jnp.float32)       # (tq, tk) f32
        if kmask is not None:
            s = jnp.where(kmask, s, NEG_INF)

        m_prev = m_sc[h]                                          # (tq, 1)
        m_new = jnp.maximum(m_prev, jnp.max(s, axis=-1, keepdims=True))
        alpha = jnp.exp(m_prev - m_new)                           # (tq, 1) f32
        p = jnp.exp((s - m_new).astype(exp_dtype))                # bf16 on v6e/v7x
        # denominator always accumulated in f32
        l_sc[h] = alpha * l_sc[h] + jnp.sum(p, axis=-1, keepdims=True,
                                            dtype=jnp.float32)
        pv = jnp.dot(p.astype(v_h.dtype), v_h,
                     preferred_element_type=jnp.float32)          # (tq, hd) f32
        acc_sc[:, lo:hi] = alpha * acc_sc[:, lo:hi] + pv
        m_sc[h] = m_new

    @pl.when(kv == nkv - 1)
    def _finalize():
        # Deferred softmax normalization: multiply the (tq, hd) accumulator,
        # not the (tq, Tpad) probabilities.  EUP reciprocal (approx) is cheap.
        parts = []
        for h in range(NHEAD):
            lo, hi = h * hd, (h + 1) * hd
            r = pl.reciprocal(l_sc[h], approx=True)               # (tq, 1)
            parts.append((acc_sc[:, lo:hi] * r).astype(jnp.bfloat16))
        o = jnp.concatenate(parts, axis=-1)                       # (tq, D) bf16

        # Single lane-dense output projection on the MXU.
        proj = jnp.dot(o, woT_ref[...],
                       preferred_element_type=jnp.float32) + bo_ref[...]

        # Residual + LayerNorm 1 (f32 elementwise math; v5e has no bf16 VPU).
        x = x_ref[...].astype(jnp.float32)
        y1 = _layernorm(x + proj, g1_ref[...], b1_ref[...])

        # Feed-forward: linear1 (D->FF) + ReLU + linear2 (FF->D), bf16 MXU.
        h1 = jnp.dot(y1.astype(jnp.bfloat16), w1_ref[...],
                     preferred_element_type=jnp.float32) + fb1_ref[...]
        h1 = jnp.maximum(h1, 0.0)
        h2 = jnp.dot(h1.astype(jnp.bfloat16), w2_ref[...],
                     preferred_element_type=jnp.float32) + fb2_ref[...]

        # Residual + LayerNorm 2.
        out_ref[...] = _layernorm(y1 + h2, g2_ref[...], b2_ref[...]).astype(out_ref.dtype)


def make_fuse_kernel(fusion):
    """L2-normalize the global segment (F.normalize p=2, dim=1), fuse with local."""
    def fuse_kernel(wv_ref, lv_ref, out_ref):
        wv = wv_ref[...].astype(jnp.float32)
        lv = lv_ref[...].astype(jnp.float32)
        norm = jnp.sqrt(jnp.sum(wv * wv, axis=-1, keepdims=True))
        wvn = wv / jnp.maximum(norm, L2_EPS)
        if fusion == 'add':
            out = wvn + lv
        elif fusion == 'mult':
            out = wvn * lv
        elif fusion == 'avg':
            out = (wvn + lv) * 0.5
        elif fusion == 'max':
            out = jnp.maximum(wvn, lv)
        else:
            out = wvn
        out_ref[...] = out.astype(out_ref.dtype)
    return fuse_kernel


# ---------------------------------------------------------------------------
# Wrappers (plain-JAX glue around pallas_call)
# ---------------------------------------------------------------------------
def encoder_layer(x, p):
    """One nn.TransformerEncoderLayer (norm_first=False, relu, dropout=identity)."""
    t, d = x.shape
    ff = p['w1'].shape[1]
    tq, tpad = _choose_tile(t)
    tk = _choose_kv_tile(tpad, tq)
    nq = tpad // tq
    nkv = tpad // tk
    exp_dtype = _softmax_exp_dtype()

    vmem_limit = _vmem_limit_bytes(_phase_footprint(tq, tk, d, ff))
    cparams1 = pltpu.CompilerParams(
        dimension_semantics=("parallel",), vmem_limit_bytes=vmem_limit)
    cparams2 = pltpu.CompilerParams(
        dimension_semantics=("parallel", "arbitrary"), vmem_limit_bytes=vmem_limit)

    # Zero-padding of query rows is safe: they flow through softmax/LN/FFN with
    # finite values and are sliced off below; padded KEYS are masked in-kernel.
    xp = jnp.pad(x, ((0, tpad - t), (0, 0))) if tpad != t else x

    # --- phase 1: K/V projection, lane-dense (Tpad, D) bf16 outputs -----------
    k, v = pl.pallas_call(
        kv_kernel,
        grid=(nq,),
        in_specs=[
            pl.BlockSpec((tq, d), lambda i: (i, 0)),
            _const_spec((d, 2 * d)),
            _const_spec((1, 2 * d)),
        ],
        out_specs=[
            pl.BlockSpec((tq, d), lambda i: (i, 0)),
            pl.BlockSpec((tq, d), lambda i: (i, 0)),
        ],
        out_shape=[
            jax.ShapeDtypeStruct((tpad, d), jnp.bfloat16),
            jax.ShapeDtypeStruct((tpad, d), jnp.bfloat16),
        ],
        compiler_params=cparams1,
    )(xp, p['wkv'], p['bkv'])

    # --- phase 2: Q-proj + chunked online-softmax attention + FFN -------------
    out = pl.pallas_call(
        functools.partial(attn_ffn_kernel, t_actual=t, t_padded=tpad,
                          tk=tk, exp_dtype=exp_dtype),
        grid=(nq, nkv),
        in_specs=[
            pl.BlockSpec((tq, d), lambda i, j: (i, 0)),   # x tile (Q + residual)
            pl.BlockSpec((tk, d), lambda i, j: (j, 0)),   # K chunk
            pl.BlockSpec((tk, d), lambda i, j: (j, 0)),   # V chunk
            _const_spec((d, d)),                          # Wq^T (scale folded)
            _const_spec((1, d)),                          # bq   (scale folded)
            _const_spec((d, d)),                          # Wo^T
            _const_spec((1, d)),                          # bo
            _const_spec((1, d)),                          # LN1 gamma
            _const_spec((1, d)),                          # LN1 beta
            _const_spec((d, ff)),                         # W1^T
            _const_spec((1, ff)),                         # b1
            _const_spec((ff, d)),                         # W2^T
            _const_spec((1, d)),                          # b2
            _const_spec((1, d)),                          # LN2 gamma
            _const_spec((1, d)),                          # LN2 beta
        ],
        out_specs=pl.BlockSpec((tq, d), lambda i, j: (i, 0)),
        out_shape=jax.ShapeDtypeStruct((tpad, d), x.dtype),
        scratch_shapes=[
            pltpu.VMEM((tq, d), jnp.bfloat16),            # cached scaled Q
            pltpu.VMEM((NHEAD, tq, 1), jnp.float32),      # running max
            pltpu.VMEM((NHEAD, tq, 1), jnp.float32),      # running sum
            pltpu.VMEM((tq, d), jnp.float32),             # unnormalized PV acc
        ],
        compiler_params=cparams2,
    )(xp, k, v, p['wq'], p['bq'], p['woT'], p['bo'], p['g1'], p['b1'],
      p['w1'], p['fb1'], p['w2'], p['fb2'], p['g2'], p['b2'])

    return out[:t] if tpad != t else out


def transformer_encoder(x, layer_params):
    """nn.TransformerEncoder(num_layers=len(layer_params), norm=None)."""
    for p in layer_params:
        x = encoder_layer(x, p)
    return x


def fuse_segment(wv_seg, lv_seg, fusion):
    s, d = wv_seg.shape
    vmem = pl.BlockSpec(memory_space=pltpu.MemorySpace.VMEM)
    return pl.pallas_call(
        make_fuse_kernel(fusion),
        out_shape=jax.ShapeDtypeStruct((s, d), wv_seg.dtype),
        in_specs=[vmem, vmem],
        out_specs=vmem,
    )(wv_seg, lv_seg)


@functools.partial(jax.jit, static_argnames=('num_segments', 'fusion'))
def multi_attention_forward(x, global_params, local_params=None,
                            num_segments=None, fusion=None):
    """Mirrors MultiAttention.forward: returns (weighted_value [T, D], 0)."""
    weighted_value = transformer_encoder(x, global_params)

    if num_segments is not None and fusion is not None:
        t = x.shape[0]
        segment_size = math.ceil(t / num_segments)
        pieces = []
        for segment in range(num_segments):
            left = segment * segment_size
            right = min((segment + 1) * segment_size, t)
            if left >= right:
                continue
            local_x = x[left:right]
            weighted_local = transformer_encoder(local_x, local_params[segment])
            pieces.append(fuse_segment(weighted_value[left:right],
                                       weighted_local, fusion))
        # Segments tile [0, T) exactly -> one concatenate instead of N full copies.
        weighted_value = jnp.concatenate(pieces, axis=0)

    return weighted_value, 0


# ---------------------------------------------------------------------------
# Deterministic parameter construction (PyTorch layout) + host-side prep
# ---------------------------------------------------------------------------
def init_layer_params_torch(key, d, ff):
    """Weights in PyTorch (out_features, in_features) convention, f32."""
    ks = jax.random.split(key, 8)
    s = 0.05
    return dict(
        wqkv=s * jax.random.normal(ks[0], (3 * d, d), jnp.float32),
        bqkv=0.01 * jax.random.normal(ks[1], (3 * d,), jnp.float32),
        wo=s * jax.random.normal(ks[2], (d, d), jnp.float32),
        bo=0.01 * jax.random.normal(ks[3], (d,), jnp.float32),
        g1=jnp.ones((d,), jnp.float32),
        b1=jnp.zeros((d,), jnp.float32),
        w1=s * jax.random.normal(ks[4], (ff, d), jnp.float32),
        fb1=0.01 * jax.random.normal(ks[5], (ff,), jnp.float32),
        w2=s * jax.random.normal(ks[6], (d, ff), jnp.float32),
        fb2=0.01 * jax.random.normal(ks[7], (d,), jnp.float32),
        g2=jnp.ones((d,), jnp.float32),
        b2=jnp.zeros((d,), jnp.float32),
    )


def prepare_layer_params(p):
    """One-time host-side layout prep.

    * split the packed QKV into Q and KV halves,
    * transpose everything to (in_features, out_features),
    * fold the 1/sqrt(head_dim) attention scale into Wq / bq,
    * bf16 matmul weights, f32 biases / LN params with shape (1, X).
    """
    d = p['wo'].shape[0]
    hd = d // NHEAD
    scale = 1.0 / math.sqrt(float(hd))
    wqkv, bqkv = p['wqkv'], p['bqkv']
    return dict(
        wq=jnp.asarray((wqkv[:d] * scale).T, jnp.bfloat16),          # (D, D)
        bq=(bqkv[:d] * scale).reshape(1, -1).astype(jnp.float32),
        wkv=jnp.asarray(wqkv[d:].T, jnp.bfloat16),                   # (D, 2D)
        bkv=bqkv[d:].reshape(1, -1).astype(jnp.float32),
        woT=jnp.asarray(p['wo'].T, jnp.bfloat16),                    # (D, D)
        bo=p['bo'].reshape(1, -1).astype(jnp.float32),
        g1=p['g1'].reshape(1, -1).astype(jnp.float32),
        b1=p['b1'].reshape(1, -1).astype(jnp.float32),
        w1=jnp.asarray(p['w1'].T, jnp.bfloat16),                     # (D, FF)
        fb1=p['fb1'].reshape(1, -1).astype(jnp.float32),
        w2=jnp.asarray(p['w2'].T, jnp.bfloat16),                     # (FF, D)
        fb2=p['fb2'].reshape(1, -1).astype(jnp.float32),
        g2=p['g2'].reshape(1, -1).astype(jnp.float32),
        b2=p['b2'].reshape(1, -1).astype(jnp.float32),
    )


def init_encoder_params(key, num_layers, d, ff):
    keys = jax.random.split(key, num_layers)
    return [init_layer_params_torch(k, d, ff) for k in keys]


def prepare_encoder_params(layer_params):
    return [prepare_layer_params(p) for p in layer_params]


# ---------------------------------------------------------------------------
if __name__ == "__main__":
    # Small shapes consistent with the module: x is [T, input_size]; nhead=4,
    # 2 encoder layers.  dim_feedforward shrunk from the torch default 2048 to
    # 64 to keep the synthetic test tiny (D must be divisible by nhead=4).
    T, D, FF = 8, 32, 64
    NUM_LAYERS = 2

    root = jax.random.PRNGKey(0)
    kx, kg, kl = jax.random.split(root, 3)
    x = jax.random.normal(kx, (T, D), jnp.float32)

    # Global 2-layer transformer encoder parameters (host-side prepped once).
    global_params = prepare_encoder_params(init_encoder_params(kg, NUM_LAYERS, D, FF))

    # --- default configuration: num_segments=None, fusion=None ---------------
    wv, attn_weights = multi_attention_forward(x, global_params, None,
                                               num_segments=None, fusion=None)
    wv = jax.block_until_ready(wv)
    assert wv.shape == (T, D) and int(attn_weights) == 0

    # --- segmented configuration: num_segments=2, fusion='avg' ---------------
    num_segments, fusion = 2, 'avg'
    local_keys = jax.random.split(kl, num_segments)
    local_params = [prepare_encoder_params(init_encoder_params(k, NUM_LAYERS, D, FF))
                    for k in local_keys]
    wv_seg, _ = multi_attention_forward(x, global_params, local_params,
                                        num_segments=num_segments, fusion=fusion)
    wv_seg = jax.block_until_ready(wv_seg)
    assert wv_seg.shape == (T, D)
    assert bool(jnp.all(jnp.isfinite(wv))) and bool(jnp.all(jnp.isfinite(wv_seg)))

    print("KERNEL_OK")
</pallas_src>

<mosaic_0001>
module attributes {stable_mosaic.version = 11 : i64} {
  func.func @kv_kernel(%arg0: i32, %arg1: memref<16x32xf32, #tpu.memory_space<vmem>>, %arg2: memref<32x64xbf16, #tpu.memory_space<vmem>>, %arg3: memref<1x64xf32, #tpu.memory_space<vmem>>, %arg4: memref<16x32xbf16, #tpu.memory_space<vmem>>, %arg5: memref<16x32xbf16, #tpu.memory_space<vmem>>) attributes {dimension_semantics = [#tpu.dimension_semantics<parallel>], iteration_bounds = array<i64: 1>, scalar_prefetch = 0 : i64, scratch_operands = 0 : i64, tpu.core_type = #tpu.core_type<tc>, window_params = [{transform_indices = @transform_0, window_bounds = array<i64: 16, 32>}, {pipeline_mode = #tpu.pipeline_mode<synchronous>, transform_indices = @transform_1, window_bounds = array<i64: 32, 64>}, {pipeline_mode = #tpu.pipeline_mode<synchronous>, transform_indices = @transform_2, window_bounds = array<i64: 1, 64>}, {transform_indices = @transform_3, window_bounds = array<i64: 16, 32>}, {transform_indices = @transform_4, window_bounds = array<i64: 16, 32>}]} {
    %c0 = arith.constant 0 : index
    %c0_0 = arith.constant 0 : index
    %0 = vector.load %arg1[%c0, %c0_0] : memref<16x32xf32, #tpu.memory_space<vmem>>, vector<16x32xf32>
    %1 = arith.truncf %0 : vector<16x32xf32> to vector<16x32xbf16>
    %c0_1 = arith.constant 0 : index
    %c0_2 = arith.constant 0 : index
    %2 = vector.load %arg2[%c0_1, %c0_2] : memref<32x64xbf16, #tpu.memory_space<vmem>>, vector<32x64xbf16>
    %cst = arith.constant dense<0.000000e+00> : vector<16x64xf32>
    %3 = tpu.matmul %1, %2, %cst {dimension_numbers = #tpu.dot_dimension_numbers<[1], [0], [0], [1], [0, 0, 1, 1], [], []>} : vector<16x32xbf16>, vector<32x64xbf16>, vector<16x64xf32> -> vector<16x64xf32>
    %c0_3 = arith.constant 0 : index
    %c0_4 = arith.constant 0 : index
    %4 = vector.load %arg3[%c0_3, %c0_4] : memref<1x64xf32, #tpu.memory_space<vmem>>, vector<1x64xf32>
    %5 = vector.broadcast %4 : vector<1x64xf32> to vector<16x64xf32>
    %6 = arith.addf %3, %5 : vector<16x64xf32>
    %7 = vector.extract_strided_slice %6 {offsets = [0, 0], sizes = [16, 32], strides = [1, 1]} : vector<16x64xf32> to vector<16x32xf32>
    %8 = arith.truncf %7 : vector<16x32xf32> to vector<16x32xbf16>
    %c0_5 = arith.constant 0 : index
    %c0_6 = arith.constant 0 : index
    %9 = vector.load %arg4[%c0_5, %c0_6] : memref<16x32xbf16, #tpu.memory_space<vmem>>, vector<16x32xbf16>
    tpu.vector_store %arg4[%c0_5, %c0_6], %8 {strides = array<i32>} : memref<16x32xbf16, #tpu.memory_space<vmem>>, vector<16x32xbf16>,
    %10 = vector.extract_strided_slice %6 {offsets = [0, 32], sizes = [16, 32], strides = [1, 1]} : vector<16x64xf32> to vector<16x32xf32>
    %11 = arith.truncf %10 : vector<16x32xf32> to vector<16x32xbf16>
    %c0_7 = arith.constant 0 : index
    %c0_8 = arith.constant 0 : index
    %12 = vector.load %arg5[%c0_7, %c0_8] : memref<16x32xbf16, #tpu.memory_space<vmem>>, vector<16x32xbf16>
    tpu.vector_store %arg5[%c0_7, %c0_8], %11 {strides = array<i32>} : memref<16x32xbf16, #tpu.memory_space<vmem>>, vector<16x32xbf16>,
    return
  }
  func.func @transform_0(%arg0: i32) -> (i32, i32) {
    %c0_i32 = arith.constant 0 : i32
    %c0_i32_0 = arith.constant 0 : i32
    return %arg0, %c0_i32 : i32, i32
  }
  func.func @transform_1(%arg0: i32) -> (i32, i32) {
    %c0_i32 = arith.constant 0 : i32
    %c0_i32_0 = arith.constant 0 : i32
    %c0_i32_1 = arith.constant 0 : i32
    return %c0_i32, %c0_i32_0 : i32, i32
  }
  func.func @transform_2(%arg0: i32) -> (i32, i32) {
    %c0_i32 = arith.constant 0 : i32
    %c0_i32_0 = arith.constant 0 : i32
    %c0_i32_1 = arith.constant 0 : i32
    return %c0_i32, %c0_i32_0 : i32, i32
  }
  func.func @transform_3(%arg0: i32) -> (i32, i32) {
    %c0_i32 = arith.constant 0 : i32
    %c0_i32_0 = arith.constant 0 : i32
    return %arg0, %c0_i32 : i32, i32
  }
  func.func @transform_4(%arg0: i32) -> (i32, i32) {
    %c0_i32 = arith.constant 0 : i32
    %c0_i32_0 = arith.constant 0 : i32
    return %arg0, %c0_i32 : i32, i32
  }
}

module attributes {stable_mosaic.version = 11 : i64} {
  func.func @attn_ffn_kernel(%arg0: i32, %arg1: i32, %arg2: memref<16x32xf32, #tpu.memory_space<vmem>>, %arg3: memref<16x32xbf16, #tpu.memory_space<vmem>>, %arg4: memref<16x32xbf16, #tpu.memory_space<vmem>>, %arg5: memref<32x32xbf16, #tpu.memory_space<vmem>>, %arg6: memref<1x32xf32, #tpu.memory_space<vmem>>, %arg7: memref<32x32xbf16, #tpu.memory_space<vmem>>, %arg8: memref<1x32xf32, #tpu.memory_space<vmem>>, %arg9: memref<1x32xf32, #tpu.memory_space<vmem>>, %arg10: memref<1x32xf32, #tpu.memory_space<vmem>>, %arg11: memref<32x64xbf16, #tpu.memory_space<vmem>>, %arg12: memref<1x64xf32, #tpu.memory_space<vmem>>, %arg13: memref<64x32xbf16, #tpu.memory_space<vmem>>, %arg14: memref<1x32xf32, #tpu.memory_space<vmem>>, %arg15: memref<1x32xf32, #tpu.memory_space<vmem>>, %arg16: memref<1x32xf32, #tpu.memory_space<vmem>>, %arg17: memref<16x32xf32, #tpu.memory_space<vmem>>, %arg18: memref<16x32xbf16, #tpu.memory_space<vmem>>, %arg19: memref<4x16x1xf32, #tpu.memory_space<vmem>>, %arg20: memref<4x16x1xf32, #tpu.memory_space<vmem>>, %arg21: memref<16x32xf32, #tpu.memory_space<vmem>>) attributes {dimension_semantics = [#tpu.dimension_semantics<parallel>, #tpu.dimension_semantics<arbitrary>], iteration_bounds = array<i64: 1, 1>, scalar_prefetch = 0 : i64, scratch_operands = 4 : i64, tpu.core_type = #tpu.core_type<tc>, window_params = [{transform_indices = @transform_0, window_bounds = array<i64: 16, 32>}, {transform_indices = @transform_1, window_bounds = array<i64: 16, 32>}, {transform_indices = @transform_2, window_bounds = array<i64: 16, 32>}, {pipeline_mode = #tpu.pipeline_mode<synchronous>, transform_indices = @transform_3, window_bounds = array<i64: 32, 32>}, {pipeline_mode = #tpu.pipeline_mode<synchronous>, transform_indices = @transform_4, window_bounds = array<i64: 1, 32>}, {pipeline_mode = #tpu.pipeline_mode<synchronous>, transform_indices = @transform_5, window_bounds = array<i64: 32, 32>}, {pipeline_mode = #tpu.pipeline_mode<synchronous>, transform_indices = @transform_6, window_bounds = array<i64: 1, 32>}, {pipeline_mode = #tpu.pipeline_mode<synchronous>, transform_indices = @transform_7, window_bounds = array<i64: 1, 32>}, {pipeline_mode = #tpu.pipeline_mode<synchronous>, transform_indices = @transform_8, window_bounds = array<i64: 1, 32>}, {pipeline_mode = #tpu.pipeline_mode<synchronous>, transform_indices = @transform_9, window_bounds = array<i64: 32, 64>}, {pipeline_mode = #tpu.pipeline_mode<synchronous>, transform_indices = @transform_10, window_bounds = array<i64: 1, 64>}, {pipeline_mode = #tpu.pipeline_mode<synchronous>, transform_indices = @transform_11, window_bounds = array<i64: 64, 32>}, {pipeline_mode = #tpu.pipeline_mode<synchronous>, transform_indices = @transform_12, window_bounds = array<i64: 1, 32>}, {pipeline_mode = #tpu.pipeline_mode<synchronous>, transform_indices = @transform_13, window_bounds = array<i64: 1, 32>}, {pipeline_mode = #tpu.pipeline_mode<synchronous>, transform_indices = @transform_14, window_bounds = array<i64: 1, 32>}, {transform_indices = @transform_15, window_bounds = array<i64: 16, 32>}]} {
    %c0_i32 = arith.constant 0 : i32
    %0 = arith.cmpi eq, %arg1, %c0_i32 : i32
    %1 = arith.extui %0 : i1 to i32
    %c0_i32_0 = arith.constant 0 : i32
    %2 = arith.cmpi ne, %1, %c0_i32_0 : i32
    scf.if %2 {
      %c0_91 = arith.constant 0 : index
      %c0_92 = arith.constant 0 : index
      %162 = vector.load %arg2[%c0_91, %c0_92] : memref<16x32xf32, #tpu.memory_space<vmem>>, vector<16x32xf32>
      %163 = arith.truncf %162 : vector<16x32xf32> to vector<16x32xbf16>
      %c0_93 = arith.constant 0 : index
      %c0_94 = arith.constant 0 : index
      %164 = vector.load %arg5[%c0_93, %c0_94] : memref<32x32xbf16, #tpu.memory_space<vmem>>, vector<32x32xbf16>
      %cst_95 = arith.constant dense<0.000000e+00> : vector<16x32xf32>
      %165 = tpu.matmul %163, %164, %cst_95 {dimension_numbers = #tpu.dot_dimension_numbers<[1], [0], [0], [1], [0, 0, 1, 1], [], []>} : vector<16x32xbf16>, vector<32x32xbf16>, vector<16x32xf32> -> vector<16x32xf32>
      %c0_96 = arith.constant 0 : index
      %c0_97 = arith.constant 0 : index
      %166 = vector.load %arg6[%c0_96, %c0_97] : memref<1x32xf32, #tpu.memory_space<vmem>>, vector<1x32xf32>
      %167 = vector.broadcast %166 : vector<1x32xf32> to vector<16x32xf32>
      %168 = arith.addf %165, %167 : vector<16x32xf32>
      %169 = arith.truncf %168 : vector<16x32xf32> to vector<16x32xbf16>
      %c0_98 = arith.constant 0 : index
      %c0_99 = arith.constant 0 : index
      %170 = vector.load %arg18[%c0_98, %c0_99] : memref<16x32xbf16, #tpu.memory_space<vmem>>, vector<16x32xbf16>
      tpu.vector_store %arg18[%c0_98, %c0_99], %169 {strides = array<i32>} : memref<16x32xbf16, #tpu.memory_space<vmem>>, vector<16x32xbf16>,
      %cst_100 = arith.constant 0xFF800000 : f32
      %171 = vector.broadcast %cst_100 : f32 to vector<4x16x1xf32>
      %c0_101 = arith.constant 0 : index
      %c0_102 = arith.constant 0 : index
      %c0_103 = arith.constant 0 : index
      %172 = vector.load %arg19[%c0_101, %c0_102, %c0_103] : memref<4x16x1xf32, #tpu.memory_space<vmem>>, vector<4x16x1xf32>
      tpu.vector_store %arg19[%c0_101, %c0_102, %c0_103], %171 {strides = array<i32>} : memref<4x16x1xf32, #tpu.memory_space<vmem>>, vector<4x16x1xf32>,
      %cst_104 = arith.constant 0.000000e+00 : f32
      %173 = vector.broadcast %cst_104 : f32 to vector<4x16x1xf32>
      %c0_105 = arith.constant 0 : index
      %c0_106 = arith.constant 0 : index
      %c0_107 = arith.constant 0 : index
      %174 = vector.load %arg20[%c0_105, %c0_106, %c0_107] : memref<4x16x1xf32, #tpu.memory_space<vmem>>, vector<4x16x1xf32>
      tpu.vector_store %arg20[%c0_105, %c0_106, %c0_107], %173 {strides = array<i32>} : memref<4x16x1xf32, #tpu.memory_space<vmem>>, vector<4x16x1xf32>,
      %cst_108 = arith.constant 0.000000e+00 : f32
      %175 = vector.broadcast %cst_108 : f32 to vector<16x32xf32>
      %c0_109 = arith.constant 0 : index
      %c0_110 = arith.constant 0 : index
      %176 = vector.load %arg21[%c0_109, %c0_110] : memref<16x32xf32, #tpu.memory_space<vmem>>, vector<16x32xf32>
      tpu.vector_store %arg21[%c0_109, %c0_110], %175 {strides = array<i32>} : memref<16x32xf32, #tpu.memory_space<vmem>>, vector<16x32xf32>,
    } else {
    }
    %c0 = arith.constant 0 : index
    %c0_1 = arith.constant 0 : index
    %3 = vector.load %arg3[%c0, %c0_1] : memref<16x32xbf16, #tpu.memory_space<vmem>>, vector<16x32xbf16>
    %c0_2 = arith.constant 0 : index
    %c0_3 = arith.constant 0 : index
    %4 = vector.load %arg4[%c0_2, %c0_3] : memref<16x32xbf16, #tpu.memory_space<vmem>>, vector<16x32xbf16>
    %5 = tpu.iota {dimensions = array<i32: 1>} : vector<1x16xi32>
    %c16_i32 = arith.constant 16 : i32
    %6 = arith.muli %arg1, %c16_i32 : i32
    %7 = vector.broadcast %6 : i32 to vector<1x16xi32>
    %8 = arith.addi %5, %7 : vector<1x16xi32>
    %c8_i32 = arith.constant 8 : i32
    %9 = vector.broadcast %c8_i32 : i32 to vector<1x16xi32>
    %10 = arith.cmpi slt, %8, %9 : vector<1x16xi32>
    %c0_4 = arith.constant 0 : index
    %c0_5 = arith.constant 0 : index
    %11 = vector.load %arg18[%c0_4, %c0_5] : memref<16x32xbf16, #tpu.memory_space<vmem>>, vector<16x8xbf16>
    %12 = vector.extract_strided_slice %3 {offsets = [0, 0], sizes = [16, 8], strides = [1, 1]} : vector<16x32xbf16> to vector<16x8xbf16>
    %13 = vector.extract_strided_slice %4 {offsets = [0, 0], sizes = [16, 8], strides = [1, 1]} : vector<16x32xbf16> to vector<16x8xbf16>
    "tpu.trace_start"() <{level = 10 : i32, message = "qd,kd->qk"}> : () -> ()
    %cst = arith.constant dense<0.000000e+00> : vector<16x16xf32>
    %14 = tpu.matmul %11, %12, %cst {dimension_numbers = #tpu.dot_dimension_numbers<[1], [1], [0], [0], [0, 0, 1, 0], [], []>} : vector<16x8xbf16>, vector<16x8xbf16>, vector<16x16xf32> -> vector<16x16xf32>
    %cst_6 = arith.constant -1.000000e+30 : f32
    "tpu.trace_stop"() : () -> ()
    %15 = vector.shape_cast %10 : vector<1x16xi1> to vector<1x16xi1>
    %16 = vector.broadcast %15 : vector<1x16xi1> to vector<16x16xi1>
    %17 = vector.broadcast %cst_6 : f32 to vector<16x16xf32>
    %18 = arith.select %16, %14, %17 : vector<16x16xi1>, vector<16x16xf32>
    %c0_7 = arith.constant 0 : index
    %c0_8 = arith.constant 0 : index
    %c0_9 = arith.constant 0 : index
    %19 = vector.load %arg19[%c0_7, %c0_8, %c0_9] : memref<4x16x1xf32, #tpu.memory_space<vmem>>, vector<1x16x1xf32>
    %20 = vector.shape_cast %19 : vector<1x16x1xf32> to vector<16x1xf32>
    %cst_10 = arith.constant dense<0xFF800000> : vector<16xf32>
    %21 = vector.multi_reduction <maximumf>, %18, %cst_10 [1] : vector<16x16xf32> to vector<16xf32>
    %22 = vector.shape_cast %21 : vector<16xf32> to vector<16x1xf32>
    %23 = arith.maximumf %20, %22 : vector<16x1xf32>
    %24 = arith.subf %20, %23 : vector<16x1xf32>
    %25 = math.exp %24 : vector<16x1xf32>
    %26 = vector.broadcast %23 : vector<16x1xf32> to vector<16x16xf32>
    %27 = arith.subf %18, %26 : vector<16x16xf32>
    %28 = math.exp %27 : vector<16x16xf32>
    %c0_11 = arith.constant 0 : index
    %c0_12 = arith.constant 0 : index
    %c0_13 = arith.constant 0 : index
    %29 = vector.load %arg20[%c0_11, %c0_12, %c0_13] : memref<4x16x1xf32, #tpu.memory_space<vmem>>, vector<1x16x1xf32>
    %30 = vector.shape_cast %29 : vector<1x16x1xf32> to vector<16x1xf32>
    %31 = arith.mulf %25, %30 : vector<16x1xf32>
    %cst_14 = arith.constant dense<0.000000e+00> : vector<16xf32>
    %32 = vector.multi_reduction <add>, %28, %cst_14 [1] : vector<16x16xf32> to vector<16xf32>
    %33 = vector.shape_cast %32 : vector<16xf32> to vector<16x1xf32>
    %34 = arith.addf %31, %33 : vector<16x1xf32>
    %c0_15 = arith.constant 0 : index
    %c0_16 = arith.constant 0 : index
    %c0_17 = arith.constant 0 : index
    %35 = vector.load %arg20[%c0_15, %c0_16, %c0_17] : memref<4x16x1xf32, #tpu.memory_space<vmem>>, vector<1x16x1xf32>
    %36 = vector.shape_cast %35 : vector<1x16x1xf32> to vector<16x1xf32>
    %37 = vector.shape_cast %34 : vector<16x1xf32> to vector<1x16x1xf32>
    tpu.vector_store %arg20[%c0_15, %c0_16, %c0_17], %37 {strides = array<i32>} : memref<4x16x1xf32, #tpu.memory_space<vmem>>, vector<1x16x1xf32>,
    %38 = arith.truncf %28 : vector<16x16xf32> to vector<16x16xbf16>
    %cst_18 = arith.constant dense<0.000000e+00> : vector<16x8xf32>
    %39 = tpu.matmul %38, %13, %cst_18 {dimension_numbers = #tpu.dot_dimension_numbers<[1], [0], [0], [1], [0, 0, 1, 1], [], []>} : vector<16x16xbf16>, vector<16x8xbf16>, vector<16x8xf32> -> vector<16x8xf32>
    %c0_19 = arith.constant 0 : index
    %c0_20 = arith.constant 0 : index
    %40 = vector.load %arg21[%c0_19, %c0_20] : memref<16x32xf32, #tpu.memory_space<vmem>>, vector<16x8xf32>
    %41 = vector.broadcast %25 : vector<16x1xf32> to vector<16x8xf32>
    %42 = arith.mulf %41, %40 : vector<16x8xf32>
    %43 = arith.addf %42, %39 : vector<16x8xf32>
    %c0_21 = arith.constant 0 : index
    %c0_22 = arith.constant 0 : index
    %44 = vector.load %arg21[%c0_21, %c0_22] : memref<16x32xf32, #tpu.memory_space<vmem>>, vector<16x8xf32>
    tpu.vector_store %arg21[%c0_21, %c0_22], %43 {strides = array<i32>} : memref<16x32xf32, #tpu.memory_space<vmem>>, vector<16x8xf32>,
    %c0_23 = arith.constant 0 : index
    %c0_24 = arith.constant 0 : index
    %c0_25 = arith.constant 0 : index
    %45 = vector.load %arg19[%c0_23, %c0_24, %c0_25] : memref<4x16x1xf32, #tpu.memory_space<vmem>>, vector<1x16x1xf32>
    %46 = vector.shape_cast %45 : vector<1x16x1xf32> to vector<16x1xf32>
    %47 = vector.shape_cast %23 : vector<16x1xf32> to vector<1x16x1xf32>
    tpu.vector_store %arg19[%c0_23, %c0_24, %c0_25], %47 {strides = array<i32>} : memref<4x16x1xf32, #tpu.memory_space<vmem>>, vector<1x16x1xf32>,
    %c0_26 = arith.constant 0 : index
    %c8 = arith.constant 8 : index
    %48 = vector.load %arg18[%c0_26, %c8] : memref<16x32xbf16, #tpu.memory_space<vmem>>, vector<16x8xbf16>
    %49 = vector.extract_strided_slice %3 {offsets = [0, 8], sizes = [16, 8], strides = [1, 1]} : vector<16x32xbf16> to vector<16x8xbf16>
    %50 = vector.extract_strided_slice %4 {offsets = [0, 8], sizes = [16, 8], strides = [1, 1]} : vector<16x32xbf16> to vector<16x8xbf16>
    "tpu.trace_start"() <{level = 10 : i32, message = "qd,kd->qk"}> : () -> ()
    %cst_27 = arith.constant dense<0.000000e+00> : vector<16x16xf32>
    %51 = tpu.matmul %48, %49, %cst_27 {dimension_numbers = #tpu.dot_dimension_numbers<[1], [1], [0], [0], [0, 0, 1, 0], [], []>} : vector<16x8xbf16>, vector<16x8xbf16>, vector<16x16xf32> -> vector<16x16xf32>
    %cst_28 = arith.constant -1.000000e+30 : f32
    "tpu.trace_stop"() : () -> ()
    %52 = vector.shape_cast %10 : vector<1x16xi1> to vector<1x16xi1>
    %53 = vector.broadcast %52 : vector<1x16xi1> to vector<16x16xi1>
    %54 = vector.broadcast %cst_28 : f32 to vector<16x16xf32>
    %55 = arith.select %53, %51, %54 : vector<16x16xi1>, vector<16x16xf32>
    %c1 = arith.constant 1 : index
    %c0_29 = arith.constant 0 : index
    %c0_30 = arith.constant 0 : index
    %56 = vector.load %arg19[%c1, %c0_29, %c0_30] : memref<4x16x1xf32, #tpu.memory_space<vmem>>, vector<1x16x1xf32>
    %57 = vector.shape_cast %56 : vector<1x16x1xf32> to vector<16x1xf32>
    %cst_31 = arith.constant dense<0xFF800000> : vector<16xf32>
    %58 = vector.multi_reduction <maximumf>, %55, %cst_31 [1] : vector<16x16xf32> to vector<16xf32>
    %59 = vector.shape_cast %58 : vector<16xf32> to vector<16x1xf32>
    %60 = arith.maximumf %57, %59 : vector<16x1xf32>
    %61 = arith.subf %57, %60 : vector<16x1xf32>
    %62 = math.exp %61 : vector<16x1xf32>
    %63 = vector.broadcast %60 : vector<16x1xf32> to vector<16x16xf32>
    %64 = arith.subf %55, %63 : vector<16x16xf32>
    %65 = math.exp %64 : vector<16x16xf32>
    %c1_32 = arith.constant 1 : index
    %c0_33 = arith.constant 0 : index
    %c0_34 = arith.constant 0 : index
    %66 = vector.load %arg20[%c1_32, %c0_33, %c0_34] : memref<4x16x1xf32, #tpu.memory_space<vmem>>, vector<1x16x1xf32>
    %67 = vector.shape_cast %66 : vector<1x16x1xf32> to vector<16x1xf32>
    %68 = arith.mulf %62, %67 : vector<16x1xf32>
    %cst_35 = arith.constant dense<0.000000e+00> : vector<16xf32>
    %69 = vector.multi_reduction <add>, %65, %cst_35 [1] : vector<16x16xf32> to vector<16xf32>
    %70 = vector.shape_cast %69 : vector<16xf32> to vector<16x1xf32>
    %71 = arith.addf %68, %70 : vector<16x1xf32>
    %c1_36 = arith.constant 1 : index
    %c0_37 = arith.constant 0 : index
    %c0_38 = arith.constant 0 : index
    %72 = vector.load %arg20[%c1_36, %c0_37, %c0_38] : memref<4x16x1xf32, #tpu.memory_space<vmem>>, vector<1x16x1xf32>
    %73 = vector.shape_cast %72 : vector<1x16x1xf32> to vector<16x1xf32>
    %74 = vector.shape_cast %71 : vector<16x1xf32> to vector<1x16x1xf32>
    tpu.vector_store %arg20[%c1_36, %c0_37, %c0_38], %74 {strides = array<i32>} : memref<4x16x1xf32, #tpu.memory_space<vmem>>, vector<1x16x1xf32>,
    %75 = arith.truncf %65 : vector<16x16xf32> to vector<16x16xbf16>
    %cst_39 = arith.constant dense<0.000000e+00> : vector<16x8xf32>
    %76 = tpu.matmul %75, %50, %cst_39 {dimension_numbers = #tpu.dot_dimension_numbers<[1], [0], [0], [1], [0, 0, 1, 1], [], []>} : vector<16x16xbf16>, vector<16x8xbf16>, vector<16x8xf32> -> vector<16x8xf32>
    %c0_40 = arith.constant 0 : index
    %c8_41 = arith.constant 8 : index
    %77 = vector.load %arg21[%c0_40, %c8_41] : memref<16x32xf32, #tpu.memory_space<vmem>>, vector<16x8xf32>
    %78 = vector.broadcast %62 : vector<16x1xf32> to vector<16x8xf32>
    %79 = arith.mulf %78, %77 : vector<16x8xf32>
    %80 = arith.addf %79, %76 : vector<16x8xf32>
    %c0_42 = arith.constant 0 : index
    %c8_43 = arith.constant 8 : index
    %81 = vector.load %arg21[%c0_42, %c8_43] : memref<16x32xf32, #tpu.memory_space<vmem>>, vector<16x8xf32>
    tpu.vector_store %arg21[%c0_42, %c8_43], %80 {strides = array<i32>} : memref<16x32xf32, #tpu.memory_space<vmem>>, vector<16x8xf32>,
    %c1_44 = arith.constant 1 : index
    %c0_45 = arith.constant 0 : index
    %c0_46 = arith.constant 0 : index
    %82 = vector.load %arg19[%c1_44, %c0_45, %c0_46] : memref<4x16x1xf32, #tpu.memory_space<vmem>>, vector<1x16x1xf32>
    %83 = vector.shape_cast %82 : vector<1x16x1xf32> to vector<16x1xf32>
    %84 = vector.shape_cast %60 : vector<16x1xf32> to vector<1x16x1xf32>
    tpu.vector_store %arg19[%c1_44, %c0_45, %c0_46], %84 {strides = array<i32>} : memref<4x16x1xf32, #tpu.memory_space<vmem>>, vector<1x16x1xf32>,
    %c0_47 = arith.constant 0 : index
    %c16 = arith.constant 16 : index
    %85 = vector.load %arg18[%c0_47, %c16] : memref<16x32xbf16, #tpu.memory_space<vmem>>, vector<16x8xbf16>
    %86 = vector.extract_strided_slice %3 {offsets = [0, 16], sizes = [16, 8], strides = [1, 1]} : vector<16x32xbf16> to vector<16x8xbf16>
    %87 = vector.extract_strided_slice %4 {offsets = [0, 16], sizes = [16, 8], strides = [1, 1]} : vector<16x32xbf16> to vector<16x8xbf16>
    "tpu.trace_start"() <{level = 10 : i32, message = "qd,kd->qk"}> : () -> ()
    %cst_48 = arith.constant dense<0.000000e+00> : vector<16x16xf32>
    %88 = tpu.matmul %85, %86, %cst_48 {dimension_numbers = #tpu.dot_dimension_numbers<[1], [1], [0], [0], [0, 0, 1, 0], [], []>} : vector<16x8xbf16>, vector<16x8xbf16>, vector<16x16xf32> -> vector<16x16xf32>
    %cst_49 = arith.constant -1.000000e+30 : f32
    "tpu.trace_stop"() : () -> ()
    %89 = vector.shape_cast %10 : vector<1x16xi1> to vector<1x16xi1>
    %90 = vector.broadcast %89 : vector<1x16xi1> to vector<16x16xi1>
    %91 = vector.broadcast %cst_49 : f32 to vector<16x16xf32>
    %92 = arith.select %90, %88, %91 : vector<16x16xi1>, vector<16x16xf32>
    %c2 = arith.constant 2 : index
    %c0_50 = arith.constant 0 : index
    %c0_51 = arith.constant 0 : index
    %93 = vector.load %arg19[%c2, %c0_50, %c0_51] : memref<4x16x1xf32, #tpu.memory_space<vmem>>, vector<1x16x1xf32>
    %94 = vector.shape_cast %93 : vector<1x16x1xf32> to vector<16x1xf32>
    %cst_52 = arith.constant dense<0xFF800000> : vector<16xf32>
    %95 = vector.multi_reduction <maximumf>, %92, %cst_52 [1] : vector<16x16xf32> to vector<16xf32>
    %96 = vector.shape_cast %95 : vector<16xf32> to vector<16x1xf32>
    %97 = arith.maximumf %94, %96 : vector<16x1xf32>
    %98 = arith.subf %94, %97 : vector<16x1xf32>
    %99 = math.exp %98 : vector<16x1xf32>
    %100 = vector.broadcast %97 : vector<16x1xf32> to vector<16x16xf32>
    %101 = arith.subf %92, %100 : vector<16x16xf32>
    %102 = math.exp %101 : vector<16x16xf32>
    %c2_53 = arith.constant 2 : index
    %c0_54 = arith.constant 0 : index
    %c0_55 = arith.constant 0 : index
    %103 = vector.load %arg20[%c2_53, %c0_54, %c0_55] : memref<4x16x1xf32, #tpu.memory_space<vmem>>, vector<1x16x1xf32>
    %104 = vector.shape_cast %103 : vector<1x16x1xf32> to vector<16x1xf32>
    %105 = arith.mulf %99, %104 : vector<16x1xf32>
    %cst_56 = arith.constant dense<0.000000e+00> : vector<16xf32>
    %106 = vector.multi_reduction <add>, %102, %cst_56 [1] : vector<16x16xf32> to vector<16xf32>
    %107 = vector.shape_cast %106 : vector<16xf32> to vector<16x1xf32>
    %108 = arith.addf %105, %107 : vector<16x1xf32>
    %c2_57 = arith.constant 2 : index
    %c0_58 = arith.constant 0 : index
    %c0_59 = arith.constant 0 : index
    %109 = vector.load %arg20[%c2_57, %c0_58, %c0_59] : memref<4x16x1xf32, #tpu.memory_space<vmem>>, vector<1x16x1xf32>
    %110 = vector.shape_cast %109 : vector<1x16x1xf32> to vector<16x1xf32>
    %111 = vector.shape_cast %108 : vector<16x1xf32> to vector<1x16x1xf32>
    tpu.vector_store %arg20[%c2_57, %c0_58, %c0_59], %111 {strides = array<i32>} : memref<4x16x1xf32, #tpu.memory_space<vmem>>, vector<1x16x1xf32>,
    %112 = arith.truncf %102 : vector<16x16xf32> to vector<16x16xbf16>
    %cst_60 = arith.constant dense<0.000000e+00> : vector<16x8xf32>
    %113 = tpu.matmul %112, %87, %cst_60 {dimension_numbers = #tpu.dot_dimension_numbers<[1], [0], [0], [1], [0, 0, 1, 1], [], []>} : vector<16x16xbf16>, vector<16x8xbf16>, vector<16x8xf32> -> vector<16x8xf32>
    %c0_61 = arith.constant 0 : index
    %c16_62 = arith.constant 16 : index
    %114 = vector.load %arg21[%c0_61, %c16_62] : memref<16x32xf32, #tpu.memory_space<vmem>>, vector<16x8xf32>
    %115 = vector.broadcast %99 : vector<16x1xf32> to vector<16x8xf32>
    %116 = arith.mulf %115, %114 : vector<16x8xf32>
    %117 = arith.addf %116, %113 : vector<16x8xf32>
    %c0_63 = arith.constant 0 : index
    %c16_64 = arith.constant 16 : index
    %118 = vector.load %arg21[%c0_63, %c16_64] : memref<16x32xf32, #tpu.memory_space<vmem>>, vector<16x8xf32>
    tpu.vector_store %arg21[%c0_63, %c16_64], %117 {strides = array<i32>} : memref<16x32xf32, #tpu.memory_space<vmem>>, vector<16x8xf32>,
    %c2_65 = arith.constant 2 : index
    %c0_66 = arith.constant 0 : index
    %c0_67 = arith.constant 0 : index
    %119 = vector.load %arg19[%c2_65, %c0_66, %c0_67] : memref<4x16x1xf32, #tpu.memory_space<vmem>>, vector<1x16x1xf32>
    %120 = vector.shape_cast %119 : vector<1x16x1xf32> to vector<16x1xf32>
    %121 = vector.shape_cast %97 : vector<16x1xf32> to vector<1x16x1xf32>
    tpu.vector_store %arg19[%c2_65, %c0_66, %c0_67], %121 {strides = array<i32>} : memref<4x16x1xf32, #tpu.memory_space<vmem>>, vector<1x16x1xf32>,
    %c0_68 = arith.constant 0 : index
    %c24 = arith.constant 24 : index
    %122 = vector.load %arg18[%c0_68, %c24] : memref<16x32xbf16, #tpu.memory_space<vmem>>, vector<16x8xbf16>
    %123 = vector.extract_strided_slice %3 {offsets = [0, 24], sizes = [16, 8], strides = [1, 1]} : vector<16x32xbf16> to vector<16x8xbf16>
    %124 = vector.extract_strided_slice %4 {offsets = [0, 24], sizes = [16, 8], strides = [1, 1]} : vector<16x32xbf16> to vector<16x8xbf16>
    "tpu.trace_start"() <{level = 10 : i32, message = "qd,kd->qk"}> : () -> ()
    %cst_69 = arith.constant dense<0.000000e+00> : vector<16x16xf32>
    %125 = tpu.matmul %122, %123, %cst_69 {dimension_numbers = #tpu.dot_dimension_numbers<[1], [1], [0], [0], [0, 0, 1, 0], [], []>} : vector<16x8xbf16>, vector<16x8xbf16>, vector<16x16xf32> -> vector<16x16xf32>
    %cst_70 = arith.constant -1.000000e+30 : f32
    "tpu.trace_stop"() : () -> ()
    %126 = vector.shape_cast %10 : vector<1x16xi1> to vector<1x16xi1>
    %127 = vector.broadcast %126 : vector<1x16xi1> to vector<16x16xi1>
    %128 = vector.broadcast %cst_70 : f32 to vector<16x16xf32>
    %129 = arith.select %127, %125, %128 : vector<16x16xi1>, vector<16x16xf32>
    %c3 = arith.constant 3 : index
    %c0_71 = arith.constant 0 : index
    %c0_72 = arith.constant 0 : index
    %130 = vector.load %arg19[%c3, %c0_71, %c0_72] : memref<4x16x1xf32, #tpu.memory_space<vmem>>, vector<1x16x1xf32>
    %131 = vector.shape_cast %130 : vector<1x16x1xf32> to vector<16x1xf32>
    %cst_73 = arith.constant dense<0xFF800000> : vector<16xf32>
    %132 = vector.multi_reduction <maximumf>, %129, %cst_73 [1] : vector<16x16xf32> to vector<16xf32>
    %133 = vector.shape_cast %132 : vector<16xf32> to vector<16x1xf32>
    %134 = arith.maximumf %131, %133 : vector<16x1xf32>
    %135 = arith.subf %131, %134 : vector<16x1xf32>
    %136 = math.exp %135 : vector<16x1xf32>
    %137 = vector.broadcast %134 : vector<16x1xf32> to vector<16x16xf32>
    %138 = arith.subf %129, %137 : vector<16x16xf32>
    %139 = math.exp %138 : vector<16x16xf32>
    %c3_74 = arith.constant 3 : index
    %c0_75 = arith.constant 0 : index
    %c0_76 = arith.constant 0 : index
    %140 = vector.load %arg20[%c3_74, %c0_75, %c0_76] : memref<4x16x1xf32, #tpu.memory_space<vmem>>, vector<1x16x1xf32>
    %141 = vector.shape_cast %140 : vector<1x16x1xf32> to vector<16x1xf32>
    %142 = arith.mulf %136, %141 : vector<16x1xf32>
    %cst_77 = arith.constant dense<0.000000e+00> : vector<16xf32>
    %143 = vector.multi_reduction <add>, %139, %cst_77 [1] : vector<16x16xf32> to vector<16xf32>
    %144 = vector.shape_cast %143 : vector<16xf32> to vector<16x1xf32>
    %145 = arith.addf %142, %144 : vector<16x1xf32>
    %c3_78 = arith.constant 3 : index
    %c0_79 = arith.constant 0 : index
    %c0_80 = arith.constant 0 : index
    %146 = vector.load %arg20[%c3_78, %c0_79, %c0_80] : memref<4x16x1xf32, #tpu.memory_space<vmem>>, vector<1x16x1xf32>
    %147 = vector.shape_cast %146 : vector<1x16x1xf32> to vector<16x1xf32>
    %148 = vector.shape_cast %145 : vector<16x1xf32> to vector<1x16x1xf32>
    tpu.vector_store %arg20[%c3_78, %c0_79, %c0_80], %148 {strides = array<i32>} : memref<4x16x1xf32, #tpu.memory_space<vmem>>, vector<1x16x1xf32>,
    %149 = arith.truncf %139 : vector<16x16xf32> to vector<16x16xbf16>
    %cst_81 = arith.constant dense<0.000000e+00> : vector<16x8xf32>
    %150 = tpu.matmul %149, %124, %cst_81 {dimension_numbers = #tpu.dot_dimension_numbers<[1], [0], [0], [1], [0, 0, 1, 1], [], []>} : vector<16x16xbf16>, vector<16x8xbf16>, vector<16x8xf32> -> vector<16x8xf32>
    %c0_82 = arith.constant 0 : index
    %c24_83 = arith.constant 24 : index
    %151 = vector.load %arg21[%c0_82, %c24_83] : memref<16x32xf32, #tpu.memory_space<vmem>>, vector<16x8xf32>
    %152 = vector.broadcast %136 : vector<16x1xf32> to vector<16x8xf32>
    %153 = arith.mulf %152, %151 : vector<16x8xf32>
    %154 = arith.addf %153, %150 : vector<16x8xf32>
    %c0_84 = arith.constant 0 : index
    %c24_85 = arith.constant 24 : index
    %155 = vector.load %arg21[%c0_84, %c24_85] : memref<16x32xf32, #tpu.memory_space<vmem>>, vector<16x8xf32>
    tpu.vector_store %arg21[%c0_84, %c24_85], %154 {strides = array<i32>} : memref<16x32xf32, #tpu.memory_space<vmem>>, vector<16x8xf32>,
    %c3_86 = arith.constant 3 : index
    %c0_87 = arith.constant 0 : index
    %c0_88 = arith.constant 0 : index
    %156 = vector.load %arg19[%c3_86, %c0_87, %c0_88] : memref<4x16x1xf32, #tpu.memory_space<vmem>>, vector<1x16x1xf32>
    %157 = vector.shape_cast %156 : vector<1x16x1xf32> to vector<16x1xf32>
    %158 = vector.shape_cast %134 : vector<16x1xf32> to vector<1x16x1xf32>
    tpu.vector_store %arg19[%c3_86, %c0_87, %c0_88], %158 {strides = array<i32>} : memref<4x16x1xf32, #tpu.memory_space<vmem>>, vector<1x16x1xf32>,
    %c0_i32_89 = arith.constant 0 : i32
    %159 = arith.cmpi eq, %arg1, %c0_i32_89 : i32
    %160 = arith.extui %159 : i1 to i32
    %c0_i32_90 = arith.constant 0 : i32
    %161 = arith.cmpi ne, %160, %c0_i32_90 : i32
    scf.if %161 {
      %c0_91 = arith.constant 0 : index
      %c0_92 = arith.constant 0 : index
      %c0_93 = arith.constant 0 : index
      %162 = vector.load %arg20[%c0_91, %c0_92, %c0_93] : memref<4x16x1xf32, #tpu.memory_space<vmem>>, vector<1x16x1xf32>
      %163 = vector.shape_cast %162 : vector<1x16x1xf32> to vector<16x1xf32>
      %164 = tpu.reciprocal %163 {approx = true} : vector<16x1xf32> -> vector<16x1xf32>
      %c0_94 = arith.constant 0 : index
      %c0_95 = arith.constant 0 : index
      %165 = vector.load %arg21[%c0_94, %c0_95] : memref<16x32xf32, #tpu.memory_space<vmem>>, vector<16x8xf32>
      %166 = vector.broadcast %164 : vector<16x1xf32> to vector<16x8xf32>
      %167 = arith.mulf %165, %166 : vector<16x8xf32>
      %168 = arith.truncf %167 : vector<16x8xf32> to vector<16x8xbf16>
      %c1_96 = arith.constant 1 : index
      %c0_97 = arith.constant 0 : index
      %c0_98 = arith.constant 0 : index
      %169 = vector.load %arg20[%c1_96, %c0_97, %c0_98] : memref<4x16x1xf32, #tpu.memory_space<vmem>>, vector<1x16x1xf32>
      %170 = vector.shape_cast %169 : vector<1x16x1xf32> to vector<16x1xf32>
      %171 = tpu.reciprocal %170 {approx = true} : vector<16x1xf32> -> vector<16x1xf32>
      %c0_99 = arith.constant 0 : index
      %c8_100 = arith.constant 8 : index
      %172 = vector.load %arg21[%c0_99, %c8_100] : memref<16x32xf32, #tpu.memory_space<vmem>>, vector<16x8xf32>
      %173 = vector.broadcast %171 : vector<16x1xf32> to vector<16x8xf32>
      %174 = arith.mulf %172, %173 : vector<16x8xf32>
      %175 = arith.truncf %174 : vector<16x8xf32> to vector<16x8xbf16>
      %c2_101 = arith.constant 2 : index
      %c0_102 = arith.constant 0 : index
      %c0_103 = arith.constant 0 : index
      %176 = vector.load %arg20[%c2_101, %c0_102, %c0_103] : memref<4x16x1xf32, #tpu.memory_space<vmem>>, vector<1x16x1xf32>
      %177 = vector.shape_cast %176 : vector<1x16x1xf32> to vector<16x1xf32>
      %178 = tpu.reciprocal %177 {approx = true} : vector<16x1xf32> -> vector<16x1xf32>
      %c0_104 = arith.constant 0 : index
      %c16_105 = arith.constant 16 : index
      %179 = vector.load %arg21[%c0_104, %c16_105] : memref<16x32xf32, #tpu.memory_space<vmem>>, vector<16x8xf32>
      %180 = vector.broadcast %178 : vector<16x1xf32> to vector<16x8xf32>
      %181 = arith.mulf %179, %180 : vector<16x8xf32>
      %182 = arith.truncf %181 : vector<16x8xf32> to vector<16x8xbf16>
      %c3_106 = arith.constant 3 : index
      %c0_107 = arith.constant 0 : index
      %c0_108 = arith.constant 0 : index
      %183 = vector.load %arg20[%c3_106, %c0_107, %c0_108] : memref<4x16x1xf32, #tpu.memory_space<vmem>>, vector<1x16x1xf32>
      %184 = vector.shape_cast %183 : vector<1x16x1xf32> to vector<16x1xf32>
      %185 = tpu.reciprocal %184 {approx = true} : vector<16x1xf32> -> vector<16x1xf32>
      %c0_109 = arith.constant 0 : index
      %c24_110 = arith.constant 24 : index
      %186 = vector.load %arg21[%c0_109, %c24_110] : memref<16x32xf32, #tpu.memory_space<vmem>>, vector<16x8xf32>
      %187 = vector.broadcast %185 : vector<16x1xf32> to vector<16x8xf32>
      %188 = arith.mulf %186, %187 : vector<16x8xf32>
      %189 = arith.truncf %188 : vector<16x8xf32> to vector<16x8xbf16>
      %190 = tpu.concatenate %168, %175, %182, %189 in 1 : vector<16x8xbf16>, vector<16x8xbf16>, vector<16x8xbf16>, vector<16x8xbf16> -> vector<16x32xbf16>
      %c0_111 = arith.constant 0 : index
      %c0_112 = arith.constant 0 : index
      %191 = vector.load %arg7[%c0_111, %c0_112] : memref<32x32xbf16, #tpu.memory_space<vmem>>, vector<32x32xbf16>
      %cst_113 = arith.constant dense<0.000000e+00> : vector<16x32xf32>
      %192 = tpu.matmul %190, %191, %cst_113 {dimension_numbers = #tpu.dot_dimension_numbers<[1], [0], [0], [1], [0, 0, 1, 1], [], []>} : vector<16x32xbf16>, vector<32x32xbf16>, vector<16x32xf32> -> vector<16x32xf32>
      %c0_114 = arith.constant 0 : index
      %c0_115 = arith.constant 0 : index
      %193 = vector.load %arg8[%c0_114, %c0_115] : memref<1x32xf32, #tpu.memory_space<vmem>>, vector<1x32xf32>
      %194 = vector.broadcast %193 : vector<1x32xf32> to vector<16x32xf32>
      %195 = arith.addf %192, %194 : vector<16x32xf32>
      %c0_116 = arith.constant 0 : index
      %c0_117 = arith.constant 0 : index
      %196 = vector.load %arg2[%c0_116, %c0_117] : memref<16x32xf32, #tpu.memory_space<vmem>>, vector<16x32xf32>
      %197 = arith.addf %196, %195 : vector<16x32xf32>
      %c0_118 = arith.constant 0 : index
      %c0_119 = arith.constant 0 : index
      %198 = vector.load %arg9[%c0_118, %c0_119] : memref<1x32xf32, #tpu.memory_space<vmem>>, vector<1x32xf32>
      %c0_120 = arith.constant 0 : index
      %c0_121 = arith.constant 0 : index
      %199 = vector.load %arg10[%c0_120, %c0_121] : memref<1x32xf32, #tpu.memory_space<vmem>>, vector<1x32xf32>
      %cst_122 = arith.constant dense<0.000000e+00> : vector<16xf32>
      %200 = vector.multi_reduction <add>, %197, %cst_122 [1] : vector<16x32xf32> to vector<16xf32>
      %201 = vector.shape_cast %200 : vector<16xf32> to vector<16x1xf32>
      %cst_123 = arith.constant 3.200000e+01 : f32
      %202 = vector.broadcast %cst_123 : f32 to vector<16x1xf32>
      %203 = arith.divf %201, %202 : vector<16x1xf32>
      %204 = vector.broadcast %203 : vector<16x1xf32> to vector<16x32xf32>
      %205 = arith.subf %197, %204 : vector<16x32xf32>
      %206 = arith.mulf %205, %205 : vector<16x32xf32>
      %cst_124 = arith.constant dense<0.000000e+00> : vector<16xf32>
      %207 = vector.multi_reduction <add>, %206, %cst_124 [1] : vector<16x32xf32> to vector<16xf32>
      %208 = vector.shape_cast %207 : vector<16xf32> to vector<16x1xf32>
      %cst_125 = arith.constant 3.200000e+01 : f32
      %209 = vector.broadcast %cst_125 : f32 to vector<16x1xf32>
      %210 = arith.divf %208, %209 : vector<16x1xf32>
      %cst_126 = arith.constant 9.99999974E-6 : f32
      %211 = vector.broadcast %cst_126 : f32 to vector<16x1xf32>
      %212 = arith.addf %210, %211 : vector<16x1xf32>
      %213 = math.rsqrt %212 : vector<16x1xf32>
      %214 = vector.broadcast %213 : vector<16x1xf32> to vector<16x32xf32>
      %215 = arith.mulf %205, %214 : vector<16x32xf32>
      %216 = vector.broadcast %198 : vector<1x32xf32> to vector<16x32xf32>
      %217 = arith.mulf %215, %216 : vector<16x32xf32>
      %218 = vector.broadcast %199 : vector<1x32xf32> to vector<16x32xf32>
      %219 = arith.addf %217, %218 : vector<16x32xf32>
      %220 = arith.truncf %219 : vector<16x32xf32> to vector<16x32xbf16>
      %c0_127 = arith.constant 0 : index
      %c0_128 = arith.constant 0 : index
      %221 = vector.load %arg11[%c0_127, %c0_128] : memref<32x64xbf16, #tpu.memory_space<vmem>>, vector<32x64xbf16>
      %cst_129 = arith.constant dense<0.000000e+00> : vector<16x64xf32>
      %222 = tpu.matmul %220, %221, %cst_129 {dimension_numbers = #tpu.dot_dimension_numbers<[1], [0], [0], [1], [0, 0, 1, 1], [], []>} : vector<16x32xbf16>, vector<32x64xbf16>, vector<16x64xf32> -> vector<16x64xf32>
      %c0_130 = arith.constant 0 : index
      %c0_131 = arith.constant 0 : index
      %223 = vector.load %arg12[%c0_130, %c0_131] : memref<1x64xf32, #tpu.memory_space<vmem>>, vector<1x64xf32>
      %224 = vector.broadcast %223 : vector<1x64xf32> to vector<16x64xf32>
      %225 = arith.addf %222, %224 : vector<16x64xf32>
      %cst_132 = arith.constant 0.000000e+00 : f32
      %226 = vector.broadcast %cst_132 : f32 to vector<16x64xf32>
      %227 = arith.maximumf %225, %226 : vector<16x64xf32>
      %228 = arith.truncf %227 : vector<16x64xf32> to vector<16x64xbf16>
      %c0_133 = arith.constant 0 : index
      %c0_134 = arith.constant 0 : index
      %229 = vector.load %arg13[%c0_133, %c0_134] : memref<64x32xbf16, #tpu.memory_space<vmem>>, vector<64x32xbf16>
      %cst_135 = arith.constant dense<0.000000e+00> : vector<16x32xf32>
      %230 = tpu.matmul %228, %229, %cst_135 {dimension_numbers = #tpu.dot_dimension_numbers<[1], [0], [0], [1], [0, 0, 1, 1], [], []>} : vector<16x64xbf16>, vector<64x32xbf16>, vector<16x32xf32> -> vector<16x32xf32>
      %c0_136 = arith.constant 0 : index
      %c0_137 = arith.constant 0 : index
      %231 = vector.load %arg14[%c0_136, %c0_137] : memref<1x32xf32, #tpu.memory_space<vmem>>, vector<1x32xf32>
      %232 = vector.broadcast %231 : vector<1x32xf32> to vector<16x32xf32>
      %233 = arith.addf %230, %232 : vector<16x32xf32>
      %234 = arith.addf %219, %233 : vector<16x32xf32>
      %c0_138 = arith.constant 0 : index
      %c0_139 = arith.constant 0 : index
      %235 = vector.load %arg15[%c0_138, %c0_139] : memref<1x32xf32, #tpu.memory_space<vmem>>, vector<1x32xf32>
      %c0_140 = arith.constant 0 : index
      %c0_141 = arith.constant 0 : index
      %236 = vector.load %arg16[%c0_140, %c0_141] : memref<1x32xf32, #tpu.memory_space<vmem>>, vector<1x32xf32>
      %cst_142 = arith.constant dense<0.000000e+00> : vector<16xf32>
      %237 = vector.multi_reduction <add>, %234, %cst_142 [1] : vector<16x32xf32> to vector<16xf32>
      %238 = vector.shape_cast %237 : vector<16xf32> to vector<16x1xf32>
      %cst_143 = arith.constant 3.200000e+01 : f32
      %239 = vector.broadcast %cst_143 : f32 to vector<16x1xf32>
      %240 = arith.divf %238, %239 : vector<16x1xf32>
      %241 = vector.broadcast %240 : vector<16x1xf32> to vector<16x32xf32>
      %242 = arith.subf %234, %241 : vector<16x32xf32>
      %243 = arith.mulf %242, %242 : vector<16x32xf32>
      %cst_144 = arith.constant dense<0.000000e+00> : vector<16xf32>
      %244 = vector.multi_reduction <add>, %243, %cst_144 [1] : vector<16x32xf32> to vector<16xf32>
      %245 = vector.shape_cast %244 : vector<16xf32> to vector<16x1xf32>
      %cst_145 = arith.constant 3.200000e+01 : f32
      %246 = vector.broadcast %cst_145 : f32 to vector<16x1xf32>
      %247 = arith.divf %245, %246 : vector<16x1xf32>
      %cst_146 = arith.constant 9.99999974E-6 : f32
      %248 = vector.broadcast %cst_146 : f32 to vector<16x1xf32>
      %249 = arith.addf %247, %248 : vector<16x1xf32>
      %250 = math.rsqrt %249 : vector<16x1xf32>
      %251 = vector.broadcast %250 : vector<16x1xf32> to vector<16x32xf32>
      %252 = arith.mulf %242, %251 : vector<16x32xf32>
      %253 = vector.broadcast %235 : vector<1x32xf32> to vector<16x32xf32>
      %254 = arith.mulf %252, %253 : vector<16x32xf32>
      %255 = vector.broadcast %236 : vector<1x32xf32> to vector<16x32xf32>
      %256 = arith.addf %254, %255 : vector<16x32xf32>
      %c0_147 = arith.constant 0 : index
      %c0_148 = arith.constant 0 : index
      %257 = vector.load %arg17[%c0_147, %c0_148] : memref<16x32xf32, #tpu.memory_space<vmem>>, vector<16x32xf32>
      tpu.vector_store %arg17[%c0_147, %c0_148], %256 {strides = array<i32>} : memref<16x32xf32, #tpu.memory_space<vmem>>, vector<16x32xf32>,
    } else {
    }
    return
  }
  func.func @transform_0(%arg0: i32, %arg1: i32) -> (i32, i32) {
    %c0_i32 = arith.constant 0 : i32
    %c0_i32_0 = arith.constant 0 : i32
    return %arg0, %c0_i32 : i32, i32
  }
  func.func @transform_1(%arg0: i32, %arg1: i32) -> (i32, i32) {
    %c0_i32 = arith.constant 0 : i32
    %c0_i32_0 = arith.constant 0 : i32
    return %arg1, %c0_i32 : i32, i32
  }
  func.func @transform_2(%arg0: i32, %arg1: i32) -> (i32, i32) {
    %c0_i32 = arith.constant 0 : i32
    %c0_i32_0 = arith.constant 0 : i32
    return %arg1, %c0_i32 : i32, i32
  }
  func.func @transform_3(%arg0: i32, %arg1: i32) -> (i32, i32) {
    %c0_i32 = arith.constant 0 : i32
    %c0_i32_0 = arith.constant 0 : i32
    %c0_i32_1 = arith.constant 0 : i32
    return %c0_i32, %c0_i32_0 : i32, i32
  }
  func.func @transform_4(%arg0: i32, %arg1: i32) -> (i32, i32) {
    %c0_i32 = arith.constant 0 : i32
    %c0_i32_0 = arith.constant 0 : i32
    %c0_i32_1 = arith.constant 0 : i32
    return %c0_i32, %c0_i32_0 : i32, i32
  }
  func.func @transform_5(%arg0: i32, %arg1: i32) -> (i32, i32) {
    %c0_i32 = arith.constant 0 : i32
    %c0_i32_0 = arith.constant 0 : i32
    %c0_i32_1 = arith.constant 0 : i32
    return %c0_i32, %c0_i32_0 : i32, i32
  }
  func.func @transform_6(%arg0: i32, %arg1: i32) -> (i32, i32) {
    %c0_i32 = arith.constant 0 : i32
    %c0_i32_0 = arith.constant 0 : i32
    %c0_i32_1 = arith.constant 0 : i32
    return %c0_i32, %c0_i32_0 : i32, i32
  }
  func.func @transform_7(%arg0: i32, %arg1: i32) -> (i32, i32) {
    %c0_i32 = arith.constant 0 : i32
    %c0_i32_0 = arith.constant 0 : i32
    %c0_i32_1 = arith.constant 0 : i32
    return %c0_i32, %c0_i32_0 : i32, i32
  }
  func.func @transform_8(%arg0: i32, %arg1: i32) -> (i32, i32) {
    %c0_i32 = arith.constant 0 : i32
    %c0_i32_0 = arith.constant 0 : i32
    %c0_i32_1 = arith.constant 0 : i32
    return %c0_i32, %c0_i32_0 : i32, i32
  }
  func.func @transform_9(%arg0: i32, %arg1: i32) -> (i32, i32) {
    %c0_i32 = arith.constant 0 : i32
    %c0_i32_0 = arith.constant 0 : i32
    %c0_i32_1 = arith.constant 0 : i32
    return %c0_i32, %c0_i32_0 : i32, i32
  }
  func.func @transform_10(%arg0: i32, %arg1: i32) -> (i32, i32) {
    %c0_i32 = arith.constant 0 : i32
    %c0_i32_0 = arith.constant 0 : i32
    %c0_i32_1 = arith.constant 0 : i32
    return %c0_i32, %c0_i32_0 : i32, i32
  }
  func.func @transform_11(%arg0: i32, %arg1: i32) -> (i32, i32) {
    %c0_i32 = arith.constant 0 : i32
    %c0_i32_0 = arith.constant 0 : i32
    %c0_i32_1 = arith.constant 0 : i32
    return %c0_i32, %c0_i32_0 : i32, i32
  }
  func.func @transform_12(%arg0: i32, %arg1: i32) -> (i32, i32) {
    %c0_i32 = arith.constant 0 : i32
    %c0_i32_0 = arith.constant 0 : i32
    %c0_i32_1 = arith.constant 0 : i32
    return %c0_i32, %c0_i32_0 : i32, i32
  }
  func.func @transform_13(%arg0: i32, %arg1: i32) -> (i32, i32) {
    %c0_i32 = arith.constant 0 : i32
    %c0_i32_0 = arith.constant 0 : i32
    %c0_i32_1 = arith.constant 0 : i32
    return %c0_i32, %c0_i32_0 : i32, i32
  }
  func.func @transform_14(%arg0: i32, %arg1: i32) -> (i32, i32) {
    %c0_i32 = arith.constant 0 : i32
    %c0_i32_0 = arith.constant 0 : i32
    %c0_i32_1 = arith.constant 0 : i32
    return %c0_i32, %c0_i32_0 : i32, i32
  }
  func.func @transform_15(%arg0: i32, %arg1: i32) -> (i32, i32) {
    %c0_i32 = arith.constant 0 : i32
    %c0_i32_0 = arith.constant 0 : i32
    return %arg0, %c0_i32 : i32, i32
  }
}

module attributes {stable_mosaic.version = 11 : i64} {
  func.func @attn_ffn_kernel(%arg0: i32, %arg1: i32, %arg2: memref<16x32xf32, #tpu.memory_space<vmem>>, %arg3: memref<16x32xbf16, #tpu.memory_space<vmem>>, %arg4: memref<16x32xbf16, #tpu.memory_space<vmem>>, %arg5: memref<32x32xbf16, #tpu.memory_space<vmem>>, %arg6: memref<1x32xf32, #tpu.memory_space<vmem>>, %arg7: memref<32x32xbf16, #tpu.memory_space<vmem>>, %arg8: memref<1x32xf32, #tpu.memory_space<vmem>>, %arg9: memref<1x32xf32, #tpu.memory_space<vmem>>, %arg10: memref<1x32xf32, #tpu.memory_space<vmem>>, %arg11: memref<32x64xbf16, #tpu.memory_space<vmem>>, %arg12: memref<1x64xf32, #tpu.memory_space<vmem>>, %arg13: memref<64x32xbf16, #tpu.memory_space<vmem>>, %arg14: memref<1x32xf32, #tpu.memory_space<vmem>>, %arg15: memref<1x32xf32, #tpu.memory_space<vmem>>, %arg16: memref<1x32xf32, #tpu.memory_space<vmem>>, %arg17: memref<16x32xf32, #tpu.memory_space<vmem>>, %arg18: memref<16x32xbf16, #tpu.memory_space<vmem>>, %arg19: memref<4x16x1xf32, #tpu.memory_space<vmem>>, %arg20: memref<4x16x1xf32, #tpu.memory_space<vmem>>, %arg21: memref<16x32xf32, #tpu.memory_space<vmem>>) attributes {dimension_semantics = [#tpu.dimension_semantics<parallel>, #tpu.dimension_semantics<arbitrary>], iteration_bounds = array<i64: 1, 1>, scalar_prefetch = 0 : i64, scratch_operands = 4 : i64, tpu.core_type = #tpu.core_type<tc>, window_params = [{transform_indices = @transform_0, window_bounds = array<i64: 16, 32>}, {transform_indices = @transform_1, window_bounds = array<i64: 16, 32>}, {transform_indices = @transform_2, window_bounds = array<i64: 16, 32>}, {pipeline_mode = #tpu.pipeline_mode<synchronous>, transform_indices = @transform_3, window_bounds = array<i64: 32, 32>}, {pipeline_mode = #tpu.pipeline_mode<synchronous>, transform_indices = @transform_4, window_bounds = array<i64: 1, 32>}, {pipeline_mode = #tpu.pipeline_mode<synchronous>, transform_indices = @transform_5, window_bounds = array<i64: 32, 32>}, {pipeline_mode = #tpu.pipeline_mode<synchronous>, transform_indices = @transform_6, window_bounds = array<i64: 1, 32>}, {pipeline_mode = #tpu.pipeline_mode<synchronous>, transform_indices = @transform_7, window_bounds = array<i64: 1, 32>}, {pipeline_mode = #tpu.pipeline_mode<synchronous>, transform_indices = @transform_8, window_bounds = array<i64: 1, 32>}, {pipeline_mode = #tpu.pipeline_mode<synchronous>, transform_indices = @transform_9, window_bounds = array<i64: 32, 64>}, {pipeline_mode = #tpu.pipeline_mode<synchronous>, transform_indices = @transform_10, window_bounds = array<i64: 1, 64>}, {pipeline_mode = #tpu.pipeline_mode<synchronous>, transform_indices = @transform_11, window_bounds = array<i64: 64, 32>}, {pipeline_mode = #tpu.pipeline_mode<synchronous>, transform_indices = @transform_12, window_bounds = array<i64: 1, 32>}, {pipeline_mode = #tpu.pipeline_mode<synchronous>, transform_indices = @transform_13, window_bounds = array<i64: 1, 32>}, {pipeline_mode = #tpu.pipeline_mode<synchronous>, transform_indices = @transform_14, window_bounds = array<i64: 1, 32>}, {transform_indices = @transform_15, window_bounds = array<i64: 16, 32>}]} {
    %c0_i32 = arith.constant 0 : i32
    %0 = arith.cmpi eq, %arg1, %c0_i32 : i32
    %1 = arith.extui %0 : i1 to i32
    %c0_i32_0 = arith.constant 0 : i32
    %2 = arith.cmpi ne, %1, %c0_i32_0 : i32
    scf.if %2 {
      %c0_91 = arith.constant 0 : index
      %c0_92 = arith.constant 0 : index
      %162 = vector.load %arg2[%c0_91, %c0_92] : memref<16x32xf32, #tpu.memory_space<vmem>>, vector<16x32xf32>
      %163 = arith.truncf %162 : vector<16x32xf32> to vector<16x32xbf16>
      %c0_93 = arith.constant 0 : index
      %c0_94 = arith.constant 0 : index
      %164 = vector.load %arg5[%c0_93, %c0_94] : memref<32x32xbf16, #tpu.memory_space<vmem>>, vector<32x32xbf16>
      %cst_95 = arith.constant dense<0.000000e+00> : vector<16x32xf32>
      %165 = tpu.matmul %163, %164, %cst_95 {dimension_numbers = #tpu.dot_dimension_numbers<[1], [0], [0], [1], [0, 0, 1, 1], [], []>} : vector<16x32xbf16>, vector<32x32xbf16>, vector<16x32xf32> -> vector<16x32xf32>
      %c0_96 = arith.constant 0 : index
      %c0_97 = arith.constant 0 : index
      %166 = vector.load %arg6[%c0_96, %c0_97] : memref<1x32xf32, #tpu.memory_space<vmem>>, vector<1x32xf32>
      %167 = vector.broadcast %166 : vector<1x32xf32> to vector<16x32xf32>
      %168 = arith.addf %165, %167 : vector<16x32xf32>
      %169 = arith.truncf %168 : vector<16x32xf32> to vector<16x32xbf16>
      %c0_98 = arith.constant 0 : index
      %c0_99 = arith.constant 0 : index
      %170 = vector.load %arg18[%c0_98, %c0_99] : memref<16x32xbf16, #tpu.memory_space<vmem>>, vector<16x32xbf16>
      tpu.vector_store %arg18[%c0_98, %c0_99], %169 {strides = array<i32>} : memref<16x32xbf16, #tpu.memory_space<vmem>>, vector<16x32xbf16>,
      %cst_100 = arith.constant 0xFF800000 : f32
      %171 = vector.broadcast %cst_100 : f32 to vector<4x16x1xf32>
      %c0_101 = arith.constant 0 : index
      %c0_102 = arith.constant 0 : index
      %c0_103 = arith.constant 0 : index
      %172 = vector.load %arg19[%c0_101, %c0_102, %c0_103] : memref<4x16x1xf32, #tpu.memory_space<vmem>>, vector<4x16x1xf32>
      tpu.vector_store %arg19[%c0_101, %c0_102, %c0_103], %171 {strides = array<i32>} : memref<4x16x1xf32, #tpu.memory_space<vmem>>, vector<4x16x1xf32>,
      %cst_104 = arith.constant 0.000000e+00 : f32
      %173 = vector.broadcast %cst_104 : f32 to vector<4x16x1xf32>
      %c0_105 = arith.constant 0 : index
      %c0_106 = arith.constant 0 : index
      %c0_107 = arith.constant 0 : index
      %174 = vector.load %arg20[%c0_105, %c0_106, %c0_107] : memref<4x16x1xf32, #tpu.memory_space<vmem>>, vector<4x16x1xf32>
      tpu.vector_store %arg20[%c0_105, %c0_106, %c0_107], %173 {strides = array<i32>} : memref<4x16x1xf32, #tpu.memory_space<vmem>>, vector<4x16x1xf32>,
      %cst_108 = arith.constant 0.000000e+00 : f32
      %175 = vector.broadcast %cst_108 : f32 to vector<16x32xf32>
      %c0_109 = arith.constant 0 : index
      %c0_110 = arith.constant 0 : index
      %176 = vector.load %arg21[%c0_109, %c0_110] : memref<16x32xf32, #tpu.memory_space<vmem>>, vector<16x32xf32>
      tpu.vector_store %arg21[%c0_109, %c0_110], %175 {strides = array<i32>} : memref<16x32xf32, #tpu.memory_space<vmem>>, vector<16x32xf32>,
    } else {
    }
    %c0 = arith.constant 0 : index
    %c0_1 = arith.constant 0 : index
    %3 = vector.load %arg3[%c0, %c0_1] : memref<16x32xbf16, #tpu.memory_space<vmem>>, vector<16x32xbf16>
    %c0_2 = arith.constant 0 : index
    %c0_3 = arith.constant 0 : index
    %4 = vector.load %arg4[%c0_2, %c0_3] : memref<16x32xbf16, #tpu.memory_space<vmem>>, vector<16x32xbf16>
    %5 = tpu.iota {dimensions = array<i32: 1>} : vector<1x16xi32>
    %c16_i32 = arith.constant 16 : i32
    %6 = arith.muli %arg1, %c16_i32 : i32
    %7 = vector.broadcast %6 : i32 to vector<1x16xi32>
    %8 = arith.addi %5, %7 : vector<1x16xi32>
    %c8_i32 = arith.constant 8 : i32
    %9 = vector.broadcast %c8_i32 : i32 to vector<1x16xi32>
    %10 = arith.cmpi slt, %8, %9 : vector<1x16xi32>
    %c0_4 = arith.constant 0 : index
    %c0_5 = arith.constant 0 : index
    %11 = vector.load %arg18[%c0_4, %c0_5] : memref<16x32xbf16, #tpu.memory_space<vmem>>, vector<16x8xbf16>
    %12 = vector.extract_strided_slice %3 {offsets = [0, 0], sizes = [16, 8], strides = [1, 1]} : vector<16x32xbf16> to vector<16x8xbf16>
    %13 = vector.extract_strided_slice %4 {offsets = [0, 0], sizes = [16, 8], strides = [1, 1]} : vector<16x32xbf16> to vector<16x8xbf16>
    "tpu.trace_start"() <{level = 10 : i32, message = "qd,kd->qk"}> : () -> ()
    %cst = arith.constant dense<0.000000e+00> : vector<16x16xf32>
    %14 = tpu.matmul %11, %12, %cst {dimension_numbers = #tpu.dot_dimension_numbers<[1], [1], [0], [0], [0, 0, 1, 0], [], []>} : vector<16x8xbf16>, vector<16x8xbf16>, vector<16x16xf32> -> vector<16x16xf32>
    %cst_6 = arith.constant -1.000000e+30 : f32
    "tpu.trace_stop"() : () -> ()
    %15 = vector.shape_cast %10 : vector<1x16xi1> to vector<1x16xi1>
    %16 = vector.broadcast %15 : vector<1x16xi1> to vector<16x16xi1>
    %17 = vector.broadcast %cst_6 : f32 to vector<16x16xf32>
    %18 = arith.select %16, %14, %17 : vector<16x16xi1>, vector<16x16xf32>
    %c0_7 = arith.constant 0 : index
    %c0_8 = arith.constant 0 : index
    %c0_9 = arith.constant 0 : index
    %19 = vector.load %arg19[%c0_7, %c0_8, %c0_9] : memref<4x16x1xf32, #tpu.memory_space<vmem>>, vector<1x16x1xf32>
    %20 = vector.shape_cast %19 : vector<1x16x1xf32> to vector<16x1xf32>
    %cst_10 = arith.constant dense<0xFF800000> : vector<16xf32>
    %21 = vector.multi_reduction <maximumf>, %18, %cst_10 [1] : vector<16x16xf32> to vector<16xf32>
    %22 = vector.shape_cast %21 : vector<16xf32> to vector<16x1xf32>
    %23 = arith.maximumf %20, %22 : vector<16x1xf32>
    %24 = arith.subf %20, %23 : vector<16x1xf32>
    %25 = math.exp %24 : vector<16x1xf32>
    %26 = vector.broadcast %23 : vector<16x1xf32> to vector<16x16xf32>
    %27 = arith.subf %18, %26 : vector<16x16xf32>
    %28 = math.exp %27 : vector<16x16xf32>
    %c0_11 = arith.constant 0 : index
    %c0_12 = arith.constant 0 : index
    %c0_13 = arith.constant 0 : index
    %29 = vector.load %arg20[%c0_11, %c0_12, %c0_13] : memref<4x16x1xf32, #tpu.memory_space<vmem>>, vector<1x16x1xf32>
    %30 = vector.shape_cast %29 : vector<1x16x1xf32> to vector<16x1xf32>
    %31 = arith.mulf %25, %30 : vector<16x1xf32>
    %cst_14 = arith.constant dense<0.000000e+00> : vector<16xf32>
    %32 = vector.multi_reduction <add>, %28, %cst_14 [1] : vector<16x16xf32> to vector<16xf32>
    %33 = vector.shape_cast %32 : vector<16xf32> to vector<16x1xf32>
    %34 = arith.addf %31, %33 : vector<16x1xf32>
    %c0_15 = arith.constant 0 : index
    %c0_16 = arith.constant 0 : index
    %c0_17 = arith.constant 0 : index
    %35 = vector.load %arg20[%c0_15, %c0_16, %c0_17] : memref<4x16x1xf32, #tpu.memory_space<vmem>>, vector<1x16x1xf32>
    %36 = vector.shape_cast %35 : vector<1x16x1xf32> to vector<16x1xf32>
    %37 = vector.shape_cast %34 : vector<16x1xf32> to vector<1x16x1xf32>
    tpu.vector_store %arg20[%c0_15, %c0_16, %c0_17], %37 {strides = array<i32>} : memref<4x16x1xf32, #tpu.memory_space<vmem>>, vector<1x16x1xf32>,
    %38 = arith.truncf %28 : vector<16x16xf32> to vector<16x16xbf16>
    %cst_18 = arith.constant dense<0.000000e+00> : vector<16x8xf32>
    %39 = tpu.matmul %38, %13, %cst_18 {dimension_numbers = #tpu.dot_dimension_numbers<[1], [0], [0], [1], [0, 0, 1, 1], [], []>} : vector<16x16xbf16>, vector<16x8xbf16>, vector<16x8xf32> -> vector<16x8xf32>
    %c0_19 = arith.constant 0 : index
    %c0_20 = arith.constant 0 : index
    %40 = vector.load %arg21[%c0_19, %c0_20] : memref<16x32xf32, #tpu.memory_space<vmem>>, vector<16x8xf32>
    %41 = vector.broadcast %25 : vector<16x1xf32> to vector<16x8xf32>
    %42 = arith.mulf %41, %40 : vector<16x8xf32>
    %43 = arith.addf %42, %39 : vector<16x8xf32>
    %c0_21 = arith.constant 0 : index
    %c0_22 = arith.constant 0 : index
    %44 = vector.load %arg21[%c0_21, %c0_22] : memref<16x32xf32, #tpu.memory_space<vmem>>, vector<16x8xf32>
    tpu.vector_store %arg21[%c0_21, %c0_22], %43 {strides = array<i32>} : memref<16x32xf32, #tpu.memory_space<vmem>>, vector<16x8xf32>,
    %c0_23 = arith.constant 0 : index
    %c0_24 = arith.constant 0 : index
    %c0_25 = arith.constant 0 : index
    %45 = vector.load %arg19[%c0_23, %c0_24, %c0_25] : memref<4x16x1xf32, #tpu.memory_space<vmem>>, vector<1x16x1xf32>
    %46 = vector.shape_cast %45 : vector<1x16x1xf32> to vector<16x1xf32>
    %47 = vector.shape_cast %23 : vector<16x1xf32> to vector<1x16x1xf32>
    tpu.vector_store %arg19[%c0_23, %c0_24, %c0_25], %47 {strides = array<i32>} : memref<4x16x1xf32, #tpu.memory_space<vmem>>, vector<1x16x1xf32>,
    %c0_26 = arith.constant 0 : index
    %c8 = arith.constant 8 : index
    %48 = vector.load %arg18[%c0_26, %c8] : memref<16x32xbf16, #tpu.memory_space<vmem>>, vector<16x8xbf16>
    %49 = vector.extract_strided_slice %3 {offsets = [0, 8], sizes = [16, 8], strides = [1, 1]} : vector<16x32xbf16> to vector<16x8xbf16>
    %50 = vector.extract_strided_slice %4 {offsets = [0, 8], sizes = [16, 8], strides = [1, 1]} : vector<16x32xbf16> to vector<16x8xbf16>
    "tpu.trace_start"() <{level = 10 : i32, message = "qd,kd->qk"}> : () -> ()
    %cst_27 = arith.constant dense<0.000000e+00> : vector<16x16xf32>
    %51 = tpu.matmul %48, %49, %cst_27 {dimension_numbers = #tpu.dot_dimension_numbers<[1], [1], [0], [0], [0, 0, 1, 0], [], []>} : vector<16x8xbf16>, vector<16x8xbf16>, vector<16x16xf32> -> vector<16x16xf32>
    %cst_28 = arith.constant -1.000000e+30 : f32
    "tpu.trace_stop"() : () -> ()
    %52 = vector.shape_cast %10 : vector<1x16xi1> to vector<1x16xi1>
    %53 = vector.broadcast %52 : vector<1x16xi1> to vector<16x16xi1>
    %54 = vector.broadcast %cst_28 : f32 to vector<16x16xf32>
    %55 = arith.select %53, %51, %54 : vector<16x16xi1>, vector<16x16xf32>
    %c1 = arith.constant 1 : index
    %c0_29 = arith.constant 0 : index
    %c0_30 = arith.constant 0 : index
    %56 = vector.load %arg19[%c1, %c0_29, %c0_30] : memref<4x16x1xf32, #tpu.memory_space<vmem>>, vector<1x16x1xf32>
    %57 = vector.shape_cast %56 : vector<1x16x1xf32> to vector<16x1xf32>
    %cst_31 = arith.constant dense<0xFF800000> : vector<16xf32>
    %58 = vector.multi_reduction <maximumf>, %55, %cst_31 [1] : vector<16x16xf32> to vector<16xf32>
    %59 = vector.shape_cast %58 : vector<16xf32> to vector<16x1xf32>
    %60 = arith.maximumf %57, %59 : vector<16x1xf32>
    %61 = arith.subf %57, %60 : vector<16x1xf32>
    %62 = math.exp %61 : vector<16x1xf32>
    %63 = vector.broadcast %60 : vector<16x1xf32> to vector<16x16xf32>
    %64 = arith.subf %55, %63 : vector<16x16xf32>
    %65 = math.exp %64 : vector<16x16xf32>
    %c1_32 = arith.constant 1 : index
    %c0_33 = arith.constant 0 : index
    %c0_34 = arith.constant 0 : index
    %66 = vector.load %arg20[%c1_32, %c0_33, %c0_34] : memref<4x16x1xf32, #tpu.memory_space<vmem>>, vector<1x16x1xf32>
    %67 = vector.shape_cast %66 : vector<1x16x1xf32> to vector<16x1xf32>
    %68 = arith.mulf %62, %67 : vector<16x1xf32>
    %cst_35 = arith.constant dense<0.000000e+00> : vector<16xf32>
    %69 = vector.multi_reduction <add>, %65, %cst_35 [1] : vector<16x16xf32> to vector<16xf32>
    %70 = vector.shape_cast %69 : vector<16xf32> to vector<16x1xf32>
    %71 = arith.addf %68, %70 : vector<16x1xf32>
    %c1_36 = arith.constant 1 : index
    %c0_37 = arith.constant 0 : index
    %c0_38 = arith.constant 0 : index
    %72 = vector.load %arg20[%c1_36, %c0_37, %c0_38] : memref<4x16x1xf32, #tpu.memory_space<vmem>>, vector<1x16x1xf32>
    %73 = vector.shape_cast %72 : vector<1x16x1xf32> to vector<16x1xf32>
    %74 = vector.shape_cast %71 : vector<16x1xf32> to vector<1x16x1xf32>
    tpu.vector_store %arg20[%c1_36, %c0_37, %c0_38], %74 {strides = array<i32>} : memref<4x16x1xf32, #tpu.memory_space<vmem>>, vector<1x16x1xf32>,
    %75 = arith.truncf %65 : vector<16x16xf32> to vector<16x16xbf16>
    %cst_39 = arith.constant dense<0.000000e+00> : vector<16x8xf32>
    %76 = tpu.matmul %75, %50, %cst_39 {dimension_numbers = #tpu.dot_dimension_numbers<[1], [0], [0], [1], [0, 0, 1, 1], [], []>} : vector<16x16xbf16>, vector<16x8xbf16>, vector<16x8xf32> -> vector<16x8xf32>
    %c0_40 = arith.constant 0 : index
    %c8_41 = arith.constant 8 : index
    %77 = vector.load %arg21[%c0_40, %c8_41] : memref<16x32xf32, #tpu.memory_space<vmem>>, vector<16x8xf32>
    %78 = vector.broadcast %62 : vector<16x1xf32> to vector<16x8xf32>
    %79 = arith.mulf %78, %77 : vector<16x8xf32>
    %80 = arith.addf %79, %76 : vector<16x8xf32>
    %c0_42 = arith.constant 0 : index
    %c8_43 = arith.constant 8 : index
    %81 = vector.load %arg21[%c0_42, %c8_43] : memref<16x32xf32, #tpu.memory_space<vmem>>, vector<16x8xf32>
    tpu.vector_store %arg21[%c0_42, %c8_43], %80 {strides = array<i32>} : memref<16x32xf32, #tpu.memory_space<vmem>>, vector<16x8xf32>,
    %c1_44 = arith.constant 1 : index
    %c0_45 = arith.constant 0 : index
    %c0_46 = arith.constant 0 : index
    %82 = vector.load %arg19[%c1_44, %c0_45, %c0_46] : memref<4x16x1xf32, #tpu.memory_space<vmem>>, vector<1x16x1xf32>
    %83 = vector.shape_cast %82 : vector<1x16x1xf32> to vector<16x1xf32>
    %84 = vector.shape_cast %60 : vector<16x1xf32> to vector<1x16x1xf32>
    tpu.vector_store %arg19[%c1_44, %c0_45, %c0_46], %84 {strides = array<i32>} : memref<4x16x1xf32, #tpu.memory_space<vmem>>, vector<1x16x1xf32>,
    %c0_47 = arith.constant 0 : index
    %c16 = arith.constant 16 : index
    %85 = vector.load %arg18[%c0_47, %c16] : memref<16x32xbf16, #tpu.memory_space<vmem>>, vector<16x8xbf16>
    %86 = vector.extract_strided_slice %3 {offsets = [0, 16], sizes = [16, 8], strides = [1, 1]} : vector<16x32xbf16> to vector<16x8xbf16>
    %87 = vector.extract_strided_slice %4 {offsets = [0, 16], sizes = [16, 8], strides = [1, 1]} : vector<16x32xbf16> to vector<16x8xbf16>
    "tpu.trace_start"() <{level = 10 : i32, message = "qd,kd->qk"}> : () -> ()
    %cst_48 = arith.constant dense<0.000000e+00> : vector<16x16xf32>
    %88 = tpu.matmul %85, %86, %cst_48 {dimension_numbers = #tpu.dot_dimension_numbers<[1], [1], [0], [0], [0, 0, 1, 0], [], []>} : vector<16x8xbf16>, vector<16x8xbf16>, vector<16x16xf32> -> vector<16x16xf32>
    %cst_49 = arith.constant -1.000000e+30 : f32
    "tpu.trace_stop"() : () -> ()
    %89 = vector.shape_cast %10 : vector<1x16xi1> to vector<1x16xi1>
    %90 = vector.broadcast %89 : vector<1x16xi1> to vector<16x16xi1>
    %91 = vector.broadcast %cst_49 : f32 to vector<16x16xf32>
    %92 = arith.select %90, %88, %91 : vector<16x16xi1>, vector<16x16xf32>
    %c2 = arith.constant 2 : index
    %c0_50 = arith.constant 0 : index
    %c0_51 = arith.constant 0 : index
    %93 = vector.load %arg19[%c2, %c0_50, %c0_51] : memref<4x16x1xf32, #tpu.memory_space<vmem>>, vector<1x16x1xf32>
    %94 = vector.shape_cast %93 : vector<1x16x1xf32> to vector<16x1xf32>
    %cst_52 = arith.constant dense<0xFF800000> : vector<16xf32>
    %95 = vector.multi_reduction <maximumf>, %92, %cst_52 [1] : vector<16x16xf32> to vector<16xf32>
    %96 = vector.shape_cast %95 : vector<16xf32> to vector<16x1xf32>
    %97 = arith.maximumf %94, %96 : vector<16x1xf32>
    %98 = arith.subf %94, %97 : vector<16x1xf32>
    %99 = math.exp %98 : vector<16x1xf32>
    %100 = vector.broadcast %97 : vector<16x1xf32> to vector<16x16xf32>
    %101 = arith.subf %92, %100 : vector<16x16xf32>
    %102 = math.exp %101 : vector<16x16xf32>
    %c2_53 = arith.constant 2 : index
    %c0_54 = arith.constant 0 : index
    %c0_55 = arith.constant 0 : index
    %103 = vector.load %arg20[%c2_53, %c0_54, %c0_55] : memref<4x16x1xf32, #tpu.memory_space<vmem>>, vector<1x16x1xf32>
    %104 = vector.shape_cast %103 : vector<1x16x1xf32> to vector<16x1xf32>
    %105 = arith.mulf %99, %104 : vector<16x1xf32>
    %cst_56 = arith.constant dense<0.000000e+00> : vector<16xf32>
    %106 = vector.multi_reduction <add>, %102, %cst_56 [1] : vector<16x16xf32> to vector<16xf32>
    %107 = vector.shape_cast %106 : vector<16xf32> to vector<16x1xf32>
    %108 = arith.addf %105, %107 : vector<16x1xf32>
    %c2_57 = arith.constant 2 : index
    %c0_58 = arith.constant 0 : index
    %c0_59 = arith.constant 0 : index
    %109 = vector.load %arg20[%c2_57, %c0_58, %c0_59] : memref<4x16x1xf32, #tpu.memory_space<vmem>>, vector<1x16x1xf32>
    %110 = vector.shape_cast %109 : vector<1x16x1xf32> to vector<16x1xf32>
    %111 = vector.shape_cast %108 : vector<16x1xf32> to vector<1x16x1xf32>
    tpu.vector_store %arg20[%c2_57, %c0_58, %c0_59], %111 {strides = array<i32>} : memref<4x16x1xf32, #tpu.memory_space<vmem>>, vector<1x16x1xf32>,
    %112 = arith.truncf %102 : vector<16x16xf32> to vector<16x16xbf16>
    %cst_60 = arith.constant dense<0.000000e+00> : vector<16x8xf32>
    %113 = tpu.matmul %112, %87, %cst_60 {dimension_numbers = #tpu.dot_dimension_numbers<[1], [0], [0], [1], [0, 0, 1, 1], [], []>} : vector<16x16xbf16>, vector<16x8xbf16>, vector<16x8xf32> -> vector<16x8xf32>
    %c0_61 = arith.constant 0 : index
    %c16_62 = arith.constant 16 : index
    %114 = vector.load %arg21[%c0_61, %c16_62] : memref<16x32xf32, #tpu.memory_space<vmem>>, vector<16x8xf32>
    %115 = vector.broadcast %99 : vector<16x1xf32> to vector<16x8xf32>
    %116 = arith.mulf %115, %114 : vector<16x8xf32>
    %117 = arith.addf %116, %113 : vector<16x8xf32>
    %c0_63 = arith.constant 0 : index
    %c16_64 = arith.constant 16 : index
    %118 = vector.load %arg21[%c0_63, %c16_64] : memref<16x32xf32, #tpu.memory_space<vmem>>, vector<16x8xf32>
    tpu.vector_store %arg21[%c0_63, %c16_64], %117 {strides = array<i32>} : memref<16x32xf32, #tpu.memory_space<vmem>>, vector<16x8xf32>,
    %c2_65 = arith.constant 2 : index
    %c0_66 = arith.constant 0 : index
    %c0_67 = arith.constant 0 : index
    %119 = vector.load %arg19[%c2_65, %c0_66, %c0_67] : memref<4x16x1xf32, #tpu.memory_space<vmem>>, vector<1x16x1xf32>
    %120 = vector.shape_cast %119 : vector<1x16x1xf32> to vector<16x1xf32>
    %121 = vector.shape_cast %97 : vector<16x1xf32> to vector<1x16x1xf32>
    tpu.vector_store %arg19[%c2_65, %c0_66, %c0_67], %121 {strides = array<i32>} : memref<4x16x1xf32, #tpu.memory_space<vmem>>, vector<1x16x1xf32>,
    %c0_68 = arith.constant 0 : index
    %c24 = arith.constant 24 : index
    %122 = vector.load %arg18[%c0_68, %c24] : memref<16x32xbf16, #tpu.memory_space<vmem>>, vector<16x8xbf16>
    %123 = vector.extract_strided_slice %3 {offsets = [0, 24], sizes = [16, 8], strides = [1, 1]} : vector<16x32xbf16> to vector<16x8xbf16>
    %124 = vector.extract_strided_slice %4 {offsets = [0, 24], sizes = [16, 8], strides = [1, 1]} : vector<16x32xbf16> to vector<16x8xbf16>
    "tpu.trace_start"() <{level = 10 : i32, message = "qd,kd->qk"}> : () -> ()
    %cst_69 = arith.constant dense<0.000000e+00> : vector<16x16xf32>
    %125 = tpu.matmul %122, %123, %cst_69 {dimension_numbers = #tpu.dot_dimension_numbers<[1], [1], [0], [0], [0, 0, 1, 0], [], []>} : vector<16x8xbf16>, vector<16x8xbf16>, vector<16x16xf32> -> vector<16x16xf32>
    %cst_70 = arith.constant -1.000000e+30 : f32
    "tpu.trace_stop"() : () -> ()
    %126 = vector.shape_cast %10 : vector<1x16xi1> to vector<1x16xi1>
    %127 = vector.broadcast %126 : vector<1x16xi1> to vector<16x16xi1>
    %128 = vector.broadcast %cst_70 : f32 to vector<16x16xf32>
    %129 = arith.select %127, %125, %128 : vector<16x16xi1>, vector<16x16xf32>
    %c3 = arith.constant 3 : index
    %c0_71 = arith.constant 0 : index
    %c0_72 = arith.constant 0 : index
    %130 = vector.load %arg19[%c3, %c0_71, %c0_72] : memref<4x16x1xf32, #tpu.memory_space<vmem>>, vector<1x16x1xf32>
    %131 = vector.shape_cast %130 : vector<1x16x1xf32> to vector<16x1xf32>
    %cst_73 = arith.constant dense<0xFF800000> : vector<16xf32>
    %132 = vector.multi_reduction <maximumf>, %129, %cst_73 [1] : vector<16x16xf32> to vector<16xf32>
    %133 = vector.shape_cast %132 : vector<16xf32> to vector<16x1xf32>
    %134 = arith.maximumf %131, %133 : vector<16x1xf32>
    %135 = arith.subf %131, %134 : vector<16x1xf32>
    %136 = math.exp %135 : vector<16x1xf32>
    %137 = vector.broadcast %134 : vector<16x1xf32> to vector<16x16xf32>
    %138 = arith.subf %129, %137 : vector<16x16xf32>
    %139 = math.exp %138 : vector<16x16xf32>
    %c3_74 = arith.constant 3 : index
    %c0_75 = arith.constant 0 : index
    %c0_76 = arith.constant 0 : index
    %140 = vector.load %arg20[%c3_74, %c0_75, %c0_76] : memref<4x16x1xf32, #tpu.memory_space<vmem>>, vector<1x16x1xf32>
    %141 = vector.shape_cast %140 : vector<1x16x1xf32> to vector<16x1xf32>
    %142 = arith.mulf %136, %141 : vector<16x1xf32>
    %cst_77 = arith.constant dense<0.000000e+00> : vector<16xf32>
    %143 = vector.multi_reduction <add>, %139, %cst_77 [1] : vector<16x16xf32> to vector<16xf32>
    %144 = vector.shape_cast %143 : vector<16xf32> to vector<16x1xf32>
    %145 = arith.addf %142, %144 : vector<16x1xf32>
    %c3_78 = arith.constant 3 : index
    %c0_79 = arith.constant 0 : index
    %c0_80 = arith.constant 0 : index
    %146 = vector.load %arg20[%c3_78, %c0_79, %c0_80] : memref<4x16x1xf32, #tpu.memory_space<vmem>>, vector<1x16x1xf32>
    %147 = vector.shape_cast %146 : vector<1x16x1xf32> to vector<16x1xf32>
    %148 = vector.shape_cast %145 : vector<16x1xf32> to vector<1x16x1xf32>
    tpu.vector_store %arg20[%c3_78, %c0_79, %c0_80], %148 {strides = array<i32>} : memref<4x16x1xf32, #tpu.memory_space<vmem>>, vector<1x16x1xf32>,
    %149 = arith.truncf %139 : vector<16x16xf32> to vector<16x16xbf16>
    %cst_81 = arith.constant dense<0.000000e+00> : vector<16x8xf32>
    %150 = tpu.matmul %149, %124, %cst_81 {dimension_numbers = #tpu.dot_dimension_numbers<[1], [0], [0], [1], [0, 0, 1, 1], [], []>} : vector<16x16xbf16>, vector<16x8xbf16>, vector<16x8xf32> -> vector<16x8xf32>
    %c0_82 = arith.constant 0 : index
    %c24_83 = arith.constant 24 : index
    %151 = vector.load %arg21[%c0_82, %c24_83] : memref<16x32xf32, #tpu.memory_space<vmem>>, vector<16x8xf32>
    %152 = vector.broadcast %136 : vector<16x1xf32> to vector<16x8xf32>
    %153 = arith.mulf %152, %151 : vector<16x8xf32>
    %154 = arith.addf %153, %150 : vector<16x8xf32>
    %c0_84 = arith.constant 0 : index
    %c24_85 = arith.constant 24 : index
    %155 = vector.load %arg21[%c0_84, %c24_85] : memref<16x32xf32, #tpu.memory_space<vmem>>, vector<16x8xf32>
    tpu.vector_store %arg21[%c0_84, %c24_85], %154 {strides = array<i32>} : memref<16x32xf32, #tpu.memory_space<vmem>>, vector<16x8xf32>,
    %c3_86 = arith.constant 3 : index
    %c0_87 = arith.constant 0 : index
    %c0_88 = arith.constant 0 : index
    %156 = vector.load %arg19[%c3_86, %c0_87, %c0_88] : memref<4x16x1xf32, #tpu.memory_space<vmem>>, vector<1x16x1xf32>
    %157 = vector.shape_cast %156 : vector<1x16x1xf32> to vector<16x1xf32>
    %158 = vector.shape_cast %134 : vector<16x1xf32> to vector<1x16x1xf32>
    tpu.vector_store %arg19[%c3_86, %c0_87, %c0_88], %158 {strides = array<i32>} : memref<4x16x1xf32, #tpu.memory_space<vmem>>, vector<1x16x1xf32>,
    %c0_i32_89 = arith.constant 0 : i32
    %159 = arith.cmpi eq, %arg1, %c0_i32_89 : i32
    %160 = arith.extui %159 : i1 to i32
    %c0_i32_90 = arith.constant 0 : i32
    %161 = arith.cmpi ne, %160, %c0_i32_90 : i32
    scf.if %161 {
      %c0_91 = arith.constant 0 : index
      %c0_92 = arith.constant 0 : index
      %c0_93 = arith.constant 0 : index
      %162 = vector.load %arg20[%c0_91, %c0_92, %c0_93] : memref<4x16x1xf32, #tpu.memory_space<vmem>>, vector<1x16x1xf32>
      %163 = vector.shape_cast %162 : vector<1x16x1xf32> to vector<16x1xf32>
      %164 = tpu.reciprocal %163 {approx = true} : vector<16x1xf32> -> vector<16x1xf32>
      %c0_94 = arith.constant 0 : index
      %c0_95 = arith.constant 0 : index
      %165 = vector.load %arg21[%c0_94, %c0_95] : memref<16x32xf32, #tpu.memory_space<vmem>>, vector<16x8xf32>
      %166 = vector.broadcast %164 : vector<16x1xf32> to vector<16x8xf32>
      %167 = arith.mulf %165, %166 : vector<16x8xf32>
      %168 = arith.truncf %167 : vector<16x8xf32> to vector<16x8xbf16>
      %c1_96 = arith.constant 1 : index
      %c0_97 = arith.constant 0 : index
      %c0_98 = arith.constant 0 : index
      %169 = vector.load %arg20[%c1_96, %c0_97, %c0_98] : memref<4x16x1xf32, #tpu.memory_space<vmem>>, vector<1x16x1xf32>
      %170 = vector.shape_cast %169 : vector<1x16x1xf32> to vector<16x1xf32>
      %171 = tpu.reciprocal %170 {approx = true} : vector<16x1xf32> -> vector<16x1xf32>
      %c0_99 = arith.constant 0 : index
      %c8_100 = arith.constant 8 : index
      %172 = vector.load %arg21[%c0_99, %c8_100] : memref<16x32xf32, #tpu.memory_space<vmem>>, vector<16x8xf32>
      %173 = vector.broadcast %171 : vector<16x1xf32> to vector<16x8xf32>
      %174 = arith.mulf %172, %173 : vector<16x8xf32>
      %175 = arith.truncf %174 : vector<16x8xf32> to vector<16x8xbf16>
      %c2_101 = arith.constant 2 : index
      %c0_102 = arith.constant 0 : index
      %c0_103 = arith.constant 0 : index
      %176 = vector.load %arg20[%c2_101, %c0_102, %c0_103] : memref<4x16x1xf32, #tpu.memory_space<vmem>>, vector<1x16x1xf32>
      %177 = vector.shape_cast %176 : vector<1x16x1xf32> to vector<16x1xf32>
      %178 = tpu.reciprocal %177 {approx = true} : vector<16x1xf32> -> vector<16x1xf32>
      %c0_104 = arith.constant 0 : index
      %c16_105 = arith.constant 16 : index
      %179 = vector.load %arg21[%c0_104, %c16_105] : memref<16x32xf32, #tpu.memory_space<vmem>>, vector<16x8xf32>
      %180 = vector.broadcast %178 : vector<16x1xf32> to vector<16x8xf32>
      %181 = arith.mulf %179, %180 : vector<16x8xf32>
      %182 = arith.truncf %181 : vector<16x8xf32> to vector<16x8xbf16>
      %c3_106 = arith.constant 3 : index
      %c0_107 = arith.constant 0 : index
      %c0_108 = arith.constant 0 : index
      %183 = vector.load %arg20[%c3_106, %c0_107, %c0_108] : memref<4x16x1xf32, #tpu.memory_space<vmem>>, vector<1x16x1xf32>
      %184 = vector.shape_cast %183 : vector<1x16x1xf32> to vector<16x1xf32>
      %185 = tpu.reciprocal %184 {approx = true} : vector<16x1xf32> -> vector<16x1xf32>
      %c0_109 = arith.constant 0 : index
      %c24_110 = arith.constant 24 : index
      %186 = vector.load %arg21[%c0_109, %c24_110] : memref<16x32xf32, #tpu.memory_space<vmem>>, vector<16x8xf32>
      %187 = vector.broadcast %185 : vector<16x1xf32> to vector<16x8xf32>
      %188 = arith.mulf %186, %187 : vector<16x8xf32>
      %189 = arith.truncf %188 : vector<16x8xf32> to vector<16x8xbf16>
      %190 = tpu.concatenate %168, %175, %182, %189 in 1 : vector<16x8xbf16>, vector<16x8xbf16>, vector<16x8xbf16>, vector<16x8xbf16> -> vector<16x32xbf16>
      %c0_111 = arith.constant 0 : index
      %c0_112 = arith.constant 0 : index
      %191 = vector.load %arg7[%c0_111, %c0_112] : memref<32x32xbf16, #tpu.memory_space<vmem>>, vector<32x32xbf16>
      %cst_113 = arith.constant dense<0.000000e+00> : vector<16x32xf32>
      %192 = tpu.matmul %190, %191, %cst_113 {dimension_numbers = #tpu.dot_dimension_numbers<[1], [0], [0], [1], [0, 0, 1, 1], [], []>} : vector<16x32xbf16>, vector<32x32xbf16>, vector<16x32xf32> -> vector<16x32xf32>
      %c0_114 = arith.constant 0 : index
      %c0_115 = arith.constant 0 : index
      %193 = vector.load %arg8[%c0_114, %c0_115] : memref<1x32xf32, #tpu.memory_space<vmem>>, vector<1x32xf32>
      %194 = vector.broadcast %193 : vector<1x32xf32> to vector<16x32xf32>
      %195 = arith.addf %192, %194 : vector<16x32xf32>
      %c0_116 = arith.constant 0 : index
      %c0_117 = arith.constant 0 : index
      %196 = vector.load %arg2[%c0_116, %c0_117] : memref<16x32xf32, #tpu.memory_space<vmem>>, vector<16x32xf32>
      %197 = arith.addf %196, %195 : vector<16x32xf32>
      %c0_118 = arith.constant 0 : index
      %c0_119 = arith.constant 0 : index
      %198 = vector.load %arg9[%c0_118, %c0_119] : memref<1x32xf32, #tpu.memory_space<vmem>>, vector<1x32xf32>
      %c0_120 = arith.constant 0 : index
      %c0_121 = arith.constant 0 : index
      %199 = vector.load %arg10[%c0_120, %c0_121] : memref<1x32xf32, #tpu.memory_space<vmem>>, vector<1x32xf32>
      %cst_122 = arith.constant dense<0.000000e+00> : vector<16xf32>
      %200 = vector.multi_reduction <add>, %197, %cst_122 [1] : vector<16x32xf32> to vector<16xf32>
      %201 = vector.shape_cast %200 : vector<16xf32> to vector<16x1xf32>
      %cst_123 = arith.constant 3.200000e+01 : f32
      %202 = vector.broadcast %cst_123 : f32 to vector<16x1xf32>
      %203 = arith.divf %201, %202 : vector<16x1xf32>
      %204 = vector.broadcast %203 : vector<16x1xf32> to vector<16x32xf32>
      %205 = arith.subf %197, %204 : vector<16x32xf32>
      %206 = arith.mulf %205, %205 : vector<16x32xf32>
      %cst_124 = arith.constant dense<0.000000e+00> : vector<16xf32>
      %207 = vector.multi_reduction <add>, %206, %cst_124 [1] : vector<16x32xf32> to vector<16xf32>
      %208 = vector.shape_cast %207 : vector<16xf32> to vector<16x1xf32>
      %cst_125 = arith.constant 3.200000e+01 : f32
      %209 = vector.broadcast %cst_125 : f32 to vector<16x1xf32>
      %210 = arith.divf %208, %209 : vector<16x1xf32>
      %cst_126 = arith.constant 9.99999974E-6 : f32
      %211 = vector.broadcast %cst_126 : f32 to vector<16x1xf32>
      %212 = arith.addf %210, %211 : vector<16x1xf32>
      %213 = math.rsqrt %212 : vector<16x1xf32>
      %214 = vector.broadcast %213 : vector<16x1xf32> to vector<16x32xf32>
      %215 = arith.mulf %205, %214 : vector<16x32xf32>
      %216 = vector.broadcast %198 : vector<1x32xf32> to vector<16x32xf32>
      %217 = arith.mulf %215, %216 : vector<16x32xf32>
      %218 = vector.broadcast %199 : vector<1x32xf32> to vector<16x32xf32>
      %219 = arith.addf %217, %218 : vector<16x32xf32>
      %220 = arith.truncf %219 : vector<16x32xf32> to vector<16x32xbf16>
      %c0_127 = arith.constant 0 : index
      %c0_128 = arith.constant 0 : index
      %221 = vector.load %arg11[%c0_127, %c0_128] : memref<32x64xbf16, #tpu.memory_space<vmem>>, vector<32x64xbf16>
      %cst_129 = arith.constant dense<0.000000e+00> : vector<16x64xf32>
      %222 = tpu.matmul %220, %221, %cst_129 {dimension_numbers = #tpu.dot_dimension_numbers<[1], [0], [0], [1], [0, 0, 1, 1], [], []>} : vector<16x32xbf16>, vector<32x64xbf16>, vector<16x64xf32> -> vector<16x64xf32>
      %c0_130 = arith.constant 0 : index
      %c0_131 = arith.constant 0 : index
      %223 = vector.load %arg12[%c0_130, %c0_131] : memref<1x64xf32, #tpu.memory_space<vmem>>, vector<1x64xf32>
      %224 = vector.broadcast %223 : vector<1x64xf32> to vector<16x64xf32>
      %225 = arith.addf %222, %224 : vector<16x64xf32>
      %cst_132 = arith.constant 0.000000e+00 : f32
      %226 = vector.broadcast %cst_132 : f32 to vector<16x64xf32>
      %227 = arith.maximumf %225, %226 : vector<16x64xf32>
      %228 = arith.truncf %227 : vector<16x64xf32> to vector<16x64xbf16>
      %c0_133 = arith.constant 0 : index
      %c0_134 = arith.constant 0 : index
      %229 = vector.load %arg13[%c0_133, %c0_134] : memref<64x32xbf16, #tpu.memory_space<vmem>>, vector<64x32xbf16>
      %cst_135 = arith.constant dense<0.000000e+00> : vector<16x32xf32>
      %230 = tpu.matmul %228, %229, %cst_135 {dimension_numbers = #tpu.dot_dimension_numbers<[1], [0], [0], [1], [0, 0, 1, 1], [], []>} : vector<16x64xbf16>, vector<64x32xbf16>, vector<16x32xf32> -> vector<16x32xf32>
      %c0_136 = arith.constant 0 : index
      %c0_137 = arith.constant 0 : index
      %231 = vector.load %arg14[%c0_136, %c0_137] : memref<1x32xf32, #tpu.memory_space<vmem>>, vector<1x32xf32>
      %232 = vector.broadcast %231 : vector<1x32xf32> to vector<16x32xf32>
      %233 = arith.addf %230, %232 : vector<16x32xf32>
      %234 = arith.addf %219, %233 : vector<16x32xf32>
      %c0_138 = arith.constant 0 : index
      %c0_139 = arith.constant 0 : index
      %235 = vector.load %arg15[%c0_138, %c0_139] : memref<1x32xf32, #tpu.memory_space<vmem>>, vector<1x32xf32>
      %c0_140 = arith.constant 0 : index
      %c0_141 = arith.constant 0 : index
      %236 = vector.load %arg16[%c0_140, %c0_141] : memref<1x32xf32, #tpu.memory_space<vmem>>, vector<1x32xf32>
      %cst_142 = arith.constant dense<0.000000e+00> : vector<16xf32>
      %237 = vector.multi_reduction <add>, %234, %cst_142 [1] : vector<16x32xf32> to vector<16xf32>
      %238 = vector.shape_cast %237 : vector<16xf32> to vector<16x1xf32>
      %cst_143 = arith.constant 3.200000e+01 : f32
      %239 = vector.broadcast %cst_143 : f32 to vector<16x1xf32>
      %240 = arith.divf %238, %239 : vector<16x1xf32>
      %241 = vector.broadcast %240 : vector<16x1xf32> to vector<16x32xf32>
      %242 = arith.subf %234, %241 : vector<16x32xf32>
      %243 = arith.mulf %242, %242 : vector<16x32xf32>
      %cst_144 = arith.constant dense<0.000000e+00> : vector<16xf32>
      %244 = vector.multi_reduction <add>, %243, %cst_144 [1] : vector<16x32xf32> to vector<16xf32>
      %245 = vector.shape_cast %244 : vector<16xf32> to vector<16x1xf32>
      %cst_145 = arith.constant 3.200000e+01 : f32
      %246 = vector.broadcast %cst_145 : f32 to vector<16x1xf32>
      %247 = arith.divf %245, %246 : vector<16x1xf32>
      %cst_146 = arith.constant 9.99999974E-6 : f32
      %248 = vector.broadcast %cst_146 : f32 to vector<16x1xf32>
      %249 = arith.addf %247, %248 : vector<16x1xf32>
      %250 = math.rsqrt %249 : vector<16x1xf32>
      %251 = vector.broadcast %250 : vector<16x1xf32> to vector<16x32xf32>
      %252 = arith.mulf %242, %251 : vector<16x32xf32>
      %253 = vector.broadcast %235 : vector<1x32xf32> to vector<16x32xf32>
      %254 = arith.mulf %252, %253 : vector<16x32xf32>
      %255 = vector.broadcast %236 : vector<1x32xf32> to vector<16x32xf32>
      %256 = arith.addf %254, %255 : vector<16x32xf32>
      %c0_147 = arith.constant 0 : index
      %c0_148 = arith.constant 0 : index
      %257 = vector.load %arg17[%c0_147, %c0_148] : memref<16x32xf32, #tpu.memory_space<vmem>>, vector<16x32xf32>
      tpu.vector_store %arg17[%c0_147, %c0_148], %256 {strides = array<i32>} : memref<16x32xf32, #tpu.memory_space<vmem>>, vector<16x32xf32>,
    } else {
    }
    return
  }
  func.func @transform_0(%arg0: i32, %arg1: i32) -> (i32, i32) {
    %c0_i32 = arith.constant 0 : i32
    %c0_i32_0 = arith.constant 0 : i32
    return %arg0, %c0_i32 : i32, i32
  }
  func.func @transform_1(%arg0: i32, %arg1: i32) -> (i32, i32) {
    %c0_i32 = arith.constant 0 : i32
    %c0_i32_0 = arith.constant 0 : i32
    return %arg1, %c0_i32 : i32, i32
  }
  func.func @transform_2(%arg0: i32, %arg1: i32) -> (i32, i32) {
    %c0_i32 = arith.constant 0 : i32
    %c0_i32_0 = arith.constant 0 : i32
    return %arg1, %c0_i32 : i32, i32
  }
  func.func @transform_3(%arg0: i32, %arg1: i32) -> (i32, i32) {
    %c0_i32 = arith.constant 0 : i32
    %c0_i32_0 = arith.constant 0 : i32
    %c0_i32_1 = arith.constant 0 : i32
    return %c0_i32, %c0_i32_0 : i32, i32
  }
  func.func @transform_4(%arg0: i32, %arg1: i32) -> (i32, i32) {
    %c0_i32 = arith.constant 0 : i32
    %c0_i32_0 = arith.constant 0 : i32
    %c0_i32_1 = arith.constant 0 : i32
    return %c0_i32, %c0_i32_0 : i32, i32
  }
  func.func @transform_5(%arg0: i32, %arg1: i32) -> (i32, i32) {
    %c0_i32 = arith.constant 0 : i32
    %c0_i32_0 = arith.constant 0 : i32
    %c0_i32_1 = arith.constant 0 : i32
    return %c0_i32, %c0_i32_0 : i32, i32
  }
  func.func @transform_6(%arg0: i32, %arg1: i32) -> (i32, i32) {
    %c0_i32 = arith.constant 0 : i32
    %c0_i32_0 = arith.constant 0 : i32
    %c0_i32_1 = arith.constant 0 : i32
    return %c0_i32, %c0_i32_0 : i32, i32
  }
  func.func @transform_7(%arg0: i32, %arg1: i32) -> (i32, i32) {
    %c0_i32 = arith.constant 0 : i32
    %c0_i32_0 = arith.constant 0 : i32
    %c0_i32_1 = arith.constant 0 : i32
    return %c0_i32, %c0_i32_0 : i32, i32
  }
  func.func @transform_8(%arg0: i32, %arg1: i32) -> (i32, i32) {
    %c0_i32 = arith.constant 0 : i32
    %c0_i32_0 = arith.constant 0 : i32
    %c0_i32_1 = arith.constant 0 : i32
    return %c0_i32, %c0_i32_0 : i32, i32
  }
  func.func @transform_9(%arg0: i32, %arg1: i32) -> (i32, i32) {
    %c0_i32 = arith.constant 0 : i32
    %c0_i32_0 = arith.constant 0 : i32
    %c0_i32_1 = arith.constant 0 : i32
    return %c0_i32, %c0_i32_0 : i32, i32
  }
  func.func @transform_10(%arg0: i32, %arg1: i32) -> (i32, i32) {
    %c0_i32 = arith.constant 0 : i32
    %c0_i32_0 = arith.constant 0 : i32
    %c0_i32_1 = arith.constant 0 : i32
    return %c0_i32, %c0_i32_0 : i32, i32
  }
  func.func @transform_11(%arg0: i32, %arg1: i32) -> (i32, i32) {
    %c0_i32 = arith.constant 0 : i32
    %c0_i32_0 = arith.constant 0 : i32
    %c0_i32_1 = arith.constant 0 : i32
    return %c0_i32, %c0_i32_0 : i32, i32
  }
  func.func @transform_12(%arg0: i32, %arg1: i32) -> (i32, i32) {
    %c0_i32 = arith.constant 0 : i32
    %c0_i32_0 = arith.constant 0 : i32
    %c0_i32_1 = arith.constant 0 : i32
    return %c0_i32, %c0_i32_0 : i32, i32
  }
  func.func @transform_13(%arg0: i32, %arg1: i32) -> (i32, i32) {
    %c0_i32 = arith.constant 0 : i32
    %c0_i32_0 = arith.constant 0 : i32
    %c0_i32_1 = arith.constant 0 : i32
    return %c0_i32, %c0_i32_0 : i32, i32
  }
  func.func @transform_14(%arg0: i32, %arg1: i32) -> (i32, i32) {
    %c0_i32 = arith.constant 0 : i32
    %c0_i32_0 = arith.constant 0 : i32
    %c0_i32_1 = arith.constant 0 : i32
    return %c0_i32, %c0_i32_0 : i32, i32
  }
  func.func @transform_15(%arg0: i32, %arg1: i32) -> (i32, i32) {
    %c0_i32 = arith.constant 0 : i32
    %c0_i32_0 = arith.constant 0 : i32
    return %arg0, %c0_i32 : i32, i32
  }
}

</mosaic_0001>

<llo_original>
// kernel: multi_attention_forward.4
$region0: #{multi_attention_forward.4}
  #allocation0 [shape = 'u32[]', space=smem, size = 0x4, offset = 0x4, fixed_abs, tag = 'smem constant byte address 0x4 - core index']
  #allocation1 [shape = 'u32[72,128]{1,0:T(1,128)}', space=vmem, size = 0x9000, scoped, tag = 'internal scratch']
  %s0 = inlined_call_operand.vmem [shape: f32[16,32], index: 0, kind: input, shape index: {}]
  %s1 = inlined_call_operand.vmem [shape: bf16[32,64], index: 1, kind: input, shape index: {}]
  %s2 = inlined_call_operand.vmem [shape: f32[1,64], index: 2, kind: input, shape index: {}]
  %s3 = inlined_call_operand.vmem [shape: bf16[16,32], index: 3, kind: output, shape index: {0}]
  %s4 = inlined_call_operand.vmem [shape: bf16[16,32], index: 4, kind: output, shape index: {1}]
  %5 = xla_tuple %s3, %s4
  %s6 = sld [smem:[#allocation0]]
  $region30: #{multi_attention_forward.4} parent=0
    _
  %s8 = ssub.s32 1, %s6
  %s9 = scalar_select 0, %s8, %s6
  // Predicated region
  $region2: #{multi_attention_forward.4} parent=0 // pred_check
    _
  $region3: #{multi_attention_forward.4} parent=0 // pred_check_branch
    %11 = sbr.rel (0) target = $region5
  $region4: #{multi_attention_forward.4} parent=0 // pred_region
    _
  $region5: #{multi_attention_forward.4} parent=0 // pred_fallthru
    _
  // Predicated region
  $region6: #{multi_attention_forward.4} parent=0 // pred_check
    _
  $region7: #{multi_attention_forward.4} parent=0 // pred_check_branch
    %13 = sbr.rel (0) target = $region9
  $region8: #{multi_attention_forward.4} parent=0 // pred_region
    _
  $region9: #{multi_attention_forward.4} parent=0 // pred_fallthru
    _
  // Predicated region
  $region10: #{multi_attention_forward.4} parent=0 // pred_check
    _
  $region11: #{multi_attention_forward.4} parent=0 // pred_check_branch
    %15 = sbr.rel (0) target = $region13
  $region12: #{multi_attention_forward.4} parent=0 // pred_region
    _
  $region13: #{multi_attention_forward.4} parent=0 // pred_fallthru
    _
  %v17 = vld [vmem:[%s0] sm:$0xff]
  %v18 = vld [vmem:[%s0 + $0x8] sm:$0xff]
  %v19 = vpack.c.bf16 %v18, %v17
  %v20 = vld [vmem:[%s1] sm:$0xf]
  %v21 = vld [vmem:[%s1 + $0x4] sm:$0xf]
  %v22 = vld [vmem:[%s1 + $0x8] sm:$0xf]
  %v23 = vld [vmem:[%s1 + $0xc] sm:$0xf]
  %v24 = vld [vmem:[%s2] sm:$0x1]
  %v26 = vperm.slane %v24, 0
  %v32 = vunpack.c.l.b16 %v20
  %v33 = vunpack.c.l.b16 %v21
  %v34 = vunpack.c.l.b16 %v22
  %v35 = vunpack.c.l.b16 %v23
  %v36 = vpack.c.b16 %v33, %v32
  %v37 = vpack.c.b16 %v35, %v34
  %vm40 = vcmask 261120
  %v42 = vsel %vm40, %v19, 0
  %44 = vmatpush.bf16.msra.mxu0 0
  %45 = vmatpush.bf16.msra.mxu0 0
  %46 = vmatpush.bf16.msra.mxu0 0
  %47 = vmatpush.bf16.msra.mxu0 0
  %48 = vmatpush.bf16.msra.mxu0 0
  %49 = vmatpush.bf16.msra.mxu0 0
  %50 = vmatpush.bf16.msra.mxu0 %v37
  %51 = vmatpush.bf16.msra.mxu0 %v36
  %52 = vmatmul.bf16.gmra.mxu0 %v42
  %v53 = vpop.f32.mrf.mxu0
  %v54 = vadd.f32 %v26, %v53
  %v55 = vpop.f32.mrf.mxu0
  %v56 = vadd.f32 %v26, %v55
  %57 = vdwg.mxu0
  %v58 = vpack.c.bf16 %v54, %v54
  %v59 = vpack.c.bf16 %v56, %v56
  %vm60 = vcmask 257024
  %61 = vst.msk [vmem:[%s3] sm:$0xf] %vm60, %v58
  %62 = vst.msk [vmem:[%s3 + $0x4] sm:$0xf] %vm60, %v59
  %65 = vrot.lane.b32.xlu0 %v58, 96
  %v66 = vpop.permute.xlu0 %65
  %67 = vrot.lane.b32.xlu0 %v59, 96
  %v68 = vpop.permute.xlu0 %67
  %71 = vst.msk [vmem:[%s4] sm:$0xf] %vm60, %v66
  %72 = vst.msk [vmem:[%s4 + $0x4] sm:$0xf] %vm60, %v68
  // Predicated region
  $region14: #{multi_attention_forward.4} parent=0 // pred_check
    _
  $region15: #{multi_attention_forward.4} parent=0 // pred_check_branch
    %74 = sbr.rel (0) target = $region17
  $region16: #{multi_attention_forward.4} parent=0 // pred_region
    _
  $region17: #{multi_attention_forward.4} parent=0 // pred_fallthru
    _
  // Predicated region
  $region18: #{multi_attention_forward.4} parent=0 // pred_check
    _
  $region19: #{multi_attention_forward.4} parent=0 // pred_check_branch
    %76 = sbr.rel (0) target = $region21
  $region20: #{multi_attention_forward.4} parent=0 // pred_region
    _
  $region21: #{multi_attention_forward.4} parent=0 // pred_fallthru
    _
  // Predicated region
  $region22: #{multi_attention_forward.4} parent=0 // pred_check
    _
  $region23: #{multi_attention_forward.4} parent=0 // pred_check_branch
    %78 = sbr.rel (0) target = $region25
  $region24: #{multi_attention_forward.4} parent=0 // pred_region
    _
  $region25: #{multi_attention_forward.4} parent=0 // pred_fallthru
    _
  // Predicated region
  $region26: #{multi_attention_forward.4} parent=0 // pred_check
    _
  $region27: #{multi_attention_forward.4} parent=0 // pred_check_branch
    %80 = sbr.rel (0) target = $region29
  $region28: #{multi_attention_forward.4} parent=0 // pred_region
    _
  $region29: #{multi_attention_forward.4} parent=0 // pred_fallthru
    _

// kernel: multi_attention_forward.5
$region0: #{multi_attention_forward.5}
  #allocation0 [shape = 'u32[]', space=smem, size = 0x4, offset = 0x4, fixed_abs, tag = 'smem constant byte address 0x4 - core index']
  #allocation1 [shape = 'u32[72,128]{1,0:T(1,128)}', space=vmem, size = 0x9000, scoped, tag = 'internal scratch']
  #allocation2 [shape = 'bf16[16,32]{1,0:T(8,128)(2,1)}', space=vmem, size = 0x1000, scoped, tag = 'scratch operand']
  #allocation3 [shape = 'f32[4,16,1]{2,1,0:T(8,128)}', space=vmem, size = 0x8000, scoped, tag = 'scratch operand']
  #allocation4 [shape = 'f32[4,16,1]{2,1,0:T(8,128)}', space=vmem, size = 0x8000, scoped, tag = 'scratch operand']
  #allocation5 [shape = 'f32[16,32]{1,0:T(8,128)}', space=vmem, size = 0x2000, scoped, tag = 'scratch operand']
  %s0 = inlined_call_operand.vmem [shape: f32[16,32], index: 0, kind: input, shape index: {}]
  %s1 = inlined_call_operand.vmem [shape: bf16[16,32], index: 1, kind: input, shape index: {}]
  %s2 = inlined_call_operand.vmem [shape: bf16[16,32], index: 2, kind: input, shape index: {}]
  %s3 = inlined_call_operand.vmem [shape: bf16[32,32], index: 3, kind: input, shape index: {}]
  %s4 = inlined_call_operand.vmem [shape: f32[1,32], index: 4, kind: input, shape index: {}]
  %s5 = inlined_call_operand.vmem [shape: bf16[32,32], index: 5, kind: input, shape index: {}]
  %s6 = inlined_call_operand.vmem [shape: f32[1,32], index: 6, kind: input, shape index: {}]
  %s7 = inlined_call_operand.vmem [shape: f32[1,32], index: 7, kind: input, shape index: {}]
  %s8 = inlined_call_operand.vmem [shape: f32[1,32], index: 8, kind: input, shape index: {}]
  %s9 = inlined_call_operand.vmem [shape: bf16[32,64], index: 9, kind: input, shape index: {}]
  %s10 = inlined_call_operand.vmem [shape: f32[1,64], index: 10, kind: input, shape index: {}]
  %s11 = inlined_call_operand.vmem [shape: bf16[64,32], index: 11, kind: input, shape index: {}]
  %s12 = inlined_call_operand.hbm [shape: f32[1,32], index: 12, kind: input, shape index: {}]
  %s13 = inlined_call_operand.hbm [shape: f32[1,32], index: 13, kind: input, shape index: {}]
  %s14 = inlined_call_operand.vmem [shape: f32[1,32], index: 14, kind: input, shape index: {}]
  %s15 = inlined_call_operand.vmem [shape: f32[16,32], index: 15, kind: output, shape index: {}]
  %s16 = sld [smem:[#allocation0]]
  $region86: #{multi_attention_forward.5} parent=0
    _
  %s18 = ssub.s32 1, %s16
  %s19 = scalar_select 0, %s18, %s16
  $region1: #{multi_attention_forward.5} parent=0
    #allocation6 [shape = 'u8[512]{0}', space=vmem, size = 0x400, scoped, tag = 'input window, operand 12, single buffered']
    #allocation7 [shape = 's32[1]{0}', space=sflag, size = 0x4, scoped, tag = 'scoped memory for multi_attention_forward.5']
    #allocation8 [shape = 'u8[512]{0}', space=vmem, size = 0x400, scoped, tag = 'input window, operand 13, single buffered']
    #allocation9 [shape = 's32[1]{0}', space=sflag, size = 0x4, scoped, tag = 'scoped memory for multi_attention_forward.5']
    %20 = vsyncpa [#allocation7], 0
    %21 = vsyncpa [#allocation9], 0
    // Predicated region
    $region2: #{multi_attention_forward.5} parent=1 // pred_check
      _
    $region3: #{multi_attention_forward.5} parent=1 // pred_check_branch
      %23 = sbr.rel (0) target = $region5
    $region4: #{multi_attention_forward.5} parent=1 // pred_region
      _
    $region5: #{multi_attention_forward.5} parent=1 // pred_fallthru
      _
    // Predicated region
    $region6: #{multi_attention_forward.5} parent=1 // pred_check
      _
    $region7: #{multi_attention_forward.5} parent=1 // pred_check_branch
      %25 = sbr.rel (0) target = $region9
    $region8: #{multi_attention_forward.5} parent=1 // pred_region
      _
    $region9: #{multi_attention_forward.5} parent=1 // pred_fallthru
      _
    // Predicated region
    $region10: #{multi_attention_forward.5} parent=1 // pred_check
      _
    $region11: #{multi_attention_forward.5} parent=1 // pred_check_branch
      %27 = sbr.rel (0) target = $region13
    $region12: #{multi_attention_forward.5} parent=1 // pred_region
      _
    $region13: #{multi_attention_forward.5} parent=1 // pred_fallthru
      _
    // Predicated region
    $region14: #{multi_attention_forward.5} parent=1 // pred_check
      _
    $region15: #{multi_attention_forward.5} parent=1 // pred_check_branch
      %29 = sbr.rel (0) target = $region17
    $region16: #{multi_attention_forward.5} parent=1 // pred_region
      _
    $region17: #{multi_attention_forward.5} parent=1 // pred_fallthru
      _
    // Predicated region
    $region18: #{multi_attention_forward.5} parent=1 // pred_check
      _
    $region19: #{multi_attention_forward.5} parent=1 // pred_check_branch
      %31 = sbr.rel (0) target = $region21
    $region20: #{multi_attention_forward.5} parent=1 // pred_region
      _
    $region21: #{multi_attention_forward.5} parent=1 // pred_fallthru
      _
    // Predicated region
    $region22: #{multi_attention_forward.5} parent=1 // pred_check
      _
    $region23: #{multi_attention_forward.5} parent=1 // pred_check_branch
      %33 = sbr.rel (0) target = $region25
    $region24: #{multi_attention_forward.5} parent=1 // pred_region
      _
    $region25: #{multi_attention_forward.5} parent=1 // pred_fallthru
      _
    // Predicated region
    $region26: #{multi_attention_forward.5} parent=1 // pred_check
      _
    $region27: #{multi_attention_forward.5} parent=1 // pred_check_branch
      %35 = sbr.rel (0) target = $region29
    $region28: #{multi_attention_forward.5} parent=1 // pred_region
      _
    $region29: #{multi_attention_forward.5} parent=1 // pred_fallthru
      _
    // Predicated region
    $region30: #{multi_attention_forward.5} parent=1 // pred_check
      _
    $region31: #{multi_attention_forward.5} parent=1 // pred_check_branch
      %37 = sbr.rel (0) target = $region33
    $region32: #{multi_attention_forward.5} parent=1 // pred_region
      _
    $region33: #{multi_attention_forward.5} parent=1 // pred_fallthru
      _
    // Predicated region
    $region34: #{multi_attention_forward.5} parent=1 // pred_check
      _
    $region35: #{multi_attention_forward.5} parent=1 // pred_check_branch
      %39 = sbr.rel (0) target = $region37
    $region36: #{multi_attention_forward.5} parent=1 // pred_region
      _
    $region37: #{multi_attention_forward.5} parent=1 // pred_fallthru
      _
    // Predicated region
    $region38: #{multi_attention_forward.5} parent=1 // pred_check
      _
    $region39: #{multi_attention_forward.5} parent=1 // pred_check_branch
      %41 = sbr.rel (0) target = $region41
    $region40: #{multi_attention_forward.5} parent=1 // pred_region
      _
    $region41: #{multi_attention_forward.5} parent=1 // pred_fallthru
      _
    // Predicated region
    $region42: #{multi_attention_forward.5} parent=1 // pred_check
      _
    $region43: #{multi_attention_forward.5} parent=1 // pred_check_branch
      %43 = sbr.rel (0) target = $region45
    $region44: #{multi_attention_forward.5} parent=1 // pred_region
      _
    $region45: #{multi_attention_forward.5} parent=1 // pred_fallthru
      _
    // Predicated region
    $region46: #{multi_attention_forward.5} parent=1 // pred_check
      _
    $region47: #{multi_attention_forward.5} parent=1 // pred_check_branch
      %45 = sbr.rel (0) target = $region49
    $region48: #{multi_attention_forward.5} parent=1 // pred_region
      _
    $region49: #{multi_attention_forward.5} parent=1 // pred_fallthru
      _
    // Predicated region
    $region50: #{multi_attention_forward.5} parent=1 // pred_check
      _
    $region51: #{multi_attention_forward.5} parent=1 // pred_check_branch
      %47 = sbr.rel (0) target = $region53
    $region52: #{multi_attention_forward.5} parent=1 // pred_region
      %49 = vsyncadd [#allocation7], 0
      %s51 = sshll.u32 %s12, 4
      %s52 = int_to_ptr.hbm [resolvable:$true] %s51
      %s53 = sshll.u32 [#allocation6], 4
      %s54 = int_to_ptr.vmem [resolvable:$true] %s53
      %56 = dma.hbm_to_vmem [thread:$0]  %s52, 16, %s54, [#allocation7]
    $region53: #{multi_attention_forward.5} parent=1 // pred_fallthru
      _
    // Predicated region
    $region54: #{multi_attention_forward.5} parent=1 // pred_check
      _
    $region55: #{multi_attention_forward.5} parent=1 // pred_check_branch
      %58 = sbr.rel (0) target = $region57
    $region56: #{multi_attention_forward.5} parent=1 // pred_region
      %60 = vsyncadd [#allocation9], 0
      %s62 = sshll.u32 %s13, 4
      %s63 = int_to_ptr.hbm [resolvable:$true] %s62
      %s64 = sshll.u32 [#allocation8], 4
      %s65 = int_to_ptr.vmem [resolvable:$true] %s64
      %67 = dma.hbm_to_vmem [thread:$0]  %s63, 16, %s65, [#allocation9]
    $region57: #{multi_attention_forward.5} parent=1 // pred_fallthru
      _
    // Predicated region
    $region58: #{multi_attention_forward.5} parent=1 // pred_check
      _
    $region59: #{multi_attention_forward.5} parent=1 // pred_check_branch
      %69 = sbr.rel (0) target = $region61
    $region60: #{multi_attention_forward.5} parent=1 // pred_region
      _
    $region61: #{multi_attention_forward.5} parent=1 // pred_fallthru
      _
    // Predicated region
    $region62: #{multi_attention_forward.5} parent=1 // pred_check
      _
    $region63: #{multi_attention_forward.5} parent=1 // pred_check_branch
      %71 = sbr.rel (0) target = $region65
    $region64: #{multi_attention_forward.5} parent=1 // pred_region
      %73 = dma.done [#allocation7], 16
    $region65: #{multi_attention_forward.5} parent=1 // pred_fallthru
      _
    // Predicated region
    $region66: #{multi_attention_forward.5} parent=1 // pred_check
      _
    $region67: #{multi_attention_forward.5} parent=1 // pred_check_branch
      %75 = sbr.rel (0) target = $region69
    $region68: #{multi_attention_forward.5} parent=1 // pred_region
      %77 = dma.done [#allocation9], 16
    $region69: #{multi_attention_forward.5} parent=1 // pred_fallthru
      _
    %p79 = scmp.eq.s32.totalorder 0, 0
    // Predicated region
    $region70: #{multi_attention_forward.5} parent=1 // pred_check
      %p80 = pneg %p79
    $region71: #{multi_attention_forward.5} parent=1 // pred_check_branch
      %82 = sbr.rel (%p80) target = $region73
    $region72: #{multi_attention_forward.5} parent=1 // pred_region
      %v83 = vld [vmem:[%s0] sm:$0xff]
      %v84 = vld [vmem:[%s0 + $0x8] sm:$0xff]
      %v85 = vpack.c.bf16 %v84, %v83
      %v86 = vld [vmem:[%s3] sm:$0xf]
      %v87 = vld [vmem:[%s3 + $0x4] sm:$0xf]
      %v88 = vld [vmem:[%s3 + $0x8] sm:$0xf]
      %v89 = vld [vmem:[%s3 + $0xc] sm:$0xf]
      %v90 = vld [vmem:[%s4] sm:$0x1]
      %v92 = vperm.slane %v90, 0
      %v98 = vunpack.c.l.b16 %v86
      %v99 = vunpack.c.l.b16 %v87
      %v100 = vunpack.c.l.b16 %v88
      %v101 = vunpack.c.l.b16 %v89
      %v102 = vpack.c.b16 %v99, %v98
      %v103 = vpack.c.b16 %v101, %v100
      %vm106 = vcmask 261120
      %v108 = vsel %vm106, %v85, 0
      %110 = vmatpush.bf16.msra.mxu0 0
      %111 = vmatpush.bf16.msra.mxu0 0
      %112 = vmatpush.bf16.msra.mxu0 0
      %113 = vmatpush.bf16.msra.mxu0 0
      %114 = vmatpush.bf16.msra.mxu0 0
      %115 = vmatpush.bf16.msra.mxu0 0
      %116 = vmatpush.bf16.msra.mxu0 %v103
      %117 = vmatpush.bf16.msra.mxu0 %v102
      %118 = vmatmul.bf16.gmra.mxu0 %v108
      %v119 = vpop.f32.mrf.mxu0
      %v120 = vadd.f32 %v92, %v119
      %v121 = vpop.f32.mrf.mxu0
      %v122 = vadd.f32 %v92, %v121
      %123 = vdwg.mxu0
      %v124 = vpack.c.bf16 %v120, %v120
      %v125 = vpack.c.bf16 %v122, %v122
      %vm126 = vcmask 257024
      %127 = vst.msk [vmem:[#allocation2] sm:$0xf] %vm126, %v124
      %128 = vst.msk [vmem:[#allocation2 + $0x4] sm:$0xf] %vm126, %v125
      %vm129 = vcmask 7168
      %130 = vst.msk [vmem:[#allocation3] sm:$0xff] %vm129, -inf
      %131 = vst.msk [vmem:[#allocation3 + $0x8] sm:$0xff] %vm129, -inf
      %132 = vst.msk [vmem:[#allocation3 + $0x10] sm:$0xff] %vm129, -inf
      %133 = vst.msk [vmem:[#allocation3 + $0x18] sm:$0xff] %vm129, -inf
      %134 = vst.msk [vmem:[#allocation3 + $0x20] sm:$0xff] %vm129, -inf
      %135 = vst.msk [vmem:[#allocation3 + $0x28] sm:$0xff] %vm129, -inf
      %136 = vst.msk [vmem:[#allocation3 + $0x30] sm:$0xff] %vm129, -inf
      %137 = vst.msk [vmem:[#allocation3 + $0x38] sm:$0xff] %vm129, -inf
      %138 = vst.msk [vmem:[#allocation4] sm:$0xff] %vm129, 0.0
      %139 = vst.msk [vmem:[#allocation4 + $0x8] sm:$0xff] %vm129, 0.0
      %140 = vst.msk [vmem:[#allocation4 + $0x10] sm:$0xff] %vm129, 0.0
      %141 = vst.msk [vmem:[#allocation4 + $0x18] sm:$0xff] %vm129, 0.0
      %142 = vst.msk [vmem:[#allocation4 + $0x20] sm:$0xff] %vm129, 0.0
      %143 = vst.msk [vmem:[#allocation4 + $0x28] sm:$0xff] %vm129, 0.0
      %144 = vst.msk [vmem:[#allocation4 + $0x30] sm:$0xff] %vm129, 0.0
      %145 = vst.msk [vmem:[#allocation4 + $0x38] sm:$0xff] %vm129, 0.0
      %146 = vst.msk [vmem:[#allocation5] sm:$0xff] %vm106, 0.0
      %147 = vst.msk [vmem:[#allocation5 + $0x8] sm:$0xff] %vm106, 0.0
    $region73: #{multi_attention_forward.5} parent=1 // pred_fallthru
      _
    %v148 = vld [vmem:[%s1] sm:$0xf]
    %v149 = vld [vmem:[%s1 + $0x4] sm:$0xf]
    %v150 = vld [vmem:[%s2] sm:$0xf]
    %v151 = vld [vmem:[%s2 + $0x4] sm:$0xf]
    %v152 = vlaneseq
    %v153 = vand.u32 %v152, 127
    %s154 = smul.u32 0, 16
    %v155 = vstv %s154
    %v156 = vadd.s32 %v153, %v155
    %vm157 = vcmp.lt.s32.totalorder %v156, 8
    %v158 = vld [vmem:[#allocation2] sm:$0xf]
    %v159 = vld [vmem:[#allocation2 + $0x4] sm:$0xf]
    %v162 = vunpack.c.l.b16 %v158
    %v163 = vunpack.c.l.b16 %v159
    %v164 = vpack.c.b16 %v163, %v162
    %v167 = vunpack.c.l.b16 %v148
    %v168 = vunpack.c.l.b16 %v149
    %v169 = vpack.c.b16 %v168, %v167
    %vm170 = vcmask 64512
    %v172 = vsel %vm170, %v164, 0
    %v175 = vsel %vm170, %v169, 0
    %177 = vmatpush.bf16.xpose.msra.mxu0 0
    %178 = vmatpush.bf16.xpose.msra.mxu0 0
    %179 = vmatpush.bf16.xpose.msra.mxu0 0
    %180 = vmatpush.bf16.xpose.msra.mxu0 0
    %181 = vmatpush.bf16.xpose.msra.mxu0 0
    %182 = vmatpush.bf16.xpose.msra.mxu0 0
    %183 = vmatpush.bf16.xpose.msra.mxu0 0
    %184 = vmatpush.bf16.xpose.msra.mxu0 %v175
    %185 = vmatmul.bf16.gmra.mxu0 %v172
    %v186 = vpop.f32.mrf.mxu0
    %v187 = vadd.f32 0.0, %v186
    %v188 = vpop.f32.mrf.mxu0
    %v189 = vadd.f32 0.0, %v188
    %190 = vdwg.mxu0
    %v191 = vsel %vm157, 1, 0
    %vm192 = vcmp.eq.s32.totalorder %v191, 1
    %v193 = vsel %vm192, %v187, -1e+30
    %v194 = vsel %vm192, %v189, -1e+30
    %v195 = vld [vmem:[#allocation3] sm:$0xff]
    %v196 = vld [vmem:[#allocation3 + $0x8] sm:$0xff]
    %vm197 = vcmask 130048
    %v198 = vsel %vm197, %v193, -inf
    %199 = vmax.xlane.f32.xlu0 %v198
    %v200 = vpop.xlane.xlu0 %199
    %v201 = vsel %vm197, %v194, -inf
    %202 = vmax.xlane.f32.xlu0 %v201
    %v203 = vpop.xlane.xlu0 %202
    %v204 = vmax.f32 %v195, %v200
    %v205 = vmax.f32 %v196, %v203
    %v206 = vsub.f32 %v195, %v204
    %v207 = vsub.f32 %v196, %v205
    %v208 = vmul.f32 %v206, 1.442695
    %v209 = vpow.pop %v208
    %v210 = vmul.f32 %v207, 1.442695
    %v211 = vpow.pop %v210
    %213 = vset.pattern.permute.xlu0 0
    %214 = vperm.xlu0 %213, %v204
    %v215 = vpop.permute.xlu0 %214
    %218 = vset.pattern.permute.xlu0 0
    %219 = vperm.xlu0 %218, %v205
    %v220 = vpop.permute.xlu0 %219
    %v222 = vsub.f32 %v193, %v215
    %v223 = vsub.f32 %v194, %v220
    %v224 = vmul.f32 %v222, 1.442695
    %v225 = vpow.pop %v224
    %v226 = vmul.f32 %v223, 1.442695
    %v227 = vpow.pop %v226
    %v228 = vld [vmem:[#allocation4] sm:$0xff]
    %v229 = vld [vmem:[#allocation4 + $0x8] sm:$0xff]
    %v230 = vmul.f32 %v209, %v228
    %v231 = vmul.f32 %v211, %v229
    %v232 = vsel %vm197, %v225, 0.0
    %233 = vadd.xlane.f32.xlu0 %v232
    %v234 = vpop.xlane.xlu0 %233
    %v235 = vsel %vm197, %v227, 0.0
    %236 = vadd.xlane.f32.xlu0 %v235
    %v237 = vpop.xlane.xlu0 %236
    %v238 = vadd.f32 %v230, %v234
    %v239 = vadd.f32 %v231, %v237
    %vm240 = vcmask 7168
    %241 = vst.msk [vmem:[#allocation4] sm:$0xff] %vm240, %v238
    %242 = vst.msk [vmem:[#allocation4 + $0x8] sm:$0xff] %vm240, %v239
    %v243 = vpack.c.bf16 %v227, %v225
    %v246 = vunpack.c.l.b16 %v150
    %v247 = vunpack.c.l.b16 %v151
    %v248 = vpack.c.b16 %v247, %v246
    %v251 = vsel %vm197, %v243, 0
    %253 = vmatpush.bf16.msra.mxu0 0
    %254 = vmatpush.bf16.msra.mxu0 0
    %255 = vmatpush.bf16.msra.mxu0 0
    %256 = vmatpush.bf16.msra.mxu0 0
    %257 = vmatpush.bf16.msra.mxu0 0
    %258 = vmatpush.bf16.msra.mxu0 0
    %259 = vmatpush.bf16.msra.mxu0 0
    %260 = vmatpush.bf16.msra.mxu0 %v248
    %261 = vmatmul.bf16.gmra.mxu0 %v251
    %v262 = vpop.f32.mrf.mxu0
    %v263 = vadd.f32 0.0, %v262
    %v264 = vpop.f32.mrf.mxu0
    %v265 = vadd.f32 0.0, %v264
    %266 = vdwg.mxu0
    %v267 = vld [vmem:[#allocation5] sm:$0xff]
    %v268 = vld [vmem:[#allocation5 + $0x8] sm:$0xff]
    %270 = vset.pattern.permute.xlu0 0
    %271 = vperm.xlu0 %270, %v209
    %v272 = vpop.permute.xlu0 %271
    %275 = vset.pattern.permute.xlu0 0
    %276 = vperm.xlu0 %275, %v211
    %v277 = vpop.permute.xlu0 %276
    %v279 = vmul.f32 %v272, %v267
    %v280 = vmul.f32 %v277, %v268
    %v281 = vadd.f32 %v279, %v263
    %v282 = vadd.f32 %v280, %v265
    %283 = vst.msk [vmem:[#allocation5] sm:$0xff] %vm170, %v281
    %284 = vst.msk [vmem:[#allocation5 + $0x8] sm:$0xff] %vm170, %v282
    %285 = vst.msk [vmem:[#allocation3] sm:$0xff] %vm240, %v204
    %286 = vst.msk [vmem:[#allocation3 + $0x8] sm:$0xff] %vm240, %v205
    %v287 = vld [vmem:[#allocation2] sm:$0xf]
    %v288 = vld [vmem:[#allocation2 + $0x4] sm:$0xf]
    %v291 = vunpack.c.l.b16 %v287
    %v292 = vunpack.c.l.b16 %v288
    %v293 = vpack.c.b16 %v292, %v291
    %294 = vrot.lane.b32.xlu0 %v293, 120
    %v295 = vpop.permute.xlu0 %294
    %296 = vrot.lane.b32.xlu0 %v169, 120
    %v297 = vpop.permute.xlu0 %296
    %v299 = vsel %vm170, %v295, 0
    %v302 = vsel %vm170, %v297, 0
    %304 = vmatpush.bf16.xpose.msra.mxu0 0
    %305 = vmatpush.bf16.xpose.msra.mxu0 0
    %306 = vmatpush.bf16.xpose.msra.mxu0 0
    %307 = vmatpush.bf16.xpose.msra.mxu0 0
    %308 = vmatpush.bf16.xpose.msra.mxu0 0
    %309 = vmatpush.bf16.xpose.msra.mxu0 0
    %310 = vmatpush.bf16.xpose.msra.mxu0 0
    %311 = vmatpush.bf16.xpose.msra.mxu0 %v302
    %312 = vmatmul.bf16.gmra.mxu0 %v299
    %v313 = vpop.f32.mrf.mxu0
    %v314 = vadd.f32 0.0, %v313
    %v315 = vpop.f32.mrf.mxu0
    %v316 = vadd.f32 0.0, %v315
    %317 = vdwg.mxu0
    %v318 = vsel %vm192, %v314, -1e+30
    %v319 = vsel %vm192, %v316, -1e+30
    %s320 = scalar_lea.vmem [#allocation3], 16
    %v321 = vld [vmem:[%s320] sm:$0xff]
    %v322 = vld [vmem:[%s320 + $0x8] sm:$0xff]
    %v323 = vsel %vm197, %v318, -inf
    %324 = vmax.xlane.f32.xlu0 %v323
    %v325 = vpop.xlane.xlu0 %324
    %v326 = vsel %vm197, %v319, -inf
    %327 = vmax.xlane.f32.xlu0 %v326
    %v328 = vpop.xlane.xlu0 %327
    %v329 = vmax.f32 %v321, %v325
    %v330 = vmax.f32 %v322, %v328
    %v331 = vsub.f32 %v321, %v329
    %v332 = vsub.f32 %v322, %v330
    %v333 = vmul.f32 %v331, 1.442695
    %v334 = vpow.pop %v333
    %v335 = vmul.f32 %v332, 1.442695
    %v336 = vpow.pop %v335
    %338 = vset.pattern.permute.xlu0 0
    %339 = vperm.xlu0 %338, %v329
    %v340 = vpop.permute.xlu0 %339
    %343 = vset.pattern.permute.xlu0 0
    %344 = vperm.xlu0 %343, %v330
    %v345 = vpop.permute.xlu0 %344
    %v347 = vsub.f32 %v318, %v340
    %v348 = vsub.f32 %v319, %v345
    %v349 = vmul.f32 %v347, 1.442695
    %v350 = vpow.pop %v349
    %v351 = vmul.f32 %v348, 1.442695
    %v352 = vpow.pop %v351
    %s353 = scalar_lea.vmem [#allocation4], 16
    %v354 = vld [vmem:[%s353] sm:$0xff]
    %v355 = vld [vmem:[%s353 + $0x8] sm:$0xff]
    %v356 = vmul.f32 %v334, %v354
    %v357 = vmul.f32 %v336, %v355
    %v358 = vsel %vm197, %v350, 0.0
    %359 = vadd.xlane.f32.xlu0 %v358
    %v360 = vpop.xlane.xlu0 %359
    %v361 = vsel %vm197, %v352, 0.0
    %362 = vadd.xlane.f32.xlu0 %v361
    %v363 = vpop.xlane.xlu0 %362
    %v364 = vadd.f32 %v356, %v360
    %v365 = vadd.f32 %v357, %v363
    %366 = vst.msk [vmem:[%s353] sm:$0xff] %vm240, %v364
    %367 = vst.msk [vmem:[%s353 + $0x8] sm:$0xff] %vm240, %v365
    %v368 = vpack.c.bf16 %v352, %v350
    %369 = vrot.lane.b32.xlu0 %v248, 120
    %v370 = vpop.permute.xlu0 %369
    %v373 = vsel %vm197, %v368, 0
    %375 = vmatpush.bf16.msra.mxu0 0
    %376 = vmatpush.bf16.msra.mxu0 0
    %377 = vmatpush.bf16.msra.mxu0 0
    %378 = vmatpush.bf16.msra.mxu0 0
    %379 = vmatpush.bf16.msra.mxu0 0
    %380 = vmatpush.bf16.msra.mxu0 0
    %381 = vmatpush.bf16.msra.mxu0 0
    %382 = vmatpush.bf16.msra.mxu0 %v370
    %383 = vmatmul.bf16.gmra.mxu0 %v373
    %v384 = vpop.f32.mrf.mxu0
    %v385 = vadd.f32 0.0, %v384
    %v386 = vpop.f32.mrf.mxu0
    %v387 = vadd.f32 0.0, %v386
    %388 = vdwg.mxu0
    %v389 = vld [vmem:[#allocation5] sm:$0xff]
    %v390 = vld [vmem:[#allocation5 + $0x8] sm:$0xff]
    %392 = vset.pattern.permute.xlu0 0
    %393 = vperm.xlu0 %392, %v334
    %v394 = vpop.permute.xlu0 %393
    %397 = vset.pattern.permute.xlu0 0
    %398 = vperm.xlu0 %397, %v336
    %v399 = vpop.permute.xlu0 %398
    %v401 = vmul.f32 %v394, %v389
    %v402 = vmul.f32 %v399, %v390
    %405 = vrot.lane.b32.xlu0 %v385, 8
    %v406 = vpop.permute.xlu0 %405
    %407 = vrot.lane.b32.xlu0 %v387, 8
    %v408 = vpop.permute.xlu0 %407
    %v411 = vadd.f32 %v401, %v406
    %v412 = vadd.f32 %v402, %v408
    %vm413 = vcmask 130112
    %414 = vst.msk [vmem:[#allocation5] sm:$0xff] %vm413, %v411
    %415 = vst.msk [vmem:[#allocation5 + $0x8] sm:$0xff] %vm413, %v412
    %416 = vst.msk [vmem:[%s320] sm:$0xff] %vm240, %v329
    %417 = vst.msk [vmem:[%s320 + $0x8] sm:$0xff] %vm240, %v330
    %v418 = vld [vmem:[#allocation2] sm:$0xf]
    %v419 = vld [vmem:[#allocation2 + $0x4] sm:$0xf]
    %v422 = vunpack.c.l.b16 %v418
    %v423 = vunpack.c.l.b16 %v419
    %v424 = vpack.c.b16 %v423, %v422
    %425 = vrot.lane.b32.xlu0 %v424, 112
    %v426 = vpop.permute.xlu0 %425
    %427 = vrot.lane.b32.xlu0 %v169, 112
    %v428 = vpop.permute.xlu0 %427
    %v430 = vsel %vm170, %v426, 0
    %v433 = vsel %vm170, %v428, 0
    %435 = vmatpush.bf16.xpose.msra.mxu0 0
    %436 = vmatpush.bf16.xpose.msra.mxu0 0
    %437 = vmatpush.bf16.xpose.msra.mxu0 0
    %438 = vmatpush.bf16.xpose.msra.mxu0 0
    %439 = vmatpush.bf16.xpose.msra.mxu0 0
    %440 = vmatpush.bf16.xpose.msra.mxu0 0
    %441 = vmatpush.bf16.xpose.msra.mxu0 0
    %442 = vmatpush.bf16.xpose.msra.mxu0 %v433
    %443 = vmatmul.bf16.gmra.mxu0 %v430
    %v444 = vpop.f32.mrf.mxu0
    %v445 = vadd.f32 0.0, %v444
    %v446 = vpop.f32.mrf.mxu0
    %v447 = vadd.f32 0.0, %v446
    %448 = vdwg.mxu0
    %v449 = vsel %vm192, %v445, -1e+30
    %v450 = vsel %vm192, %v447, -1e+30
    %s451 = scalar_lea.vmem [#allocation3], 32
    %v452 = vld [vmem:[%s451] sm:$0xff]
    %v453 = vld [vmem:[%s451 + $0x8] sm:$0xff]
    %v454 = vsel %vm197, %v449, -inf
    %455 = vmax.xlane.f32.xlu0 %v454
    %v456 = vpop.xlane.xlu0 %455
    %v457 = vsel %vm197, %v450, -inf
    %458 = vmax.xlane.f32.xlu0 %v457
    %v459 = vpop.xlane.xlu0 %458
    %v460 = vmax.f32 %v452, %v456
    %v461 = vmax.f32 %v453, %v459
    %v462 = vsub.f32 %v452, %v460
    %v463 = vsub.f32 %v453, %v461
    %v464 = vmul.f32 %v462, 1.442695
    %v465 = vpow.pop %v464
    %v466 = vmul.f32 %v463, 1.442695
    %v467 = vpow.pop %v466
    %469 = vset.pattern.permute.xlu0 0
    %470 = vperm.xlu0 %469, %v460
    %v471 = vpop.permute.xlu0 %470
    %474 = vset.pattern.permute.xlu0 0
    %475 = vperm.xlu0 %474, %v461
    %v476 = vpop.permute.xlu0 %475
    %v478 = vsub.f32 %v449, %v471
    %v479 = vsub.f32 %v450, %v476
    %v480 = vmul.f32 %v478, 1.442695
    %v481 = vpow.pop %v480
    %v482 = vmul.f32 %v479, 1.442695
    %v483 = vpow.pop %v482
    %s484 = scalar_lea.vmem [#allocation4], 32
    %v485 = vld [vmem:[%s484] sm:$0xff]
    %v486 = vld [vmem:[%s484 + $0x8] sm:$0xff]
    %v487 = vmul.f32 %v465, %v485
    %v488 = vmul.f32 %v467, %v486
    %v489 = vsel %vm197, %v481, 0.0
    %490 = vadd.xlane.f32.xlu0 %v489
    %v491 = vpop.xlane.xlu0 %490
    %v492 = vsel %vm197, %v483, 0.0
    %493 = vadd.xlane.f32.xlu0 %v492
    %v494 = vpop.xlane.xlu0 %493
    %v495 = vadd.f32 %v487, %v491
    %v496 = vadd.f32 %v488, %v494
    %497 = vst.msk [vmem:[%s484] sm:$0xff] %vm240, %v495
    %498 = vst.msk [vmem:[%s484 + $0x8] sm:$0xff] %vm240, %v496
    %v499 = vpack.c.bf16 %v483, %v481
    %500 = vrot.lane.b32.xlu0 %v248, 112
    %v501 = vpop.permute.xlu0 %500
    %v504 = vsel %vm197, %v499, 0
    %506 = vmatpush.bf16.msra.mxu0 0
    %507 = vmatpush.bf16.msra.mxu0 0
    %508 = vmatpush.bf16.msra.mxu0 0
    %509 = vmatpush.bf16.msra.mxu0 0
    %510 = vmatpush.bf16.msra.mxu0 0
    %511 = vmatpush.bf16.msra.mxu0 0
    %512 = vmatpush.bf16.msra.mxu0 0
    %513 = vmatpush.bf16.msra.mxu0 %v501
    %514 = vmatmul.bf16.gmra.mxu0 %v504
    %v515 = vpop.f32.mrf.mxu0
    %v516 = vadd.f32 0.0, %v515
    %v517 = vpop.f32.mrf.mxu0
    %v518 = vadd.f32 0.0, %v517
    %519 = vdwg.mxu0
    %v520 = vld [vmem:[#allocation5] sm:$0xff]
    %v521 = vld [vmem:[#allocation5 + $0x8] sm:$0xff]
    %523 = vset.pattern.permute.xlu0 0
    %524 = vperm.xlu0 %523, %v465
    %v525 = vpop.permute.xlu0 %524
    %528 = vset.pattern.permute.xlu0 0
    %529 = vperm.xlu0 %528, %v467
    %v530 = vpop.permute.xlu0 %529
    %v532 = vmul.f32 %v525, %v520
    %v533 = vmul.f32 %v530, %v521
    %536 = vrot.lane.b32.xlu0 %v516, 16
    %v537 = vpop.permute.xlu0 %536
    %538 = vrot.lane.b32.xlu0 %v518, 16
    %v539 = vpop.permute.xlu0 %538
    %v542 = vadd.f32 %v532, %v537
    %v543 = vadd.f32 %v533, %v539
    %vm544 = vcmask 195712
    %545 = vst.msk [vmem:[#allocation5] sm:$0xff] %vm544, %v542
    %546 = vst.msk [vmem:[#allocation5 + $0x8] sm:$0xff] %vm544, %v543
    %547 = vst.msk [vmem:[%s451] sm:$0xff] %vm240, %v460
    %548 = vst.msk [vmem:[%s451 + $0x8] sm:$0xff] %vm240, %v461
    %v549 = vld [vmem:[#allocation2] sm:$0xf]
    %v550 = vld [vmem:[#allocation2 + $0x4] sm:$0xf]
    %v553 = vunpack.c.l.b16 %v549
    %v554 = vunpack.c.l.b16 %v550
    %v555 = vpack.c.b16 %v554, %v553
    %556 = vrot.lane.b32.xlu0 %v555, 104
    %v557 = vpop.permute.xlu0 %556
    %558 = vrot.lane.b32.xlu0 %v169, 104
    %v559 = vpop.permute.xlu0 %558
    %v561 = vsel %vm170, %v557, 0
    %v564 = vsel %vm170, %v559, 0
    %566 = vmatpush.bf16.xpose.msra.mxu0 0
    %567 = vmatpush.bf16.xpose.msra.mxu0 0
    %568 = vmatpush.bf16.xpose.msra.mxu0 0
    %569 = vmatpush.bf16.xpose.msra.mxu0 0
    %570 = vmatpush.bf16.xpose.msra.mxu0 0
    %571 = vmatpush.bf16.xpose.msra.mxu0 0
    %572 = vmatpush.bf16.xpose.msra.mxu0 0
    %573 = vmatpush.bf16.xpose.msra.mxu0 %v564
    %574 = vmatmul.bf16.gmra.mxu0 %v561
    %v575 = vpop.f32.mrf.mxu0
    %v576 = vadd.f32 0.0, %v575
    %v577 = vpop.f32.mrf.mxu0
    %v578 = vadd.f32 0.0, %v577
    %579 = vdwg.mxu0
    %v580 = vsel %vm192, %v576, -1e+30
    %v581 = vsel %vm192, %v578, -1e+30
    %s582 = scalar_lea.vmem [#allocation3], 48
    %v583 = vld [vmem:[%s582] sm:$0xff]
    %v584 = vld [vmem:[%s582 + $0x8] sm:$0xff]
    %v585 = vsel %vm197, %v580, -inf
    %586 = vmax.xlane.f32.xlu0 %v585
    %v587 = vpop.xlane.xlu0 %586
    %v588 = vsel %vm197, %v581, -inf
    %589 = vmax.xlane.f32.xlu0 %v588
    %v590 = vpop.xlane.xlu0 %589
    %v591 = vmax.f32 %v583, %v587
    %v592 = vmax.f32 %v584, %v590
    %v593 = vsub.f32 %v583, %v591
    %v594 = vsub.f32 %v584, %v592
    %v595 = vmul.f32 %v593, 1.442695
    %v596 = vpow.pop %v595
    %v597 = vmul.f32 %v594, 1.442695
    %v598 = vpow.pop %v597
    %600 = vset.pattern.permute.xlu0 0
    %601 = vperm.xlu0 %600, %v591
    %v602 = vpop.permute.xlu0 %601
    %605 = vset.pattern.permute.xlu0 0
    %606 = vperm.xlu0 %605, %v592
    %v607 = vpop.permute.xlu0 %606
    %v609 = vsub.f32 %v580, %v602
    %v610 = vsub.f32 %v581, %v607
    %v611 = vmul.f32 %v609, 1.442695
    %v612 = vpow.pop %v611
    %v613 = vmul.f32 %v610, 1.442695
    %v614 = vpow.pop %v613
    %s615 = scalar_lea.vmem [#allocation4], 48
    %v616 = vld [vmem:[%s615] sm:$0xff]
    %v617 = vld [vmem:[%s615 + $0x8] sm:$0xff]
    %v618 = vmul.f32 %v596, %v616
    %v619 = vmul.f32 %v598, %v617
    %v620 = vsel %vm197, %v612, 0.0
    %621 = vadd.xlane.f32.xlu0 %v620
    %v622 = vpop.xlane.xlu0 %621
    %v623 = vsel %vm197, %v614, 0.0
    %624 = vadd.xlane.f32.xlu0 %v623
    %v625 = vpop.xlane.xlu0 %624
    %v626 = vadd.f32 %v618, %v622
    %v627 = vadd.f32 %v619, %v625
    %628 = vst.msk [vmem:[%s615] sm:$0xff] %vm240, %v626
    %629 = vst.msk [vmem:[%s615 + $0x8] sm:$0xff] %vm240, %v627
    %v630 = vpack.c.bf16 %v614, %v612
    %631 = vrot.lane.b32.xlu0 %v248, 104
    %v632 = vpop.permute.xlu0 %631
    %v635 = vsel %vm197, %v630, 0
    %637 = vmatpush.bf16.msra.mxu0 0
    %638 = vmatpush.bf16.msra.mxu0 0
    %639 = vmatpush.bf16.msra.mxu0 0
    %640 = vmatpush.bf16.msra.mxu0 0
    %641 = vmatpush.bf16.msra.mxu0 0
    %642 = vmatpush.bf16.msra.mxu0 0
    %643 = vmatpush.bf16.msra.mxu0 0
    %644 = vmatpush.bf16.msra.mxu0 %v632
    %645 = vmatmul.bf16.gmra.mxu0 %v635
    %v646 = vpop.f32.mrf.mxu0
    %v647 = vadd.f32 0.0, %v646
    %v648 = vpop.f32.mrf.mxu0
    %v649 = vadd.f32 0.0, %v648
    %650 = vdwg.mxu0
    %v651 = vld [vmem:[#allocation5] sm:$0xff]
    %v652 = vld [vmem:[#allocation5 + $0x8] sm:$0xff]
    %654 = vset.pattern.permute.xlu0 0
    %655 = vperm.xlu0 %654, %v596
    %v656 = vpop.permute.xlu0 %655
    %659 = vset.pattern.permute.xlu0 0
    %660 = vperm.xlu0 %659, %v598
    %v661 = vpop.permute.xlu0 %660
    %v663 = vmul.f32 %v656, %v651
    %v664 = vmul.f32 %v661, %v652
    %667 = vrot.lane.b32.xlu0 %v647, 24
    %v668 = vpop.permute.xlu0 %667
    %669 = vrot.lane.b32.xlu0 %v649, 24
    %v670 = vpop.permute.xlu0 %669
    %v673 = vadd.f32 %v663, %v668
    %v674 = vadd.f32 %v664, %v670
    %vm675 = vcmask 261312
    %676 = vst.msk [vmem:[#allocation5] sm:$0xff] %vm675, %v673
    %677 = vst.msk [vmem:[#allocation5 + $0x8] sm:$0xff] %vm675, %v674
    %678 = vst.msk [vmem:[%s582] sm:$0xff] %vm240, %v591
    %679 = vst.msk [vmem:[%s582 + $0x8] sm:$0xff] %vm240, %v592
    // Predicated region
    $region74: #{multi_attention_forward.5} parent=1 // pred_check
      %p680 = pneg %p79
    $region75: #{multi_attention_forward.5} parent=1 // pred_check_branch
      %682 = sbr.rel (%p680) target = $region77
    $region76: #{multi_attention_forward.5} parent=1 // pred_region
      %v683 = vld [vmem:[#allocation4] sm:$0xff]
      %v684 = vld [vmem:[#allocation4 + $0x8] sm:$0xff]
      %v685 = vrcp.pop %v683
      %v686 = vrcp.pop %v684
      %v687 = vld [vmem:[#allocation5] sm:$0xff]
      %v688 = vld [vmem:[#allocation5 + $0x8] sm:$0xff]
      %690 = vset.pattern.permute.xlu0 0
      %691 = vperm.xlu0 %690, %v685
      %v692 = vpop.permute.xlu0 %691
      %695 = vset.pattern.permute.xlu0 0
      %696 = vperm.xlu0 %695, %v686
      %v697 = vpop.permute.xlu0 %696
      %v699 = vmul.f32 %v687, %v692
      %v700 = vmul.f32 %v688, %v697
      %v701 = vpack.c.bf16 %v699, %v699
      %v702 = vpack.c.bf16 %v700, %v700
      %v703 = vld [vmem:[%s353] sm:$0xff]
      %v704 = vld [vmem:[%s353 + $0x8] sm:$0xff]
      %v705 = vrcp.pop %v703
      %v706 = vrcp.pop %v704
      %708 = vset.pattern.permute.xlu0 0
      %709 = vperm.xlu0 %708, %v705
      %v710 = vpop.permute.xlu0 %709
      %713 = vset.pattern.permute.xlu0 0
      %714 = vperm.xlu0 %713, %v706
      %v715 = vpop.permute.xlu0 %714
      %v717 = vmul.f32 %v687, %v710
      %v718 = vmul.f32 %v688, %v715
      %v719 = vpack.c.bf16 %v717, %v717
      %v720 = vpack.c.bf16 %v718, %v718
      %v721 = vld [vmem:[%s484] sm:$0xff]
      %v722 = vld [vmem:[%s484 + $0x8] sm:$0xff]
      %v723 = vrcp.pop %v721
      %v724 = vrcp.pop %v722
      %726 = vset.pattern.permute.xlu0 0
      %727 = vperm.xlu0 %726, %v723
      %v728 = vpop.permute.xlu0 %727
      %731 = vset.pattern.permute.xlu0 0
      %732 = vperm.xlu0 %731, %v724
      %v733 = vpop.permute.xlu0 %732
      %v735 = vmul.f32 %v687, %v728
      %v736 = vmul.f32 %v688, %v733
      %v737 = vpack.c.bf16 %v735, %v735
      %v738 = vpack.c.bf16 %v736, %v736
      %v739 = vld [vmem:[%s615] sm:$0xff]
      %v740 = vld [vmem:[%s615 + $0x8] sm:$0xff]
      %v741 = vrcp.pop %v739
      %v742 = vrcp.pop %v740
      %744 = vset.pattern.permute.xlu0 0
      %745 = vperm.xlu0 %744, %v741
      %v746 = vpop.permute.xlu0 %745
      %749 = vset.pattern.permute.xlu0 0
      %750 = vperm.xlu0 %749, %v742
      %v751 = vpop.permute.xlu0 %750
      %v753 = vmul.f32 %v687, %v746
      %v754 = vmul.f32 %v688, %v751
      %v755 = vpack.c.bf16 %v753, %v753
      %v756 = vpack.c.bf16 %v754, %v754
      %v759 = vunpack.c.l.b16 %v701
      %v760 = vunpack.c.l.b16 %v702
      %v761 = vpack.c.b16 %v760, %v759
      %v764 = vunpack.c.l.b16 %v719
      %v765 = vunpack.c.l.b16 %v720
      %v766 = vpack.c.b16 %v765, %v764
      %v769 = vunpack.c.l.b16 %v737
      %v770 = vunpack.c.l.b16 %v738
      %v771 = vpack.c.b16 %v770, %v769
      %v774 = vunpack.c.l.b16 %v755
      %v775 = vunpack.c.l.b16 %v756
      %v776 = vpack.c.b16 %v775, %v774
      %v779 = vsel %vm170, %v761, %v766
      %v781 = vsel %vm197, %v779, %v771
      %vm782 = vcmask 195584
      %v784 = vsel %vm782, %v781, %v776
      %v785 = vld [vmem:[%s5] sm:$0xf]
      %v786 = vld [vmem:[%s5 + $0x4] sm:$0xf]
      %v787 = vld [vmem:[%s5 + $0x8] sm:$0xf]
      %v788 = vld [vmem:[%s5 + $0xc] sm:$0xf]
      %v789 = vld [vmem:[%s6] sm:$0x1]
      %v791 = vperm.slane %v789, 0
      %v797 = vunpack.c.l.b16 %v785
      %v798 = vunpack.c.l.b16 %v786
      %v799 = vunpack.c.l.b16 %v787
      %v800 = vunpack.c.l.b16 %v788
      %v801 = vpack.c.b16 %v798, %v797
      %v802 = vpack.c.b16 %v800, %v799
      %vm805 = vcmask 261120
      %v806 = vsel %vm805, %v784, 0
      %808 = vmatpush.bf16.msra.mxu0 0
      %809 = vmatpush.bf16.msra.mxu0 0
      %810 = vmatpush.bf16.msra.mxu0 0
      %811 = vmatpush.bf16.msra.mxu0 0
      %812 = vmatpush.bf16.msra.mxu0 0
      %813 = vmatpush.bf16.msra.mxu0 0
      %814 = vmatpush.bf16.msra.mxu0 %v802
      %815 = vmatpush.bf16.msra.mxu0 %v801
      %816 = vmatmul.bf16.gmra.mxu0 %v806
      %v817 = vpop.f32.mrf.mxu0
      %v818 = vadd.f32 %v791, %v817
      %v819 = vpop.f32.mrf.mxu0
      %v820 = vadd.f32 %v791, %v819
      %821 = vdwg.mxu0
      %v822 = vld [vmem:[%s0] sm:$0xff]
      %v823 = vld [vmem:[%s0 + $0x8] sm:$0xff]
      %v824 = vadd.f32 %v822, %v818
      %v825 = vadd.f32 %v823, %v820
      %v826 = vld [vmem:[%s7] sm:$0x1]
      %v827 = vld [vmem:[%s8] sm:$0x1]
      %v828 = vsel %vm805, %v824, 0.0
      %829 = vadd.xlane.f32.xlu0 %v828
      %v830 = vpop.xlane.xlu0 %829
      %v831 = vsel %vm805, %v825, 0.0
      %832 = vadd.xlane.f32.xlu0 %v831
      %v833 = vpop.xlane.xlu0 %832
      %v834 = vrcp.pop 32.0
      %v835 = vmul.f32 32.0, %v834
      %v836 = vsub.f32 1.0, %v835
      %v837 = vmul.f32 %v834, %v836
      %v838 = vadd.f32 %v834, %v837
      %vm839 = vweird.f32 %v834
      %v840 = vsel %vm839, %v834, %v838
      %v841 = vmul.f32 %v830, %v840
      %v842 = vmul.f32 %v833, %v840
      %v843 = vsub.f32 %v824, %v841
      %v844 = vsub.f32 %v825, %v842
      %v845 = vmul.f32 %v843, %v843
      %v846 = vmul.f32 %v844, %v844
      %v847 = vsel %vm805, %v845, 0.0
      %848 = vadd.xlane.f32.xlu0 %v847
      %v849 = vpop.xlane.xlu0 %848
      %v850 = vsel %vm805, %v846, 0.0
      %851 = vadd.xlane.f32.xlu0 %v850
      %v852 = vpop.xlane.xlu0 %851
      %v853 = vmul.f32 %v849, %v840
      %v854 = vmul.f32 %v852, %v840
      %v855 = vadd.f32 %v853, 1e-05
      %v856 = vadd.f32 %v854, 1e-05
      %v857 = vrsqrt.pop %v855
      %v858 = vmul.f32 %v857, %v855
      %v859 = vmul.f32 %v858, %v857
      %v860 = vmul.f32 0.5, %v859
      %v861 = vsub.f32 1.5, %v860
      %v862 = vmul.f32 %v857, %v861
      %vm863 = vweird.f32 %v855
      %vm864 = vweird.f32 %v857
      %vm865 = vmor %vm863, %vm864
      %v866 = vsel %vm865, %v857, %v862
      %v867 = vrsqrt.pop %v856
      %v868 = vmul.f32 %v867, %v856
      %v869 = vmul.f32 %v868, %v867
      %v870 = vmul.f32 0.5, %v869
      %v871 = vsub.f32 1.5, %v870
      %v872 = vmul.f32 %v867, %v871
      %vm873 = vweird.f32 %v856
      %vm874 = vweird.f32 %v867
      %vm875 = vmor %vm873, %vm874
      %v876 = vsel %vm875, %v867, %v872
      %v877 = vmul.f32 %v843, %v866
      %v878 = vmul.f32 %v844, %v876
      %v880 = vperm.slane %v826, 0
      %v882 = vmul.f32 %v877, %v880
      %v883 = vmul.f32 %v878, %v880
      %v885 = vperm.slane %v827, 0
      %v887 = vadd.f32 %v882, %v885
      %v888 = vadd.f32 %v883, %v885
      %v889 = vpack.c.bf16 %v888, %v887
      %v890 = vld [vmem:[%s9] sm:$0xf]
      %v891 = vld [vmem:[%s9 + $0x4] sm:$0xf]
      %v892 = vld [vmem:[%s9 + $0x8] sm:$0xf]
      %v893 = vld [vmem:[%s9 + $0xc] sm:$0xf]
      %v894 = vld [vmem:[%s10] sm:$0x1]
      %v896 = vperm.slane %v894, 0
      %v902 = vunpack.c.l.b16 %v890
      %v903 = vunpack.c.l.b16 %v891
      %v904 = vunpack.c.l.b16 %v892
      %v905 = vunpack.c.l.b16 %v893
      %v906 = vpack.c.b16 %v903, %v902
      %v907 = vpack.c.b16 %v905, %v904
      %v911 = vsel %vm805, %v889, 0
      %913 = vmatpush.bf16.msra.mxu0 0
      %914 = vmatpush.bf16.msra.mxu0 0
      %915 = vmatpush.bf16.msra.mxu0 0
      %916 = vmatpush.bf16.msra.mxu0 0
      %917 = vmatpush.bf16.msra.mxu0 0
      %918 = vmatpush.bf16.msra.mxu0 0
      %919 = vmatpush.bf16.msra.mxu0 %v907
      %920 = vmatpush.bf16.msra.mxu0 %v906
      %921 = vmatmul.bf16.gmra.mxu0 %v911
      %v922 = vpop.f32.mrf.mxu0
      %v923 = vadd.f32 %v896, %v922
      %v924 = vpop.f32.mrf.mxu0
      %v925 = vadd.f32 %v896, %v924
      %926 = vdwg.mxu0
      %v927 = vmax.f32 %v923, 0.0
      %v928 = vmax.f32 %v925, 0.0
      %v929 = vpack.c.bf16 %v928, %v927
      %v930 = vld [vmem:[%s11] sm:$0xf]
      %v931 = vld [vmem:[%s11 + $0x4] sm:$0xf]
      %v932 = vld [vmem:[%s11 + $0x8] sm:$0xf]
      %v933 = vld [vmem:[%s11 + $0xc] sm:$0xf]
      %v934 = vld [vmem:[%s11 + $0x10] sm:$0xf]
      %v935 = vld [vmem:[%s11 + $0x14] sm:$0xf]
      %v936 = vld [vmem:[%s11 + $0x18] sm:$0xf]
      %v937 = vld [vmem:[%s11 + $0x1c] sm:$0xf]
      %v938 = vld [vmem:[#allocation6] sm:$0x1]
      %v940 = vperm.slane %v938, 0
      %v950 = vunpack.c.l.b16 %v930
      %v951 = vunpack.c.l.b16 %v931
      %v952 = vunpack.c.l.b16 %v932
      %v953 = vunpack.c.l.b16 %v933
      %v954 = vunpack.c.l.b16 %v934
      %v955 = vunpack.c.l.b16 %v935
      %v956 = vunpack.c.l.b16 %v936
      %v957 = vunpack.c.l.b16 %v937
      %v958 = vpack.c.b16 %v951, %v950
      %v959 = vpack.c.b16 %v953, %v952
      %v960 = vpack.c.b16 %v955, %v954
      %v961 = vpack.c.b16 %v957, %v956
      %vm966 = vcmask 523264
      %v968 = vsel %vm966, %v929, 0
      %970 = vmatpush.bf16.msra.mxu0 0
      %971 = vmatpush.bf16.msra.mxu0 0
      %972 = vmatpush.bf16.msra.mxu0 0
      %973 = vmatpush.bf16.msra.mxu0 0
      %974 = vmatpush.bf16.msra.mxu0 %v961
      %975 = vmatpush.bf16.msra.mxu0 %v960
      %976 = vmatpush.bf16.msra.mxu0 %v959
      %977 = vmatpush.bf16.msra.mxu0 %v958
      %978 = vmatmul.bf16.gmra.mxu0 %v968
      %v979 = vpop.f32.mrf.mxu0
      %v980 = vadd.f32 %v940, %v979
      %v981 = vpop.f32.mrf.mxu0
      %v982 = vadd.f32 %v940, %v981
      %983 = vdwg.mxu0
      %v984 = vadd.f32 %v887, %v980
      %v985 = vadd.f32 %v888, %v982
      %v986 = vld [vmem:[#allocation8] sm:$0x1]
      %v987 = vld [vmem:[%s14] sm:$0x1]
      %v988 = vsel %vm805, %v984, 0.0
      %989 = vadd.xlane.f32.xlu0 %v988
      %v990 = vpop.xlane.xlu0 %989
      %v991 = vsel %vm805, %v985, 0.0
      %992 = vadd.xlane.f32.xlu0 %v991
      %v993 = vpop.xlane.xlu0 %992
      %v994 = vmul.f32 %v990, %v840
      %v995 = vmul.f32 %v993, %v840
      %v996 = vsub.f32 %v984, %v994
      %v997 = vsub.f32 %v985, %v995
      %v998 = vmul.f32 %v996, %v996
      %v999 = vmul.f32 %v997, %v997
      %v1000 = vsel %vm805, %v998, 0.0
      %1001 = vadd.xlane.f32.xlu0 %v1000
      %v1002 = vpop.xlane.xlu0 %1001
      %v1003 = vsel %vm805, %v999, 0.0
      %1004 = vadd.xlane.f32.xlu0 %v1003
      %v1005 = vpop.xlane.xlu0 %1004
      %v1006 = vmul.f32 %v1002, %v840
      %v1007 = vmul.f32 %v1005, %v840
      %v1008 = vadd.f32 %v1006, 1e-05
      %v1009 = vadd.f32 %v1007, 1e-05
      %v1010 = vrsqrt.pop %v1008
      %v1011 = vmul.f32 %v1010, %v1008
      %v1012 = vmul.f32 %v1011, %v1010
      %v1013 = vmul.f32 0.5, %v1012
      %v1014 = vsub.f32 1.5, %v1013
      %v1015 = vmul.f32 %v1010, %v1014
      %vm1016 = vweird.f32 %v1008
      %vm1017 = vweird.f32 %v1010
      %vm1018 = vmor %vm1016, %vm1017
      %v1019 = vsel %vm1018, %v1010, %v1015
      %v1020 = vrsqrt.pop %v1009
      %v1021 = vmul.f32 %v1020, %v1009
      %v1022 = vmul.f32 %v1021, %v1020
      %v1023 = vmul.f32 0.5, %v1022
      %v1024 = vsub.f32 1.5, %v1023
      %v1025 = vmul.f32 %v1020, %v1024
      %vm1026 = vweird.f32 %v1009
      %vm1027 = vweird.f32 %v1020
      %vm1028 = vmor %vm1026, %vm1027
      %v1029 = vsel %vm1028, %v1020, %v1025
      %v1030 = vmul.f32 %v996, %v1019
      %v1031 = vmul.f32 %v997, %v1029
      %v1033 = vperm.slane %v986, 0
      %v1035 = vmul.f32 %v1030, %v1033
      %v1036 = vmul.f32 %v1031, %v1033
      %v1038 = vperm.slane %v987, 0
      %v1040 = vadd.f32 %v1035, %v1038
      %v1041 = vadd.f32 %v1036, %v1038
      %1042 = vst.msk [vmem:[%s15] sm:$0xff] %vm805, %v1040
      %1043 = vst.msk [vmem:[%s15 + $0x8] sm:$0xff] %vm805, %v1041
    $region77: #{multi_attention_forward.5} parent=1 // pred_fallthru
      _
    // Predicated region
    $region78: #{multi_attention_forward.5} parent=1 // pred_check
      _
    $region79: #{multi_attention_forward.5} parent=1 // pred_check_branch
      %1045 = sbr.rel (0) target = $region81
    $region80: #{multi_attention_forward.5} parent=1 // pred_region
      _
    $region81: #{multi_attention_forward.5} parent=1 // pred_fallthru
      _
    // Predicated region
    $region82: #{multi_attention_forward.5} parent=1 // pred_check
      _
    $region83: #{multi_attention_forward.5} parent=1 // pred_check_branch
      %1047 = sbr.rel (0) target = $region85
    $region84: #{multi_attention_forward.5} parent=1 // pred_region
      _
    $region85: #{multi_attention_forward.5} parent=1 // pred_fallthru
      _
    %1048 = vsyncpa [#allocation7], 1
    %1049 = vsyncpa [#allocation9], 1

// kernel: multi_attention_forward.7
$region0: #{multi_attention_forward.7}
  #allocation0 [shape = 'u32[]', space=smem, size = 0x4, offset = 0x4, fixed_abs, tag = 'smem constant byte address 0x4 - core index']
  #allocation1 [shape = 'u32[72,128]{1,0:T(1,128)}', space=vmem, size = 0x9000, scoped, tag = 'internal scratch']
  #allocation2 [shape = 'bf16[16,32]{1,0:T(8,128)(2,1)}', space=vmem, size = 0x1000, scoped, tag = 'scratch operand']
  #allocation3 [shape = 'f32[4,16,1]{2,1,0:T(8,128)}', space=vmem, size = 0x8000, scoped, tag = 'scratch operand']
  #allocation4 [shape = 'f32[4,16,1]{2,1,0:T(8,128)}', space=vmem, size = 0x8000, scoped, tag = 'scratch operand']
  #allocation5 [shape = 'f32[16,32]{1,0:T(8,128)}', space=vmem, size = 0x2000, scoped, tag = 'scratch operand']
  %s0 = inlined_call_operand.vmem [shape: f32[16,32], index: 0, kind: input, shape index: {}]
  %s1 = inlined_call_operand.vmem [shape: bf16[16,32], index: 1, kind: input, shape index: {}]
  %s2 = inlined_call_operand.vmem [shape: bf16[16,32], index: 2, kind: input, shape index: {}]
  %s3 = inlined_call_operand.vmem [shape: bf16[32,32], index: 3, kind: input, shape index: {}]
  %s4 = inlined_call_operand.vmem [shape: f32[1,32], index: 4, kind: input, shape index: {}]
  %s5 = inlined_call_operand.vmem [shape: bf16[32,32], index: 5, kind: input, shape index: {}]
  %s6 = inlined_call_operand.vmem [shape: f32[1,32], index: 6, kind: input, shape index: {}]
  %s7 = inlined_call_operand.vmem [shape: f32[1,32], index: 7, kind: input, shape index: {}]
  %s8 = inlined_call_operand.hbm [shape: f32[1,32], index: 8, kind: input, shape index: {}]
  %s9 = inlined_call_operand.vmem [shape: bf16[32,64], index: 9, kind: input, shape index: {}]
  %s10 = inlined_call_operand.hbm [shape: f32[1,64], index: 10, kind: input, shape index: {}]
  %s11 = inlined_call_operand.vmem [shape: bf16[64,32], index: 11, kind: input, shape index: {}]
  %s12 = inlined_call_operand.hbm [shape: f32[1,32], index: 12, kind: input, shape index: {}]
  %s13 = inlined_call_operand.hbm [shape: f32[1,32], index: 13, kind: input, shape index: {}]
  %s14 = inlined_call_operand.hbm [shape: f32[1,32], index: 14, kind: input, shape index: {}]
  %s15 = inlined_call_operand.vmem [shape: f32[16,32], index: 15, kind: output, shape index: {}]
  %s16 = sld [smem:[#allocation0]]
  $region98: #{multi_attention_forward.7} parent=0
    _
  %s18 = ssub.s32 1, %s16
  %s19 = scalar_select 0, %s18, %s16
  $region1: #{multi_attention_forward.7} parent=0
    #allocation6 [shape = 'u8[512]{0}', space=vmem, size = 0x400, scoped, tag = 'input window, operand 8, single buffered']
    #allocation7 [shape = 's32[1]{0}', space=sflag, size = 0x4, scoped, tag = 'scoped memory for multi_attention_forward.7']
    #allocation8 [shape = 'u8[512]{0}', space=vmem, size = 0x400, scoped, tag = 'input window, operand 10, single buffered']
    #allocation9 [shape = 's32[1]{0}', space=sflag, size = 0x4, scoped, tag = 'scoped memory for multi_attention_forward.7']
    #allocation10 [shape = 'u8[512]{0}', space=vmem, size = 0x400, scoped, tag = 'input window, operand 12, single buffered']
    #allocation11 [shape = 'u8[512]{0}', space=vmem, size = 0x400, scoped, tag = 'input window, operand 13, single buffered']
    #allocation12 [shape = 's32[1]{0}', space=sflag, size = 0x4, scoped, tag = 'scoped memory for multi_attention_forward.7']
    #allocation13 [shape = 'u8[512]{0}', space=vmem, size = 0x400, scoped, tag = 'input window, operand 14, single buffered']
    %20 = vsyncpa [#allocation7], 0
    %21 = vsyncpa [#allocation9], 0
    %22 = vsyncpa [#allocation12], 0
    // Predicated region
    $region2: #{multi_attention_forward.7} parent=1 // pred_check
      _
    $region3: #{multi_attention_forward.7} parent=1 // pred_check_branch
      %24 = sbr.rel (0) target = $region5
    $region4: #{multi_attention_forward.7} parent=1 // pred_region
      _
    $region5: #{multi_attention_forward.7} parent=1 // pred_fallthru
      _
    // Predicated region
    $region6: #{multi_attention_forward.7} parent=1 // pred_check
      _
    $region7: #{multi_attention_forward.7} parent=1 // pred_check_branch
      %26 = sbr.rel (0) target = $region9
    $region8: #{multi_attention_forward.7} parent=1 // pred_region
      _
    $region9: #{multi_attention_forward.7} parent=1 // pred_fallthru
      _
    // Predicated region
    $region10: #{multi_attention_forward.7} parent=1 // pred_check
      _
    $region11: #{multi_attention_forward.7} parent=1 // pred_check_branch
      %28 = sbr.rel (0) target = $region13
    $region12: #{multi_attention_forward.7} parent=1 // pred_region
      _
    $region13: #{multi_attention_forward.7} parent=1 // pred_fallthru
      _
    // Predicated region
    $region14: #{multi_attention_forward.7} parent=1 // pred_check
      _
    $region15: #{multi_attention_forward.7} parent=1 // pred_check_branch
      %30 = sbr.rel (0) target = $region17
    $region16: #{multi_attention_forward.7} parent=1 // pred_region
      _
    $region17: #{multi_attention_forward.7} parent=1 // pred_fallthru
      _
    // Predicated region
    $region18: #{multi_attention_forward.7} parent=1 // pred_check
      _
    $region19: #{multi_attention_forward.7} parent=1 // pred_check_branch
      %32 = sbr.rel (0) target = $region21
    $region20: #{multi_attention_forward.7} parent=1 // pred_region
      _
    $region21: #{multi_attention_forward.7} parent=1 // pred_fallthru
      _
    // Predicated region
    $region22: #{multi_attention_forward.7} parent=1 // pred_check
      _
    $region23: #{multi_attention_forward.7} parent=1 // pred_check_branch
      %34 = sbr.rel (0) target = $region25
    $region24: #{multi_attention_forward.7} parent=1 // pred_region
      _
    $region25: #{multi_attention_forward.7} parent=1 // pred_fallthru
      _
    // Predicated region
    $region26: #{multi_attention_forward.7} parent=1 // pred_check
      _
    $region27: #{multi_attention_forward.7} parent=1 // pred_check_branch
      %36 = sbr.rel (0) target = $region29
    $region28: #{multi_attention_forward.7} parent=1 // pred_region
      _
    $region29: #{multi_attention_forward.7} parent=1 // pred_fallthru
      _
    // Predicated region
    $region30: #{multi_attention_forward.7} parent=1 // pred_check
      _
    $region31: #{multi_attention_forward.7} parent=1 // pred_check_branch
      %38 = sbr.rel (0) target = $region33
    $region32: #{multi_attention_forward.7} parent=1 // pred_region
      _
    $region33: #{multi_attention_forward.7} parent=1 // pred_fallthru
      _
    // Predicated region
    $region34: #{multi_attention_forward.7} parent=1 // pred_check
      _
    $region35: #{multi_attention_forward.7} parent=1 // pred_check_branch
      %40 = sbr.rel (0) target = $region37
    $region36: #{multi_attention_forward.7} parent=1 // pred_region
      %42 = vsyncadd [#allocation7], 0
      %s44 = sshll.u32 %s8, 4
      %s45 = int_to_ptr.hbm [resolvable:$true] %s44
      %s46 = sshll.u32 [#allocation6], 4
      %s47 = int_to_ptr.vmem [resolvable:$true] %s46
      %49 = dma.hbm_to_vmem [thread:$0]  %s45, 16, %s47, [#allocation7]
    $region37: #{multi_attention_forward.7} parent=1 // pred_fallthru
      _
    // Predicated region
    $region38: #{multi_attention_forward.7} parent=1 // pred_check
      _
    $region39: #{multi_attention_forward.7} parent=1 // pred_check_branch
      %51 = sbr.rel (0) target = $region41
    $region40: #{multi_attention_forward.7} parent=1 // pred_region
      _
    $region41: #{multi_attention_forward.7} parent=1 // pred_fallthru
      _
    // Predicated region
    $region42: #{multi_attention_forward.7} parent=1 // pred_check
      _
    $region43: #{multi_attention_forward.7} parent=1 // pred_check_branch
      %53 = sbr.rel (0) target = $region45
    $region44: #{multi_attention_forward.7} parent=1 // pred_region
      %55 = vsyncadd [#allocation9], 0
      %s57 = sshll.u32 %s10, 4
      %s58 = int_to_ptr.hbm [resolvable:$true] %s57
      %s59 = sshll.u32 [#allocation8], 4
      %s60 = int_to_ptr.vmem [resolvable:$true] %s59
      %62 = dma.hbm_to_vmem [thread:$0]  %s58, 16, %s60, [#allocation9]
    $region45: #{multi_attention_forward.7} parent=1 // pred_fallthru
      _
    // Predicated region
    $region46: #{multi_attention_forward.7} parent=1 // pred_check
      _
    $region47: #{multi_attention_forward.7} parent=1 // pred_check_branch
      %64 = sbr.rel (0) target = $region49
    $region48: #{multi_attention_forward.7} parent=1 // pred_region
      _
    $region49: #{multi_attention_forward.7} parent=1 // pred_fallthru
      _
    // Predicated region
    $region50: #{multi_attention_forward.7} parent=1 // pred_check
      _
    $region51: #{multi_attention_forward.7} parent=1 // pred_check_branch
      %66 = sbr.rel (0) target = $region53
    $region52: #{multi_attention_forward.7} parent=1 // pred_region
      %68 = vsyncadd [#allocation9], 0
      %s70 = sshll.u32 %s12, 4
      %s71 = int_to_ptr.hbm [resolvable:$true] %s70
      %s72 = sshll.u32 [#allocation10], 4
      %s73 = int_to_ptr.vmem [resolvable:$true] %s72
      %75 = dma.hbm_to_vmem [thread:$0]  %s71, 16, %s73, [#allocation9]
    $region53: #{multi_attention_forward.7} parent=1 // pred_fallthru
      _
    // Predicated region
    $region54: #{multi_attention_forward.7} parent=1 // pred_check
      _
    $region55: #{multi_attention_forward.7} parent=1 // pred_check_branch
      %77 = sbr.rel (0) target = $region57
    $region56: #{multi_attention_forward.7} parent=1 // pred_region
      %79 = vsyncadd [#allocation12], 0
      %s81 = sshll.u32 %s13, 4
      %s82 = int_to_ptr.hbm [resolvable:$true] %s81
      %s83 = sshll.u32 [#allocation11], 4
      %s84 = int_to_ptr.vmem [resolvable:$true] %s83
      %86 = dma.hbm_to_vmem [thread:$0]  %s82, 16, %s84, [#allocation12]
    $region57: #{multi_attention_forward.7} parent=1 // pred_fallthru
      _
    // Predicated region
    $region58: #{multi_attention_forward.7} parent=1 // pred_check
      _
    $region59: #{multi_attention_forward.7} parent=1 // pred_check_branch
      %88 = sbr.rel (0) target = $region61
    $region60: #{multi_attention_forward.7} parent=1 // pred_region
      %90 = vsyncadd [#allocation12], 0
      %s92 = sshll.u32 %s14, 4
      %s93 = int_to_ptr.hbm [resolvable:$true] %s92
      %s94 = sshll.u32 [#allocation13], 4
      %s95 = int_to_ptr.vmem [resolvable:$true] %s94
      %97 = dma.hbm_to_vmem [thread:$0]  %s93, 16, %s95, [#allocation12]
    $region61: #{multi_attention_forward.7} parent=1 // pred_fallthru
      _
    // Predicated region
    $region62: #{multi_attention_forward.7} parent=1 // pred_check
      _
    $region63: #{multi_attention_forward.7} parent=1 // pred_check_branch
      %99 = sbr.rel (0) target = $region65
    $region64: #{multi_attention_forward.7} parent=1 // pred_region
      %101 = dma.done [#allocation7], 16
    $region65: #{multi_attention_forward.7} parent=1 // pred_fallthru
      _
    // Predicated region
    $region66: #{multi_attention_forward.7} parent=1 // pred_check
      _
    $region67: #{multi_attention_forward.7} parent=1 // pred_check_branch
      %103 = sbr.rel (0) target = $region69
    $region68: #{multi_attention_forward.7} parent=1 // pred_region
      %105 = dma.done [#allocation9], 16
    $region69: #{multi_attention_forward.7} parent=1 // pred_fallthru
      _
    // Predicated region
    $region70: #{multi_attention_forward.7} parent=1 // pred_check
      _
    $region71: #{multi_attention_forward.7} parent=1 // pred_check_branch
      %107 = sbr.rel (0) target = $region73
    $region72: #{multi_attention_forward.7} parent=1 // pred_region
      %109 = dma.done [#allocation9], 16
    $region73: #{multi_attention_forward.7} parent=1 // pred_fallthru
      _
    // Predicated region
    $region74: #{multi_attention_forward.7} parent=1 // pred_check
      _
    $region75: #{multi_attention_forward.7} parent=1 // pred_check_branch
      %111 = sbr.rel (0) target = $region77
    $region76: #{multi_attention_forward.7} parent=1 // pred_region
      %113 = dma.done [#allocation12], 16
    $region77: #{multi_attention_forward.7} parent=1 // pred_fallthru
      _
    // Predicated region
    $region78: #{multi_attention_forward.7} parent=1 // pred_check
      _
    $region79: #{multi_attention_forward.7} parent=1 // pred_check_branch
      %115 = sbr.rel (0) target = $region81
    $region80: #{multi_attention_forward.7} parent=1 // pred_region
      %117 = dma.done [#allocation12], 16
    $region81: #{multi_attention_forward.7} parent=1 // pred_fallthru
      _
    %p119 = scmp.eq.s32.totalorder 0, 0
    // Predicated region
    $region82: #{multi_attention_forward.7} parent=1 // pred_check
      %p120 = pneg %p119
    $region83: #{multi_attention_forward.7} parent=1 // pred_check_branch
      %122 = sbr.rel (%p120) target = $region85
    $region84: #{multi_attention_forward.7} parent=1 // pred_region
      %v123 = vld [vmem:[%s0] sm:$0xff]
      %v124 = vld [vmem:[%s0 + $0x8] sm:$0xff]
      %v125 = vpack.c.bf16 %v124, %v123
      %v126 = vld [vmem:[%s3] sm:$0xf]
      %v127 = vld [vmem:[%s3 + $0x4] sm:$0xf]
      %v128 = vld [vmem:[%s3 + $0x8] sm:$0xf]
      %v129 = vld [vmem:[%s3 + $0xc] sm:$0xf]
      %v130 = vld [vmem:[%s4] sm:$0x1]
      %v132 = vperm.slane %v130, 0
      %v138 = vunpack.c.l.b16 %v126
      %v139 = vunpack.c.l.b16 %v127
      %v140 = vunpack.c.l.b16 %v128
      %v141 = vunpack.c.l.b16 %v129
      %v142 = vpack.c.b16 %v139, %v138
      %v143 = vpack.c.b16 %v141, %v140
      %vm146 = vcmask 261120
      %v148 = vsel %vm146, %v125, 0
      %150 = vmatpush.bf16.msra.mxu0 0
      %151 = vmatpush.bf16.msra.mxu0 0
      %152 = vmatpush.bf16.msra.mxu0 0
      %153 = vmatpush.bf16.msra.mxu0 0
      %154 = vmatpush.bf16.msra.mxu0 0
      %155 = vmatpush.bf16.msra.mxu0 0
      %156 = vmatpush.bf16.msra.mxu0 %v143
      %157 = vmatpush.bf16.msra.mxu0 %v142
      %158 = vmatmul.bf16.gmra.mxu0 %v148
      %v159 = vpop.f32.mrf.mxu0
      %v160 = vadd.f32 %v132, %v159
      %v161 = vpop.f32.mrf.mxu0
      %v162 = vadd.f32 %v132, %v161
      %163 = vdwg.mxu0
      %v164 = vpack.c.bf16 %v160, %v160
      %v165 = vpack.c.bf16 %v162, %v162
      %vm166 = vcmask 257024
      %167 = vst.msk [vmem:[#allocation2] sm:$0xf] %vm166, %v164
      %168 = vst.msk [vmem:[#allocation2 + $0x4] sm:$0xf] %vm166, %v165
      %vm169 = vcmask 7168
      %170 = vst.msk [vmem:[#allocation3] sm:$0xff] %vm169, -inf
      %171 = vst.msk [vmem:[#allocation3 + $0x8] sm:$0xff] %vm169, -inf
      %172 = vst.msk [vmem:[#allocation3 + $0x10] sm:$0xff] %vm169, -inf
      %173 = vst.msk [vmem:[#allocation3 + $0x18] sm:$0xff] %vm169, -inf
      %174 = vst.msk [vmem:[#allocation3 + $0x20] sm:$0xff] %vm169, -inf
      %175 = vst.msk [vmem:[#allocation3 + $0x28] sm:$0xff] %vm169, -inf
      %176 = vst.msk [vmem:[#allocation3 + $0x30] sm:$0xff] %vm169, -inf
      %177 = vst.msk [vmem:[#allocation3 + $0x38] sm:$0xff] %vm169, -inf
      %178 = vst.msk [vmem:[#allocation4] sm:$0xff] %vm169, 0.0
      %179 = vst.msk [vmem:[#allocation4 + $0x8] sm:$0xff] %vm169, 0.0
      %180 = vst.msk [vmem:[#allocation4 + $0x10] sm:$0xff] %vm169, 0.0
      %181 = vst.msk [vmem:[#allocation4 + $0x18] sm:$0xff] %vm169, 0.0
      %182 = vst.msk [vmem:[#allocation4 + $0x20] sm:$0xff] %vm169, 0.0
      %183 = vst.msk [vmem:[#allocation4 + $0x28] sm:$0xff] %vm169, 0.0
      %184 = vst.msk [vmem:[#allocation4 + $0x30] sm:$0xff] %vm169, 0.0
      %185 = vst.msk [vmem:[#allocation4 + $0x38] sm:$0xff] %vm169, 0.0
      %186 = vst.msk [vmem:[#allocation5] sm:$0xff] %vm146, 0.0
      %187 = vst.msk [vmem:[#allocation5 + $0x8] sm:$0xff] %vm146, 0.0
    $region85: #{multi_attention_forward.7} parent=1 // pred_fallthru
      _
    %v188 = vld [vmem:[%s1] sm:$0xf]
    %v189 = vld [vmem:[%s1 + $0x4] sm:$0xf]
    %v190 = vld [vmem:[%s2] sm:$0xf]
    %v191 = vld [vmem:[%s2 + $0x4] sm:$0xf]
    %v192 = vlaneseq
    %v193 = vand.u32 %v192, 127
    %s194 = smul.u32 0, 16
    %v195 = vstv %s194
    %v196 = vadd.s32 %v193, %v195
    %vm197 = vcmp.lt.s32.totalorder %v196, 8
    %v198 = vld [vmem:[#allocation2] sm:$0xf]
    %v199 = vld [vmem:[#allocation2 + $0x4] sm:$0xf]
    %v202 = vunpack.c.l.b16 %v198
    %v203 = vunpack.c.l.b16 %v199
    %v204 = vpack.c.b16 %v203, %v202
    %v207 = vunpack.c.l.b16 %v188
    %v208 = vunpack.c.l.b16 %v189
    %v209 = vpack.c.b16 %v208, %v207
    %vm210 = vcmask 64512
    %v212 = vsel %vm210, %v204, 0
    %v215 = vsel %vm210, %v209, 0
    %217 = vmatpush.bf16.xpose.msra.mxu0 0
    %218 = vmatpush.bf16.xpose.msra.mxu0 0
    %219 = vmatpush.bf16.xpose.msra.mxu0 0
    %220 = vmatpush.bf16.xpose.msra.mxu0 0
    %221 = vmatpush.bf16.xpose.msra.mxu0 0
    %222 = vmatpush.bf16.xpose.msra.mxu0 0
    %223 = vmatpush.bf16.xpose.msra.mxu0 0
    %224 = vmatpush.bf16.xpose.msra.mxu0 %v215
    %225 = vmatmul.bf16.gmra.mxu0 %v212
    %v226 = vpop.f32.mrf.mxu0
    %v227 = vadd.f32 0.0, %v226
    %v228 = vpop.f32.mrf.mxu0
    %v229 = vadd.f32 0.0, %v228
    %230 = vdwg.mxu0
    %v231 = vsel %vm197, 1, 0
    %vm232 = vcmp.eq.s32.totalorder %v231, 1
    %v233 = vsel %vm232, %v227, -1e+30
    %v234 = vsel %vm232, %v229, -1e+30
    %v235 = vld [vmem:[#allocation3] sm:$0xff]
    %v236 = vld [vmem:[#allocation3 + $0x8] sm:$0xff]
    %vm237 = vcmask 130048
    %v238 = vsel %vm237, %v233, -inf
    %239 = vmax.xlane.f32.xlu0 %v238
    %v240 = vpop.xlane.xlu0 %239
    %v241 = vsel %vm237, %v234, -inf
    %242 = vmax.xlane.f32.xlu0 %v241
    %v243 = vpop.xlane.xlu0 %242
    %v244 = vmax.f32 %v235, %v240
    %v245 = vmax.f32 %v236, %v243
    %v246 = vsub.f32 %v235, %v244
    %v247 = vsub.f32 %v236, %v245
    %v248 = vmul.f32 %v246, 1.442695
    %v249 = vpow.pop %v248
    %v250 = vmul.f32 %v247, 1.442695
    %v251 = vpow.pop %v250
    %253 = vset.pattern.permute.xlu0 0
    %254 = vperm.xlu0 %253, %v244
    %v255 = vpop.permute.xlu0 %254
    %258 = vset.pattern.permute.xlu0 0
    %259 = vperm.xlu0 %258, %v245
    %v260 = vpop.permute.xlu0 %259
    %v262 = vsub.f32 %v233, %v255
    %v263 = vsub.f32 %v234, %v260
    %v264 = vmul.f32 %v262, 1.442695
    %v265 = vpow.pop %v264
    %v266 = vmul.f32 %v263, 1.442695
    %v267 = vpow.pop %v266
    %v268 = vld [vmem:[#allocation4] sm:$0xff]
    %v269 = vld [vmem:[#allocation4 + $0x8] sm:$0xff]
    %v270 = vmul.f32 %v249, %v268
    %v271 = vmul.f32 %v251, %v269
    %v272 = vsel %vm237, %v265, 0.0
    %273 = vadd.xlane.f32.xlu0 %v272
    %v274 = vpop.xlane.xlu0 %273
    %v275 = vsel %vm237, %v267, 0.0
    %276 = vadd.xlane.f32.xlu0 %v275
    %v277 = vpop.xlane.xlu0 %276
    %v278 = vadd.f32 %v270, %v274
    %v279 = vadd.f32 %v271, %v277
    %vm280 = vcmask 7168
    %281 = vst.msk [vmem:[#allocation4] sm:$0xff] %vm280, %v278
    %282 = vst.msk [vmem:[#allocation4 + $0x8] sm:$0xff] %vm280, %v279
    %v283 = vpack.c.bf16 %v267, %v265
    %v286 = vunpack.c.l.b16 %v190
    %v287 = vunpack.c.l.b16 %v191
    %v288 = vpack.c.b16 %v287, %v286
    %v291 = vsel %vm237, %v283, 0
    %293 = vmatpush.bf16.msra.mxu0 0
    %294 = vmatpush.bf16.msra.mxu0 0
    %295 = vmatpush.bf16.msra.mxu0 0
    %296 = vmatpush.bf16.msra.mxu0 0
    %297 = vmatpush.bf16.msra.mxu0 0
    %298 = vmatpush.bf16.msra.mxu0 0
    %299 = vmatpush.bf16.msra.mxu0 0
    %300 = vmatpush.bf16.msra.mxu0 %v288
    %301 = vmatmul.bf16.gmra.mxu0 %v291
    %v302 = vpop.f32.mrf.mxu0
    %v303 = vadd.f32 0.0, %v302
    %v304 = vpop.f32.mrf.mxu0
    %v305 = vadd.f32 0.0, %v304
    %306 = vdwg.mxu0
    %v307 = vld [vmem:[#allocation5] sm:$0xff]
    %v308 = vld [vmem:[#allocation5 + $0x8] sm:$0xff]
    %310 = vset.pattern.permute.xlu0 0
    %311 = vperm.xlu0 %310, %v249
    %v312 = vpop.permute.xlu0 %311
    %315 = vset.pattern.permute.xlu0 0
    %316 = vperm.xlu0 %315, %v251
    %v317 = vpop.permute.xlu0 %316
    %v319 = vmul.f32 %v312, %v307
    %v320 = vmul.f32 %v317, %v308
    %v321 = vadd.f32 %v319, %v303
    %v322 = vadd.f32 %v320, %v305
    %323 = vst.msk [vmem:[#allocation5] sm:$0xff] %vm210, %v321
    %324 = vst.msk [vmem:[#allocation5 + $0x8] sm:$0xff] %vm210, %v322
    %325 = vst.msk [vmem:[#allocation3] sm:$0xff] %vm280, %v244
    %326 = vst.msk [vmem:[#allocation3 + $0x8] sm:$0xff] %vm280, %v245
    %v327 = vld [vmem:[#allocation2] sm:$0xf]
    %v328 = vld [vmem:[#allocation2 + $0x4] sm:$0xf]
    %v331 = vunpack.c.l.b16 %v327
    %v332 = vunpack.c.l.b16 %v328
    %v333 = vpack.c.b16 %v332, %v331
    %334 = vrot.lane.b32.xlu0 %v333, 120
    %v335 = vpop.permute.xlu0 %334
    %336 = vrot.lane.b32.xlu0 %v209, 120
    %v337 = vpop.permute.xlu0 %336
    %v339 = vsel %vm210, %v335, 0
    %v342 = vsel %vm210, %v337, 0
    %344 = vmatpush.bf16.xpose.msra.mxu0 0
    %345 = vmatpush.bf16.xpose.msra.mxu0 0
    %346 = vmatpush.bf16.xpose.msra.mxu0 0
    %347 = vmatpush.bf16.xpose.msra.mxu0 0
    %348 = vmatpush.bf16.xpose.msra.mxu0 0
    %349 = vmatpush.bf16.xpose.msra.mxu0 0
    %350 = vmatpush.bf16.xpose.msra.mxu0 0
    %351 = vmatpush.bf16.xpose.msra.mxu0 %v342
    %352 = vmatmul.bf16.gmra.mxu0 %v339
    %v353 = vpop.f32.mrf.mxu0
    %v354 = vadd.f32 0.0, %v353
    %v355 = vpop.f32.mrf.mxu0
    %v356 = vadd.f32 0.0, %v355
    %357 = vdwg.mxu0
    %v358 = vsel %vm232, %v354, -1e+30
    %v359 = vsel %vm232, %v356, -1e+30
    %s360 = scalar_lea.vmem [#allocation3], 16
    %v361 = vld [vmem:[%s360] sm:$0xff]
    %v362 = vld [vmem:[%s360 + $0x8] sm:$0xff]
    %v363 = vsel %vm237, %v358, -inf
    %364 = vmax.xlane.f32.xlu0 %v363
    %v365 = vpop.xlane.xlu0 %364
    %v366 = vsel %vm237, %v359, -inf
    %367 = vmax.xlane.f32.xlu0 %v366
    %v368 = vpop.xlane.xlu0 %367
    %v369 = vmax.f32 %v361, %v365
    %v370 = vmax.f32 %v362, %v368
    %v371 = vsub.f32 %v361, %v369
    %v372 = vsub.f32 %v362, %v370
    %v373 = vmul.f32 %v371, 1.442695
    %v374 = vpow.pop %v373
    %v375 = vmul.f32 %v372, 1.442695
    %v376 = vpow.pop %v375
    %378 = vset.pattern.permute.xlu0 0
    %379 = vperm.xlu0 %378, %v369
    %v380 = vpop.permute.xlu0 %379
    %383 = vset.pattern.permute.xlu0 0
    %384 = vperm.xlu0 %383, %v370
    %v385 = vpop.permute.xlu0 %384
    %v387 = vsub.f32 %v358, %v380
    %v388 = vsub.f32 %v359, %v385
    %v389 = vmul.f32 %v387, 1.442695
    %v390 = vpow.pop %v389
    %v391 = vmul.f32 %v388, 1.442695
    %v392 = vpow.pop %v391
    %s393 = scalar_lea.vmem [#allocation4], 16
    %v394 = vld [vmem:[%s393] sm:$0xff]
    %v395 = vld [vmem:[%s393 + $0x8] sm:$0xff]
    %v396 = vmul.f32 %v374, %v394
    %v397 = vmul.f32 %v376, %v395
    %v398 = vsel %vm237, %v390, 0.0
    %399 = vadd.xlane.f32.xlu0 %v398
    %v400 = vpop.xlane.xlu0 %399
    %v401 = vsel %vm237, %v392, 0.0
    %402 = vadd.xlane.f32.xlu0 %v401
    %v403 = vpop.xlane.xlu0 %402
    %v404 = vadd.f32 %v396, %v400
    %v405 = vadd.f32 %v397, %v403
    %406 = vst.msk [vmem:[%s393] sm:$0xff] %vm280, %v404
    %407 = vst.msk [vmem:[%s393 + $0x8] sm:$0xff] %vm280, %v405
    %v408 = vpack.c.bf16 %v392, %v390
    %409 = vrot.lane.b32.xlu0 %v288, 120
    %v410 = vpop.permute.xlu0 %409
    %v413 = vsel %vm237, %v408, 0
    %415 = vmatpush.bf16.msra.mxu0 0
    %416 = vmatpush.bf16.msra.mxu0 0
    %417 = vmatpush.bf16.msra.mxu0 0
    %418 = vmatpush.bf16.msra.mxu0 0
    %419 = vmatpush.bf16.msra.mxu0 0
    %420 = vmatpush.bf16.msra.mxu0 0
    %421 = vmatpush.bf16.msra.mxu0 0
    %422 = vmatpush.bf16.msra.mxu0 %v410
    %423 = vmatmul.bf16.gmra.mxu0 %v413
    %v424 = vpop.f32.mrf.mxu0
    %v425 = vadd.f32 0.0, %v424
    %v426 = vpop.f32.mrf.mxu0
    %v427 = vadd.f32 0.0, %v426
    %428 = vdwg.mxu0
    %v429 = vld [vmem:[#allocation5] sm:$0xff]
    %v430 = vld [vmem:[#allocation5 + $0x8] sm:$0xff]
    %432 = vset.pattern.permute.xlu0 0
    %433 = vperm.xlu0 %432, %v374
    %v434 = vpop.permute.xlu0 %433
    %437 = vset.pattern.permute.xlu0 0
    %438 = vperm.xlu0 %437, %v376
    %v439 = vpop.permute.xlu0 %438
    %v441 = vmul.f32 %v434, %v429
    %v442 = vmul.f32 %v439, %v430
    %445 = vrot.lane.b32.xlu0 %v425, 8
    %v446 = vpop.permute.xlu0 %445
    %447 = vrot.lane.b32.xlu0 %v427, 8
    %v448 = vpop.permute.xlu0 %447
    %v451 = vadd.f32 %v441, %v446
    %v452 = vadd.f32 %v442, %v448
    %vm453 = vcmask 130112
    %454 = vst.msk [vmem:[#allocation5] sm:$0xff] %vm453, %v451
    %455 = vst.msk [vmem:[#allocation5 + $0x8] sm:$0xff] %vm453, %v452
    %456 = vst.msk [vmem:[%s360] sm:$0xff] %vm280, %v369
    %457 = vst.msk [vmem:[%s360 + $0x8] sm:$0xff] %vm280, %v370
    %v458 = vld [vmem:[#allocation2] sm:$0xf]
    %v459 = vld [vmem:[#allocation2 + $0x4] sm:$0xf]
    %v462 = vunpack.c.l.b16 %v458
    %v463 = vunpack.c.l.b16 %v459
    %v464 = vpack.c.b16 %v463, %v462
    %465 = vrot.lane.b32.xlu0 %v464, 112
    %v466 = vpop.permute.xlu0 %465
    %467 = vrot.lane.b32.xlu0 %v209, 112
    %v468 = vpop.permute.xlu0 %467
    %v470 = vsel %vm210, %v466, 0
    %v473 = vsel %vm210, %v468, 0
    %475 = vmatpush.bf16.xpose.msra.mxu0 0
    %476 = vmatpush.bf16.xpose.msra.mxu0 0
    %477 = vmatpush.bf16.xpose.msra.mxu0 0
    %478 = vmatpush.bf16.xpose.msra.mxu0 0
    %479 = vmatpush.bf16.xpose.msra.mxu0 0
    %480 = vmatpush.bf16.xpose.msra.mxu0 0
    %481 = vmatpush.bf16.xpose.msra.mxu0 0
    %482 = vmatpush.bf16.xpose.msra.mxu0 %v473
    %483 = vmatmul.bf16.gmra.mxu0 %v470
    %v484 = vpop.f32.mrf.mxu0
    %v485 = vadd.f32 0.0, %v484
    %v486 = vpop.f32.mrf.mxu0
    %v487 = vadd.f32 0.0, %v486
    %488 = vdwg.mxu0
    %v489 = vsel %vm232, %v485, -1e+30
    %v490 = vsel %vm232, %v487, -1e+30
    %s491 = scalar_lea.vmem [#allocation3], 32
    %v492 = vld [vmem:[%s491] sm:$0xff]
    %v493 = vld [vmem:[%s491 + $0x8] sm:$0xff]
    %v494 = vsel %vm237, %v489, -inf
    %495 = vmax.xlane.f32.xlu0 %v494
    %v496 = vpop.xlane.xlu0 %495
    %v497 = vsel %vm237, %v490, -inf
    %498 = vmax.xlane.f32.xlu0 %v497
    %v499 = vpop.xlane.xlu0 %498
    %v500 = vmax.f32 %v492, %v496
    %v501 = vmax.f32 %v493, %v499
    %v502 = vsub.f32 %v492, %v500
    %v503 = vsub.f32 %v493, %v501
    %v504 = vmul.f32 %v502, 1.442695
    %v505 = vpow.pop %v504
    %v506 = vmul.f32 %v503, 1.442695
    %v507 = vpow.pop %v506
    %509 = vset.pattern.permute.xlu0 0
    %510 = vperm.xlu0 %509, %v500
    %v511 = vpop.permute.xlu0 %510
    %514 = vset.pattern.permute.xlu0 0
    %515 = vperm.xlu0 %514, %v501
    %v516 = vpop.permute.xlu0 %515
    %v518 = vsub.f32 %v489, %v511
    %v519 = vsub.f32 %v490, %v516
    %v520 = vmul.f32 %v518, 1.442695
    %v521 = vpow.pop %v520
    %v522 = vmul.f32 %v519, 1.442695
    %v523 = vpow.pop %v522
    %s524 = scalar_lea.vmem [#allocation4], 32
    %v525 = vld [vmem:[%s524] sm:$0xff]
    %v526 = vld [vmem:[%s524 + $0x8] sm:$0xff]
    %v527 = vmul.f32 %v505, %v525
    %v528 = vmul.f32 %v507, %v526
    %v529 = vsel %vm237, %v521, 0.0
    %530 = vadd.xlane.f32.xlu0 %v529
    %v531 = vpop.xlane.xlu0 %530
    %v532 = vsel %vm237, %v523, 0.0
    %533 = vadd.xlane.f32.xlu0 %v532
    %v534 = vpop.xlane.xlu0 %533
    %v535 = vadd.f32 %v527, %v531
    %v536 = vadd.f32 %v528, %v534
    %537 = vst.msk [vmem:[%s524] sm:$0xff] %vm280, %v535
    %538 = vst.msk [vmem:[%s524 + $0x8] sm:$0xff] %vm280, %v536
    %v539 = vpack.c.bf16 %v523, %v521
    %540 = vrot.lane.b32.xlu0 %v288, 112
    %v541 = vpop.permute.xlu0 %540
    %v544 = vsel %vm237, %v539, 0
    %546 = vmatpush.bf16.msra.mxu0 0
    %547 = vmatpush.bf16.msra.mxu0 0
    %548 = vmatpush.bf16.msra.mxu0 0
    %549 = vmatpush.bf16.msra.mxu0 0
    %550 = vmatpush.bf16.msra.mxu0 0
    %551 = vmatpush.bf16.msra.mxu0 0
    %552 = vmatpush.bf16.msra.mxu0 0
    %553 = vmatpush.bf16.msra.mxu0 %v541
    %554 = vmatmul.bf16.gmra.mxu0 %v544
    %v555 = vpop.f32.mrf.mxu0
    %v556 = vadd.f32 0.0, %v555
    %v557 = vpop.f32.mrf.mxu0
    %v558 = vadd.f32 0.0, %v557
    %559 = vdwg.mxu0
    %v560 = vld [vmem:[#allocation5] sm:$0xff]
    %v561 = vld [vmem:[#allocation5 + $0x8] sm:$0xff]
    %563 = vset.pattern.permute.xlu0 0
    %564 = vperm.xlu0 %563, %v505
    %v565 = vpop.permute.xlu0 %564
    %568 = vset.pattern.permute.xlu0 0
    %569 = vperm.xlu0 %568, %v507
    %v570 = vpop.permute.xlu0 %569
    %v572 = vmul.f32 %v565, %v560
    %v573 = vmul.f32 %v570, %v561
    %576 = vrot.lane.b32.xlu0 %v556, 16
    %v577 = vpop.permute.xlu0 %576
    %578 = vrot.lane.b32.xlu0 %v558, 16
    %v579 = vpop.permute.xlu0 %578
    %v582 = vadd.f32 %v572, %v577
    %v583 = vadd.f32 %v573, %v579
    %vm584 = vcmask 195712
    %585 = vst.msk [vmem:[#allocation5] sm:$0xff] %vm584, %v582
    %586 = vst.msk [vmem:[#allocation5 + $0x8] sm:$0xff] %vm584, %v583
    %587 = vst.msk [vmem:[%s491] sm:$0xff] %vm280, %v500
    %588 = vst.msk [vmem:[%s491 + $0x8] sm:$0xff] %vm280, %v501
    %v589 = vld [vmem:[#allocation2] sm:$0xf]
    %v590 = vld [vmem:[#allocation2 + $0x4] sm:$0xf]
    %v593 = vunpack.c.l.b16 %v589
    %v594 = vunpack.c.l.b16 %v590
    %v595 = vpack.c.b16 %v594, %v593
    %596 = vrot.lane.b32.xlu0 %v595, 104
    %v597 = vpop.permute.xlu0 %596
    %598 = vrot.lane.b32.xlu0 %v209, 104
    %v599 = vpop.permute.xlu0 %598
    %v601 = vsel %vm210, %v597, 0
    %v604 = vsel %vm210, %v599, 0
    %606 = vmatpush.bf16.xpose.msra.mxu0 0
    %607 = vmatpush.bf16.xpose.msra.mxu0 0
    %608 = vmatpush.bf16.xpose.msra.mxu0 0
    %609 = vmatpush.bf16.xpose.msra.mxu0 0
    %610 = vmatpush.bf16.xpose.msra.mxu0 0
    %611 = vmatpush.bf16.xpose.msra.mxu0 0
    %612 = vmatpush.bf16.xpose.msra.mxu0 0
    %613 = vmatpush.bf16.xpose.msra.mxu0 %v604
    %614 = vmatmul.bf16.gmra.mxu0 %v601
    %v615 = vpop.f32.mrf.mxu0
    %v616 = vadd.f32 0.0, %v615
    %v617 = vpop.f32.mrf.mxu0
    %v618 = vadd.f32 0.0, %v617
    %619 = vdwg.mxu0
    %v620 = vsel %vm232, %v616, -1e+30
    %v621 = vsel %vm232, %v618, -1e+30
    %s622 = scalar_lea.vmem [#allocation3], 48
    %v623 = vld [vmem:[%s622] sm:$0xff]
    %v624 = vld [vmem:[%s622 + $0x8] sm:$0xff]
    %v625 = vsel %vm237, %v620, -inf
    %626 = vmax.xlane.f32.xlu0 %v625
    %v627 = vpop.xlane.xlu0 %626
    %v628 = vsel %vm237, %v621, -inf
    %629 = vmax.xlane.f32.xlu0 %v628
    %v630 = vpop.xlane.xlu0 %629
    %v631 = vmax.f32 %v623, %v627
    %v632 = vmax.f32 %v624, %v630
    %v633 = vsub.f32 %v623, %v631
    %v634 = vsub.f32 %v624, %v632
    %v635 = vmul.f32 %v633, 1.442695
    %v636 = vpow.pop %v635
    %v637 = vmul.f32 %v634, 1.442695
    %v638 = vpow.pop %v637
    %640 = vset.pattern.permute.xlu0 0
    %641 = vperm.xlu0 %640, %v631
    %v642 = vpop.permute.xlu0 %641
    %645 = vset.pattern.permute.xlu0 0
    %646 = vperm.xlu0 %645, %v632
    %v647 = vpop.permute.xlu0 %646
    %v649 = vsub.f32 %v620, %v642
    %v650 = vsub.f32 %v621, %v647
    %v651 = vmul.f32 %v649, 1.442695
    %v652 = vpow.pop %v651
    %v653 = vmul.f32 %v650, 1.442695
    %v654 = vpow.pop %v653
    %s655 = scalar_lea.vmem [#allocation4], 48
    %v656 = vld [vmem:[%s655] sm:$0xff]
    %v657 = vld [vmem:[%s655 + $0x8] sm:$0xff]
    %v658 = vmul.f32 %v636, %v656
    %v659 = vmul.f32 %v638, %v657
    %v660 = vsel %vm237, %v652, 0.0
    %661 = vadd.xlane.f32.xlu0 %v660
    %v662 = vpop.xlane.xlu0 %661
    %v663 = vsel %vm237, %v654, 0.0
    %664 = vadd.xlane.f32.xlu0 %v663
    %v665 = vpop.xlane.xlu0 %664
    %v666 = vadd.f32 %v658, %v662
    %v667 = vadd.f32 %v659, %v665
    %668 = vst.msk [vmem:[%s655] sm:$0xff] %vm280, %v666
    %669 = vst.msk [vmem:[%s655 + $0x8] sm:$0xff] %vm280, %v667
    %v670 = vpack.c.bf16 %v654, %v652
    %671 = vrot.lane.b32.xlu0 %v288, 104
    %v672 = vpop.permute.xlu0 %671
    %v675 = vsel %vm237, %v670, 0
    %677 = vmatpush.bf16.msra.mxu0 0
    %678 = vmatpush.bf16.msra.mxu0 0
    %679 = vmatpush.bf16.msra.mxu0 0
    %680 = vmatpush.bf16.msra.mxu0 0
    %681 = vmatpush.bf16.msra.mxu0 0
    %682 = vmatpush.bf16.msra.mxu0 0
    %683 = vmatpush.bf16.msra.mxu0 0
    %684 = vmatpush.bf16.msra.mxu0 %v672
    %685 = vmatmul.bf16.gmra.mxu0 %v675
    %v686 = vpop.f32.mrf.mxu0
    %v687 = vadd.f32 0.0, %v686
    %v688 = vpop.f32.mrf.mxu0
    %v689 = vadd.f32 0.0, %v688
    %690 = vdwg.mxu0
    %v691 = vld [vmem:[#allocation5] sm:$0xff]
    %v692 = vld [vmem:[#allocation5 + $0x8] sm:$0xff]
    %694 = vset.pattern.permute.xlu0 0
    %695 = vperm.xlu0 %694, %v636
    %v696 = vpop.permute.xlu0 %695
    %699 = vset.pattern.permute.xlu0 0
    %700 = vperm.xlu0 %699, %v638
    %v701 = vpop.permute.xlu0 %700
    %v703 = vmul.f32 %v696, %v691
    %v704 = vmul.f32 %v701, %v692
    %707 = vrot.lane.b32.xlu0 %v687, 24
    %v708 = vpop.permute.xlu0 %707
    %709 = vrot.lane.b32.xlu0 %v689, 24
    %v710 = vpop.permute.xlu0 %709
    %v713 = vadd.f32 %v703, %v708
    %v714 = vadd.f32 %v704, %v710
    %vm715 = vcmask 261312
    %716 = vst.msk [vmem:[#allocation5] sm:$0xff] %vm715, %v713
    %717 = vst.msk [vmem:[#allocation5 + $0x8] sm:$0xff] %vm715, %v714
    %718 = vst.msk [vmem:[%s622] sm:$0xff] %vm280, %v631
    %719 = vst.msk [vmem:[%s622 + $0x8] sm:$0xff] %vm280, %v632
    // Predicated region
    $region86: #{multi_attention_forward.7} parent=1 // pred_check
      %p720 = pneg %p119
    $region87: #{multi_attention_forward.7} parent=1 // pred_check_branch
      %722 = sbr.rel (%p720) target = $region89
    $region88: #{multi_attention_forward.7} parent=1 // pred_region
      %v723 = vld [vmem:[#allocation4] sm:$0xff]
      %v724 = vld [vmem:[#allocation4 + $0x8] sm:$0xff]
      %v725 = vrcp.pop %v723
      %v726 = vrcp.pop %v724
      %v727 = vld [vmem:[#allocation5] sm:$0xff]
      %v728 = vld [vmem:[#allocation5 + $0x8] sm:$0xff]
      %730 = vset.pattern.permute.xlu0 0
      %731 = vperm.xlu0 %730, %v725
      %v732 = vpop.permute.xlu0 %731
      %735 = vset.pattern.permute.xlu0 0
      %736 = vperm.xlu0 %735, %v726
      %v737 = vpop.permute.xlu0 %736
      %v739 = vmul.f32 %v727, %v732
      %v740 = vmul.f32 %v728, %v737
      %v741 = vpack.c.bf16 %v739, %v739
      %v742 = vpack.c.bf16 %v740, %v740
      %v743 = vld [vmem:[%s393] sm:$0xff]
      %v744 = vld [vmem:[%s393 + $0x8] sm:$0xff]
      %v745 = vrcp.pop %v743
      %v746 = vrcp.pop %v744
      %748 = vset.pattern.permute.xlu0 0
      %749 = vperm.xlu0 %748, %v745
      %v750 = vpop.permute.xlu0 %749
      %753 = vset.pattern.permute.xlu0 0
      %754 = vperm.xlu0 %753, %v746
      %v755 = vpop.permute.xlu0 %754
      %v757 = vmul.f32 %v727, %v750
      %v758 = vmul.f32 %v728, %v755
      %v759 = vpack.c.bf16 %v757, %v757
      %v760 = vpack.c.bf16 %v758, %v758
      %v761 = vld [vmem:[%s524] sm:$0xff]
      %v762 = vld [vmem:[%s524 + $0x8] sm:$0xff]
      %v763 = vrcp.pop %v761
      %v764 = vrcp.pop %v762
      %766 = vset.pattern.permute.xlu0 0
      %767 = vperm.xlu0 %766, %v763
      %v768 = vpop.permute.xlu0 %767
      %771 = vset.pattern.permute.xlu0 0
      %772 = vperm.xlu0 %771, %v764
      %v773 = vpop.permute.xlu0 %772
      %v775 = vmul.f32 %v727, %v768
      %v776 = vmul.f32 %v728, %v773
      %v777 = vpack.c.bf16 %v775, %v775
      %v778 = vpack.c.bf16 %v776, %v776
      %v779 = vld [vmem:[%s655] sm:$0xff]
      %v780 = vld [vmem:[%s655 + $0x8] sm:$0xff]
      %v781 = vrcp.pop %v779
      %v782 = vrcp.pop %v780
      %784 = vset.pattern.permute.xlu0 0
      %785 = vperm.xlu0 %784, %v781
      %v786 = vpop.permute.xlu0 %785
      %789 = vset.pattern.permute.xlu0 0
      %790 = vperm.xlu0 %789, %v782
      %v791 = vpop.permute.xlu0 %790
      %v793 = vmul.f32 %v727, %v786
      %v794 = vmul.f32 %v728, %v791
      %v795 = vpack.c.bf16 %v793, %v793
      %v796 = vpack.c.bf16 %v794, %v794
      %v799 = vunpack.c.l.b16 %v741
      %v800 = vunpack.c.l.b16 %v742
      %v801 = vpack.c.b16 %v800, %v799
      %v804 = vunpack.c.l.b16 %v759
      %v805 = vunpack.c.l.b16 %v760
      %v806 = vpack.c.b16 %v805, %v804
      %v809 = vunpack.c.l.b16 %v777
      %v810 = vunpack.c.l.b16 %v778
      %v811 = vpack.c.b16 %v810, %v809
      %v814 = vunpack.c.l.b16 %v795
      %v815 = vunpack.c.l.b16 %v796
      %v816 = vpack.c.b16 %v815, %v814
      %v819 = vsel %vm210, %v801, %v806
      %v821 = vsel %vm237, %v819, %v811
      %vm822 = vcmask 195584
      %v824 = vsel %vm822, %v821, %v816
      %v825 = vld [vmem:[%s5] sm:$0xf]
      %v826 = vld [vmem:[%s5 + $0x4] sm:$0xf]
      %v827 = vld [vmem:[%s5 + $0x8] sm:$0xf]
      %v828 = vld [vmem:[%s5 + $0xc] sm:$0xf]
      %v829 = vld [vmem:[%s6] sm:$0x1]
      %v831 = vperm.slane %v829, 0
      %v837 = vunpack.c.l.b16 %v825
      %v838 = vunpack.c.l.b16 %v826
      %v839 = vunpack.c.l.b16 %v827
      %v840 = vunpack.c.l.b16 %v828
      %v841 = vpack.c.b16 %v838, %v837
      %v842 = vpack.c.b16 %v840, %v839
      %vm845 = vcmask 261120
      %v846 = vsel %vm845, %v824, 0
      %848 = vmatpush.bf16.msra.mxu0 0
      %849 = vmatpush.bf16.msra.mxu0 0
      %850 = vmatpush.bf16.msra.mxu0 0
      %851 = vmatpush.bf16.msra.mxu0 0
      %852 = vmatpush.bf16.msra.mxu0 0
      %853 = vmatpush.bf16.msra.mxu0 0
      %854 = vmatpush.bf16.msra.mxu0 %v842
      %855 = vmatpush.bf16.msra.mxu0 %v841
      %856 = vmatmul.bf16.gmra.mxu0 %v846
      %v857 = vpop.f32.mrf.mxu0
      %v858 = vadd.f32 %v831, %v857
      %v859 = vpop.f32.mrf.mxu0
      %v860 = vadd.f32 %v831, %v859
      %861 = vdwg.mxu0
      %v862 = vld [vmem:[%s0] sm:$0xff]
      %v863 = vld [vmem:[%s0 + $0x8] sm:$0xff]
      %v864 = vadd.f32 %v862, %v858
      %v865 = vadd.f32 %v863, %v860
      %v866 = vld [vmem:[%s7] sm:$0x1]
      %v867 = vld [vmem:[#allocation6] sm:$0x1]
      %v868 = vsel %vm845, %v864, 0.0
      %869 = vadd.xlane.f32.xlu0 %v868
      %v870 = vpop.xlane.xlu0 %869
      %v871 = vsel %vm845, %v865, 0.0
      %872 = vadd.xlane.f32.xlu0 %v871
      %v873 = vpop.xlane.xlu0 %872
      %v874 = vrcp.pop 32.0
      %v875 = vmul.f32 32.0, %v874
      %v876 = vsub.f32 1.0, %v875
      %v877 = vmul.f32 %v874, %v876
      %v878 = vadd.f32 %v874, %v877
      %vm879 = vweird.f32 %v874
      %v880 = vsel %vm879, %v874, %v878
      %v881 = vmul.f32 %v870, %v880
      %v882 = vmul.f32 %v873, %v880
      %v883 = vsub.f32 %v864, %v881
      %v884 = vsub.f32 %v865, %v882
      %v885 = vmul.f32 %v883, %v883
      %v886 = vmul.f32 %v884, %v884
      %v887 = vsel %vm845, %v885, 0.0
      %888 = vadd.xlane.f32.xlu0 %v887
      %v889 = vpop.xlane.xlu0 %888
      %v890 = vsel %vm845, %v886, 0.0
      %891 = vadd.xlane.f32.xlu0 %v890
      %v892 = vpop.xlane.xlu0 %891
      %v893 = vmul.f32 %v889, %v880
      %v894 = vmul.f32 %v892, %v880
      %v895 = vadd.f32 %v893, 1e-05
      %v896 = vadd.f32 %v894, 1e-05
      %v897 = vrsqrt.pop %v895
      %v898 = vmul.f32 %v897, %v895
      %v899 = vmul.f32 %v898, %v897
      %v900 = vmul.f32 0.5, %v899
      %v901 = vsub.f32 1.5, %v900
      %v902 = vmul.f32 %v897, %v901
      %vm903 = vweird.f32 %v895
      %vm904 = vweird.f32 %v897
      %vm905 = vmor %vm903, %vm904
      %v906 = vsel %vm905, %v897, %v902
      %v907 = vrsqrt.pop %v896
      %v908 = vmul.f32 %v907, %v896
      %v909 = vmul.f32 %v908, %v907
      %v910 = vmul.f32 0.5, %v909
      %v911 = vsub.f32 1.5, %v910
      %v912 = vmul.f32 %v907, %v911
      %vm913 = vweird.f32 %v896
      %vm914 = vweird.f32 %v907
      %vm915 = vmor %vm913, %vm914
      %v916 = vsel %vm915, %v907, %v912
      %v917 = vmul.f32 %v883, %v906
      %v918 = vmul.f32 %v884, %v916
      %v920 = vperm.slane %v866, 0
      %v922 = vmul.f32 %v917, %v920
      %v923 = vmul.f32 %v918, %v920
      %v925 = vperm.slane %v867, 0
      %v927 = vadd.f32 %v922, %v925
      %v928 = vadd.f32 %v923, %v925
      %v929 = vpack.c.bf16 %v928, %v927
      %v930 = vld [vmem:[%s9] sm:$0xf]
      %v931 = vld [vmem:[%s9 + $0x4] sm:$0xf]
      %v932 = vld [vmem:[%s9 + $0x8] sm:$0xf]
      %v933 = vld [vmem:[%s9 + $0xc] sm:$0xf]
      %v934 = vld [vmem:[#allocation8] sm:$0x1]
      %v936 = vperm.slane %v934, 0
      %v942 = vunpack.c.l.b16 %v930
      %v943 = vunpack.c.l.b16 %v931
      %v944 = vunpack.c.l.b16 %v932
      %v945 = vunpack.c.l.b16 %v933
      %v946 = vpack.c.b16 %v943, %v942
      %v947 = vpack.c.b16 %v945, %v944
      %v951 = vsel %vm845, %v929, 0
      %953 = vmatpush.bf16.msra.mxu0 0
      %954 = vmatpush.bf16.msra.mxu0 0
      %955 = vmatpush.bf16.msra.mxu0 0
      %956 = vmatpush.bf16.msra.mxu0 0
      %957 = vmatpush.bf16.msra.mxu0 0
      %958 = vmatpush.bf16.msra.mxu0 0
      %959 = vmatpush.bf16.msra.mxu0 %v947
      %960 = vmatpush.bf16.msra.mxu0 %v946
      %961 = vmatmul.bf16.gmra.mxu0 %v951
      %v962 = vpop.f32.mrf.mxu0
      %v963 = vadd.f32 %v936, %v962
      %v964 = vpop.f32.mrf.mxu0
      %v965 = vadd.f32 %v936, %v964
      %966 = vdwg.mxu0
      %v967 = vmax.f32 %v963, 0.0
      %v968 = vmax.f32 %v965, 0.0
      %v969 = vpack.c.bf16 %v968, %v967
      %v970 = vld [vmem:[%s11] sm:$0xf]
      %v971 = vld [vmem:[%s11 + $0x4] sm:$0xf]
      %v972 = vld [vmem:[%s11 + $0x8] sm:$0xf]
      %v973 = vld [vmem:[%s11 + $0xc] sm:$0xf]
      %v974 = vld [vmem:[%s11 + $0x10] sm:$0xf]
      %v975 = vld [vmem:[%s11 + $0x14] sm:$0xf]
      %v976 = vld [vmem:[%s11 + $0x18] sm:$0xf]
      %v977 = vld [vmem:[%s11 + $0x1c] sm:$0xf]
      %v978 = vld [vmem:[#allocation10] sm:$0x1]
      %v980 = vperm.slane %v978, 0
      %v990 = vunpack.c.l.b16 %v970
      %v991 = vunpack.c.l.b16 %v971
      %v992 = vunpack.c.l.b16 %v972
      %v993 = vunpack.c.l.b16 %v973
      %v994 = vunpack.c.l.b16 %v974
      %v995 = vunpack.c.l.b16 %v975
      %v996 = vunpack.c.l.b16 %v976
      %v997 = vunpack.c.l.b16 %v977
      %v998 = vpack.c.b16 %v991, %v990
      %v999 = vpack.c.b16 %v993, %v992
      %v1000 = vpack.c.b16 %v995, %v994
      %v1001 = vpack.c.b16 %v997, %v996
      %vm1006 = vcmask 523264
      %v1008 = vsel %vm1006, %v969, 0
      %1010 = vmatpush.bf16.msra.mxu0 0
      %1011 = vmatpush.bf16.msra.mxu0 0
      %1012 = vmatpush.bf16.msra.mxu0 0
      %1013 = vmatpush.bf16.msra.mxu0 0
      %1014 = vmatpush.bf16.msra.mxu0 %v1001
      %1015 = vmatpush.bf16.msra.mxu0 %v1000
      %1016 = vmatpush.bf16.msra.mxu0 %v999
      %1017 = vmatpush.bf16.msra.mxu0 %v998
      %1018 = vmatmul.bf16.gmra.mxu0 %v1008
      %v1019 = vpop.f32.mrf.mxu0
      %v1020 = vadd.f32 %v980, %v1019
      %v1021 = vpop.f32.mrf.mxu0
      %v1022 = vadd.f32 %v980, %v1021
      %1023 = vdwg.mxu0
      %v1024 = vadd.f32 %v927, %v1020
      %v1025 = vadd.f32 %v928, %v1022
      %v1026 = vld [vmem:[#allocation11] sm:$0x1]
      %v1027 = vld [vmem:[#allocation13] sm:$0x1]
      %v1028 = vsel %vm845, %v1024, 0.0
      %1029 = vadd.xlane.f32.xlu0 %v1028
      %v1030 = vpop.xlane.xlu0 %1029
      %v1031 = vsel %vm845, %v1025, 0.0
      %1032 = vadd.xlane.f32.xlu0 %v1031
      %v1033 = vpop.xlane.xlu0 %1032
      %v1034 = vmul.f32 %v1030, %v880
      %v1035 = vmul.f32 %v1033, %v880
      %v1036 = vsub.f32 %v1024, %v1034
      %v1037 = vsub.f32 %v1025, %v1035
      %v1038 = vmul.f32 %v1036, %v1036
      %v1039 = vmul.f32 %v1037, %v1037
      %v1040 = vsel %vm845, %v1038, 0.0
      %1041 = vadd.xlane.f32.xlu0 %v1040
      %v1042 = vpop.xlane.xlu0 %1041
      %v1043 = vsel %vm845, %v1039, 0.0
      %1044 = vadd.xlane.f32.xlu0 %v1043
      %v1045 = vpop.xlane.xlu0 %1044
      %v1046 = vmul.f32 %v1042, %v880
      %v1047 = vmul.f32 %v1045, %v880
      %v1048 = vadd.f32 %v1046, 1e-05
      %v1049 = vadd.f32 %v1047, 1e-05
      %v1050 = vrsqrt.pop %v1048
      %v1051 = vmul.f32 %v1050, %v1048
      %v1052 = vmul.f32 %v1051, %v1050
      %v1053 = vmul.f32 0.5, %v1052
      %v1054 = vsub.f32 1.5, %v1053
      %v1055 = vmul.f32 %v1050, %v1054
      %vm1056 = vweird.f32 %v1048
      %vm1057 = vweird.f32 %v1050
      %vm1058 = vmor %vm1056, %vm1057
      %v1059 = vsel %vm1058, %v1050, %v1055
      %v1060 = vrsqrt.pop %v1049
      %v1061 = vmul.f32 %v1060, %v1049
      %v1062 = vmul.f32 %v1061, %v1060
      %v1063 = vmul.f32 0.5, %v1062
      %v1064 = vsub.f32 1.5, %v1063
      %v1065 = vmul.f32 %v1060, %v1064
      %vm1066 = vweird.f32 %v1049
      %vm1067 = vweird.f32 %v1060
      %vm1068 = vmor %vm1066, %vm1067
      %v1069 = vsel %vm1068, %v1060, %v1065
      %v1070 = vmul.f32 %v1036, %v1059
      %v1071 = vmul.f32 %v1037, %v1069
      %v1073 = vperm.slane %v1026, 0
      %v1075 = vmul.f32 %v1070, %v1073
      %v1076 = vmul.f32 %v1071, %v1073
      %v1078 = vperm.slane %v1027, 0
      %v1080 = vadd.f32 %v1075, %v1078
      %v1081 = vadd.f32 %v1076, %v1078
      %1082 = vst.msk [vmem:[%s15] sm:$0xff] %vm845, %v1080
      %1083 = vst.msk [vmem:[%s15 + $0x8] sm:$0xff] %vm845, %v1081
    $region89: #{multi_attention_forward.7} parent=1 // pred_fallthru
      _
    // Predicated region
    $region90: #{multi_attention_forward.7} parent=1 // pred_check
      _
    $region91: #{multi_attention_forward.7} parent=1 // pred_check_branch
      %1085 = sbr.rel (0) target = $region93
    $region92: #{multi_attention_forward.7} parent=1 // pred_region
      _
    $region93: #{multi_attention_forward.7} parent=1 // pred_fallthru
      _
    // Predicated region
    $region94: #{multi_attention_forward.7} parent=1 // pred_check
      _
    $region95: #{multi_attention_forward.7} parent=1 // pred_check_branch
      %1087 = sbr.rel (0) target = $region97
    $region96: #{multi_attention_forward.7} parent=1 // pred_region
      _
    $region97: #{multi_attention_forward.7} parent=1 // pred_fallthru
      _
    %1088 = vsyncpa [#allocation7], 1
    %1089 = vsyncpa [#allocation9], 1
    %1090 = vsyncpa [#allocation12], 1

</llo_original>
